<compile_context>
chip_gen: v7x
topology: tpu7x:2x2x1
jax: 0.10.0
libtpu: 0.0.40
codegen_flags: <defaults>
</compile_context>

<pallas_src>
import functools

import jax
import jax.numpy as jnp
import numpy as np
from jax import lax
from jax.experimental import pallas as pl
from jax.experimental.pallas import tpu as pltpu


def _round_up(x, m):
    return ((x + m - 1) // m) * m


# ---------------------------------------------------------------------------
# Fused kernel (one grid step per batch block; everything resident in VMEM).
# ---------------------------------------------------------------------------
def _fused_mha_pool_kernel(
    x_ref,                   # (bb, V, F)   batch-major features
    wq_lin_ref, bq_lin_ref,  # (F, E), (1, E)          query_linear
    wk_lin_ref, bk_lin_ref,  # (F, E), (1, E)          key_linear
    wv_lin_ref, bv_lin_ref,  # (F, E), (1, E)          value_linear
    wq_h_ref, bq_h_ref,      # (H, E, Dh), (H, 1, Dh)  attn q in-proj (per head)
    wk_h_ref, bk_h_ref,      # (H, E, Dh), (H, 1, Dh)  attn k in-proj (per head)
    wv_h_ref, bv_h_ref,      # (H, E, Dh), (H, 1, Dh)  attn v in-proj (per head)
    wo_h_ref, bo_ref,        # (H, Dh, E), (1, E)      attn out-proj (per head)
    out_ref,                 # (bb, L, LANE): [:, :, :E]=attn_out, [:, :, E:E+V]=attn_weights
    *, num_heads, use_stats_query,
):
    bb, nv, nf = x_ref.shape
    _, e, dh = wq_h_ref.shape
    l = out_ref.shape[1]
    f32 = jnp.float32
    scale = 1.0 / float(dh) ** 0.5

    x = x_ref[...]                                              # (bb, V, F)
    x2 = x.reshape(bb * nv, nf)                                 # fold batch*views into M

    # --- module-level key / value linears: single-copy weights, 2-D MXU matmuls
    k_lin = jnp.dot(x2, wk_lin_ref[...], preferred_element_type=f32) + bk_lin_ref[...]
    v_lin = jnp.dot(x2, wv_lin_ref[...], preferred_element_type=f32) + bv_lin_ref[...]

    # --- query input ----------------------------------------------------------
    if use_stats_query:
        mx = jnp.max(x, axis=1, keepdims=True)                  # (bb, 1, F)
        mean = jnp.mean(x, axis=1, keepdims=True)               # (bb, 1, F)
        var = jnp.mean((x - mean) ** 2, axis=1, keepdims=True)  # unbiased=False
        std = jnp.sqrt(var + 1e-8)
        sel = lax.broadcasted_iota(jnp.int32, (bb, l, nf), 1)   # l == 3 here
        q_in = jnp.where(sel == 0, mx, jnp.where(sel == 1, mean, std))   # (bb, 3, F)
    else:
        # mean over views commutes with the affine query projection -> pool first
        q_in = jnp.mean(x, axis=1, keepdims=True)               # (bb, 1, F)

    q2 = q_in.reshape(bb * l, nf)
    q_lin = jnp.dot(q2, wq_lin_ref[...], preferred_element_type=f32) + bq_lin_ref[...]  # (bb*L, E)

    # --- multi-head attention: per-head weights indexed on the leading ref dim
    #     (no lane slicing of activations); out-projection folded per head.
    out_acc = jnp.zeros((bb * l, e), f32)
    w_acc = jnp.zeros((bb, l, nv), f32)
    for h in range(num_heads):
        qh = (jnp.dot(q_lin, wq_h_ref[h], preferred_element_type=f32) + bq_h_ref[h]) * scale
        kh = jnp.dot(k_lin, wk_h_ref[h], preferred_element_type=f32) + bk_h_ref[h]
        vh = jnp.dot(v_lin, wv_h_ref[h], preferred_element_type=f32) + bv_h_ref[h]

        qh3 = qh.reshape(bb, l, dh)                             # split leading dims only
        kh3 = kh.reshape(bb, nv, dh)
        vh3 = vh.reshape(bb, nv, dh)

        scores = jnp.einsum("bld,bsd->bls", qh3, kh3, preferred_element_type=f32)  # (bb, L, S)
        scores = scores - jnp.max(scores, axis=-1, keepdims=True)
        p = jnp.exp(scores)
        attn = p * pl.reciprocal(jnp.sum(p, axis=-1, keepdims=True), approx=True)
        w_acc = w_acc + attn

        ctx = jnp.einsum("bls,bsd->bld", attn, vh3, preferred_element_type=f32)    # (bb, L, Dh)
        out_acc = out_acc + jnp.dot(ctx.reshape(bb * l, dh), wo_h_ref[h],
                                    preferred_element_type=f32)

    out3 = (out_acc + bo_ref[...]).reshape(bb, l, e)
    w_mean = w_acc * (1.0 / num_heads)

    # --- single lane-dense store: [attn_out | attn_weights | zero pad] --------
    lane = out_ref.shape[-1]
    parts = [out3, w_mean]
    pad_cols = lane - (e + nv)
    if pad_cols > 0:
        parts.append(jnp.zeros((bb, l, pad_cols), f32))
    out_ref[...] = jnp.concatenate(parts, axis=-1)


# ---------------------------------------------------------------------------
# One-time parameter layout prep (transpose, bias reshape, per-head split).
# ---------------------------------------------------------------------------
def prepare_params(params, num_heads):
    e = params["q_w"].shape[0]
    dh = e // num_heads

    def in_proj_w(w):      # (E_out, E_in) -> (H, E_in, Dh)
        return jnp.transpose(w.T.reshape(e, num_heads, dh), (1, 0, 2))

    def in_proj_b(bvec):   # (E,) -> (H, 1, Dh)
        return bvec.reshape(num_heads, 1, dh)

    return {
        "wq_lin": params["q_w"].T, "bq_lin": params["q_b"].reshape(1, e),
        "wk_lin": params["k_w"].T, "bk_lin": params["k_b"].reshape(1, e),
        "wv_lin": params["v_w"].T, "bv_lin": params["v_b"].reshape(1, e),
        "wq_h": in_proj_w(params["wq"]), "bq_h": in_proj_b(params["bq"]),
        "wk_h": in_proj_w(params["wk"]), "bk_h": in_proj_b(params["bk"]),
        "wv_h": in_proj_w(params["wv"]), "bv_h": in_proj_b(params["bv"]),
        "wo_h": params["wo"].T.reshape(num_heads, dh, e),
        "bo": params["bo"].reshape(1, e),
    }


# ---------------------------------------------------------------------------
# Forward wrapper (layout plumbing only: transpose in, slice/transpose out).
# ---------------------------------------------------------------------------
def multihead_attention_feature_pooling(features, prep, num_heads, use_stats_query,
                                        batch_block=None):
    nv, bsz, nf = features.shape
    e = prep["bo"].shape[-1]
    dh = e // num_heads
    if use_stats_query:
        # Mirrors torch's `.view(num_views, batch, -1)` after the stats query
        # linear: only shape-consistent when num_views == 3.
        assert nv == 3, "use_stats_query=True requires num_views == 3"
        l = 3
    else:
        l = 1

    bb = bsz if batch_block is None else min(batch_block, bsz)
    grid = (pl.cdiv(bsz, bb),)
    lane = _round_up(e + nv, 128)

    x_bm = jnp.transpose(features, (1, 0, 2))        # (B, V, F) batch-major

    kernel = functools.partial(_fused_mha_pool_kernel,
                               num_heads=num_heads, use_stats_query=use_stats_query)

    def rep(shape):   # replicated operand (weights / biases): same block every step
        nd = len(shape)
        return pl.BlockSpec(shape, lambda i, _nd=nd: (0,) * _nd)

    in_specs = [
        pl.BlockSpec((bb, nv, nf), lambda i: (i, 0, 0)),
        rep((nf, e)), rep((1, e)),
        rep((nf, e)), rep((1, e)),
        rep((nf, e)), rep((1, e)),
        rep((num_heads, e, dh)), rep((num_heads, 1, dh)),
        rep((num_heads, e, dh)), rep((num_heads, 1, dh)),
        rep((num_heads, e, dh)), rep((num_heads, 1, dh)),
        rep((num_heads, dh, e)), rep((1, e)),
    ]

    slab = pl.pallas_call(
        kernel,
        out_shape=jax.ShapeDtypeStruct((bsz, l, lane), jnp.float32),
        grid=grid,
        in_specs=in_specs,
        out_specs=pl.BlockSpec((bb, l, lane), lambda i: (i, 0, 0)),
        compiler_params=pltpu.CompilerParams(dimension_semantics=("parallel",)),
    )(
        x_bm,
        prep["wq_lin"], prep["bq_lin"],
        prep["wk_lin"], prep["bk_lin"],
        prep["wv_lin"], prep["bv_lin"],
        prep["wq_h"], prep["bq_h"],
        prep["wk_h"], prep["bk_h"],
        prep["wv_h"], prep["bv_h"],
        prep["wo_h"], prep["bo"],
    )

    attn_out = jnp.transpose(slab[:, :, :e], (1, 0, 2))   # (L, B, E) seq-first
    attn_w = slab[:, :, e:e + nv]                         # (B, L, V)
    return attn_out, attn_w


# ---------------------------------------------------------------------------
# Pure-JAX reference (for validation)
# ---------------------------------------------------------------------------
def reference_forward(features, p, num_heads, use_stats_query):
    v_, b_, f = features.shape
    e = p["q_w"].shape[0]
    flat = features.reshape(v_ * b_, f)
    if use_stats_query:
        mx = jnp.max(features, 0)
        mn = jnp.mean(features, 0)
        var = jnp.var(features, 0)
        std = jnp.sqrt(var + 1e-8)
        qin = jnp.stack([mx, mn, std], 0).reshape(-1, f)
        query = (qin @ p["q_w"].T + p["q_b"]).reshape(v_, b_, -1)
    else:
        query = (flat @ p["q_w"].T + p["q_b"]).reshape(v_, b_, e).mean(0, keepdims=True)
    key = (flat @ p["k_w"].T + p["k_b"]).reshape(v_, b_, e)
    value = (flat @ p["v_w"].T + p["v_b"]).reshape(v_, b_, e)
    l, s = query.shape[0], v_
    dh = e // num_heads
    q = (query @ p["wq"].T + p["bq"]) * (dh ** -0.5)
    k = key @ p["wk"].T + p["bk"]
    v = value @ p["wv"].T + p["bv"]
    qh = q.reshape(l, b_ * num_heads, dh).transpose(1, 0, 2)
    kh = k.reshape(s, b_ * num_heads, dh).transpose(1, 0, 2)
    vh = v.reshape(s, b_ * num_heads, dh).transpose(1, 0, 2)
    attn = jax.nn.softmax(qh @ kh.transpose(0, 2, 1), axis=-1)
    ctx = (attn @ vh).transpose(1, 0, 2).reshape(l, b_, e)
    out = ctx @ p["wo"].T + p["bo"]
    w = attn.reshape(b_, num_heads, l, s).mean(axis=1)
    return out, w


def init_params(key, in_dim, out_dim):
    ks = jax.random.split(key, 14)
    r = lambda k, s: jax.random.normal(k, s, jnp.float32) * 0.1
    return {
        "q_w": r(ks[0], (out_dim, in_dim)), "q_b": r(ks[1], (out_dim,)),
        "k_w": r(ks[2], (out_dim, in_dim)), "k_b": r(ks[3], (out_dim,)),
        "v_w": r(ks[4], (out_dim, in_dim)), "v_b": r(ks[5], (out_dim,)),
        "wq": r(ks[6], (out_dim, out_dim)), "bq": r(ks[7], (out_dim,)),
        "wk": r(ks[8], (out_dim, out_dim)), "bk": r(ks[9], (out_dim,)),
        "wv": r(ks[10], (out_dim, out_dim)), "bv": r(ks[11], (out_dim,)),
        "wo": r(ks[12], (out_dim, out_dim)), "bo": r(ks[13], (out_dim,)),
    }


if __name__ == "__main__":
    V, B, F, E, H = 4, 2, 16, 32, 4
    root = jax.random.PRNGKey(0)
    kf, kp = jax.random.split(root)
    features = jax.random.normal(kf, (V, B, F), jnp.float32)
    params = init_params(kp, F, E)
    prep = prepare_params(params, H)

    fwd = jax.jit(multihead_attention_feature_pooling, static_argnums=(2, 3))

    # use_stats_query = False  (mean query over views; attention over V views)
    out, w = fwd(features, prep, H, False)
    jax.block_until_ready((out, w))
    ref_out, ref_w = reference_forward(features, params, H, False)
    np.testing.assert_allclose(np.asarray(out), np.asarray(ref_out), rtol=1e-2, atol=1e-2)
    np.testing.assert_allclose(np.asarray(w), np.asarray(ref_w), rtol=1e-2, atol=1e-2)
    assert out.shape == (1, B, E) and w.shape == (B, 1, V)

    # use_stats_query = True (stats query; requires num_views == 3, as in the original)
    feat3 = jax.random.normal(jax.random.PRNGKey(1), (3, B, F), jnp.float32)
    out2, w2 = fwd(feat3, prep, H, True)
    jax.block_until_ready((out2, w2))
    ref_out2, ref_w2 = reference_forward(feat3, params, H, True)
    np.testing.assert_allclose(np.asarray(out2), np.asarray(ref_out2), rtol=1e-2, atol=1e-2)
    np.testing.assert_allclose(np.asarray(w2), np.asarray(ref_w2), rtol=1e-2, atol=1e-2)
    assert out2.shape == (3, B, E) and w2.shape == (B, 3, 3)

    print("KERNEL_OK")
</pallas_src>

<mosaic_0001>
module attributes {stable_mosaic.version = 11 : i64} {
  func.func @_fused_mha_pool_kernel(%arg0: i32, %arg1: memref<2x4x16xf32, #tpu.memory_space<vmem>>, %arg2: memref<16x32xf32, #tpu.memory_space<vmem>>, %arg3: memref<1x32xf32, #tpu.memory_space<vmem>>, %arg4: memref<16x32xf32, #tpu.memory_space<vmem>>, %arg5: memref<1x32xf32, #tpu.memory_space<vmem>>, %arg6: memref<16x32xf32, #tpu.memory_space<vmem>>, %arg7: memref<1x32xf32, #tpu.memory_space<vmem>>, %arg8: memref<4x32x8xf32, #tpu.memory_space<vmem>>, %arg9: memref<4x1x8xf32, #tpu.memory_space<vmem>>, %arg10: memref<4x32x8xf32, #tpu.memory_space<vmem>>, %arg11: memref<4x1x8xf32, #tpu.memory_space<vmem>>, %arg12: memref<4x32x8xf32, #tpu.memory_space<vmem>>, %arg13: memref<4x1x8xf32, #tpu.memory_space<vmem>>, %arg14: memref<4x8x32xf32, #tpu.memory_space<vmem>>, %arg15: memref<1x32xf32, #tpu.memory_space<vmem>>, %arg16: memref<2x1x128xf32, #tpu.memory_space<vmem>>) attributes {dimension_semantics = [#tpu.dimension_semantics<parallel>], iteration_bounds = array<i64: 1>, scalar_prefetch = 0 : i64, scratch_operands = 0 : i64, tpu.core_type = #tpu.core_type<tc>, window_params = [{transform_indices = @transform_0, window_bounds = array<i64: 2, 4, 16>}, {pipeline_mode = #tpu.pipeline_mode<synchronous>, transform_indices = @transform_1, window_bounds = array<i64: 16, 32>}, {pipeline_mode = #tpu.pipeline_mode<synchronous>, transform_indices = @transform_2, window_bounds = array<i64: 1, 32>}, {pipeline_mode = #tpu.pipeline_mode<synchronous>, transform_indices = @transform_3, window_bounds = array<i64: 16, 32>}, {pipeline_mode = #tpu.pipeline_mode<synchronous>, transform_indices = @transform_4, window_bounds = array<i64: 1, 32>}, {pipeline_mode = #tpu.pipeline_mode<synchronous>, transform_indices = @transform_5, window_bounds = array<i64: 16, 32>}, {pipeline_mode = #tpu.pipeline_mode<synchronous>, transform_indices = @transform_6, window_bounds = array<i64: 1, 32>}, {pipeline_mode = #tpu.pipeline_mode<synchronous>, transform_indices = @transform_7, window_bounds = array<i64: 4, 32, 8>}, {pipeline_mode = #tpu.pipeline_mode<synchronous>, transform_indices = @transform_8, window_bounds = array<i64: 4, 1, 8>}, {pipeline_mode = #tpu.pipeline_mode<synchronous>, transform_indices = @transform_9, window_bounds = array<i64: 4, 32, 8>}, {pipeline_mode = #tpu.pipeline_mode<synchronous>, transform_indices = @transform_10, window_bounds = array<i64: 4, 1, 8>}, {pipeline_mode = #tpu.pipeline_mode<synchronous>, transform_indices = @transform_11, window_bounds = array<i64: 4, 32, 8>}, {pipeline_mode = #tpu.pipeline_mode<synchronous>, transform_indices = @transform_12, window_bounds = array<i64: 4, 1, 8>}, {pipeline_mode = #tpu.pipeline_mode<synchronous>, transform_indices = @transform_13, window_bounds = array<i64: 4, 8, 32>}, {pipeline_mode = #tpu.pipeline_mode<synchronous>, transform_indices = @transform_14, window_bounds = array<i64: 1, 32>}, {transform_indices = @transform_15, window_bounds = array<i64: 2, 1, 128>}]} {
    %c0 = arith.constant 0 : index
    %c0_0 = arith.constant 0 : index
    %c0_1 = arith.constant 0 : index
    %0 = vector.load %arg1[%c0, %c0_0, %c0_1] : memref<2x4x16xf32, #tpu.memory_space<vmem>>, vector<2x4x16xf32>
    %1 = vector.shape_cast %0 : vector<2x4x16xf32> to vector<8x16xf32>
    %c0_2 = arith.constant 0 : index
    %c0_3 = arith.constant 0 : index
    %2 = vector.load %arg4[%c0_2, %c0_3] : memref<16x32xf32, #tpu.memory_space<vmem>>, vector<16x32xf32>
    %cst = arith.constant dense<0.000000e+00> : vector<8x32xf32>
    %3 = tpu.matmul %1, %2, %cst {dimension_numbers = #tpu.dot_dimension_numbers<[1], [0], [0], [1], [0, 0, 1, 1], [], []>} : vector<8x16xf32>, vector<16x32xf32>, vector<8x32xf32> -> vector<8x32xf32>
    %c0_4 = arith.constant 0 : index
    %c0_5 = arith.constant 0 : index
    %4 = vector.load %arg5[%c0_4, %c0_5] : memref<1x32xf32, #tpu.memory_space<vmem>>, vector<1x32xf32>
    %5 = vector.broadcast %4 : vector<1x32xf32> to vector<8x32xf32>
    %6 = arith.addf %3, %5 : vector<8x32xf32>
    %c0_6 = arith.constant 0 : index
    %c0_7 = arith.constant 0 : index
    %7 = vector.load %arg6[%c0_6, %c0_7] : memref<16x32xf32, #tpu.memory_space<vmem>>, vector<16x32xf32>
    %cst_8 = arith.constant dense<0.000000e+00> : vector<8x32xf32>
    %8 = tpu.matmul %1, %7, %cst_8 {dimension_numbers = #tpu.dot_dimension_numbers<[1], [0], [0], [1], [0, 0, 1, 1], [], []>} : vector<8x16xf32>, vector<16x32xf32>, vector<8x32xf32> -> vector<8x32xf32>
    %c0_9 = arith.constant 0 : index
    %c0_10 = arith.constant 0 : index
    %9 = vector.load %arg7[%c0_9, %c0_10] : memref<1x32xf32, #tpu.memory_space<vmem>>, vector<1x32xf32>
    %10 = vector.broadcast %9 : vector<1x32xf32> to vector<8x32xf32>
    %11 = arith.addf %8, %10 : vector<8x32xf32>
    %cst_11 = arith.constant dense<0.000000e+00> : vector<2x16xf32>
    %12 = vector.multi_reduction <add>, %0, %cst_11 [1] : vector<2x4x16xf32> to vector<2x16xf32>
    %13 = vector.shape_cast %12 : vector<2x16xf32> to vector<2x1x16xf32>
    %cst_12 = arith.constant 4.000000e+00 : f32
    %14 = vector.broadcast %cst_12 : f32 to vector<2x1x16xf32>
    %15 = arith.divf %13, %14 : vector<2x1x16xf32>
    %16 = vector.shape_cast %15 : vector<2x1x16xf32> to vector<2x16xf32>
    %c0_13 = arith.constant 0 : index
    %c0_14 = arith.constant 0 : index
    %17 = vector.load %arg2[%c0_13, %c0_14] : memref<16x32xf32, #tpu.memory_space<vmem>>, vector<16x32xf32>
    %cst_15 = arith.constant dense<0.000000e+00> : vector<2x32xf32>
    %18 = tpu.matmul %16, %17, %cst_15 {dimension_numbers = #tpu.dot_dimension_numbers<[1], [0], [0], [1], [0, 0, 1, 1], [], []>} : vector<2x16xf32>, vector<16x32xf32>, vector<2x32xf32> -> vector<2x32xf32>
    %c0_16 = arith.constant 0 : index
    %c0_17 = arith.constant 0 : index
    %19 = vector.load %arg3[%c0_16, %c0_17] : memref<1x32xf32, #tpu.memory_space<vmem>>, vector<1x32xf32>
    %20 = vector.broadcast %19 : vector<1x32xf32> to vector<2x32xf32>
    %21 = arith.addf %18, %20 : vector<2x32xf32>
    %cst_18 = arith.constant 0.000000e+00 : f32
    %22 = vector.broadcast %cst_18 : f32 to vector<2x32xf32>
    %cst_19 = arith.constant 0.000000e+00 : f32
    %23 = vector.broadcast %cst_19 : f32 to vector<2x1x4xf32>
    %c0_20 = arith.constant 0 : index
    %c0_21 = arith.constant 0 : index
    %c0_22 = arith.constant 0 : index
    %24 = vector.load %arg8[%c0_20, %c0_21, %c0_22] : memref<4x32x8xf32, #tpu.memory_space<vmem>>, vector<1x32x8xf32>
    %25 = vector.shape_cast %24 : vector<1x32x8xf32> to vector<32x8xf32>
    %cst_23 = arith.constant dense<0.000000e+00> : vector<2x8xf32>
    %26 = tpu.matmul %21, %25, %cst_23 {dimension_numbers = #tpu.dot_dimension_numbers<[1], [0], [0], [1], [0, 0, 1, 1], [], []>} : vector<2x32xf32>, vector<32x8xf32>, vector<2x8xf32> -> vector<2x8xf32>
    %c0_24 = arith.constant 0 : index
    %c0_25 = arith.constant 0 : index
    %c0_26 = arith.constant 0 : index
    %27 = vector.load %arg9[%c0_24, %c0_25, %c0_26] : memref<4x1x8xf32, #tpu.memory_space<vmem>>, vector<1x1x8xf32>
    %28 = vector.shape_cast %27 : vector<1x1x8xf32> to vector<1x8xf32>
    %29 = vector.broadcast %28 : vector<1x8xf32> to vector<2x8xf32>
    %30 = arith.addf %26, %29 : vector<2x8xf32>
    %cst_27 = arith.constant 0.353553385 : f32
    %31 = vector.broadcast %cst_27 : f32 to vector<2x8xf32>
    %32 = arith.mulf %30, %31 : vector<2x8xf32>
    %c0_28 = arith.constant 0 : index
    %c0_29 = arith.constant 0 : index
    %c0_30 = arith.constant 0 : index
    %33 = vector.load %arg10[%c0_28, %c0_29, %c0_30] : memref<4x32x8xf32, #tpu.memory_space<vmem>>, vector<1x32x8xf32>
    %34 = vector.shape_cast %33 : vector<1x32x8xf32> to vector<32x8xf32>
    %cst_31 = arith.constant dense<0.000000e+00> : vector<8x8xf32>
    %35 = tpu.matmul %6, %34, %cst_31 {dimension_numbers = #tpu.dot_dimension_numbers<[1], [0], [0], [1], [0, 0, 1, 1], [], []>} : vector<8x32xf32>, vector<32x8xf32>, vector<8x8xf32> -> vector<8x8xf32>
    %c0_32 = arith.constant 0 : index
    %c0_33 = arith.constant 0 : index
    %c0_34 = arith.constant 0 : index
    %36 = vector.load %arg11[%c0_32, %c0_33, %c0_34] : memref<4x1x8xf32, #tpu.memory_space<vmem>>, vector<1x1x8xf32>
    %37 = vector.shape_cast %36 : vector<1x1x8xf32> to vector<1x8xf32>
    %38 = vector.broadcast %37 : vector<1x8xf32> to vector<8x8xf32>
    %39 = arith.addf %35, %38 : vector<8x8xf32>
    %c0_35 = arith.constant 0 : index
    %c0_36 = arith.constant 0 : index
    %c0_37 = arith.constant 0 : index
    %40 = vector.load %arg12[%c0_35, %c0_36, %c0_37] : memref<4x32x8xf32, #tpu.memory_space<vmem>>, vector<1x32x8xf32>
    %41 = vector.shape_cast %40 : vector<1x32x8xf32> to vector<32x8xf32>
    %cst_38 = arith.constant dense<0.000000e+00> : vector<8x8xf32>
    %42 = tpu.matmul %11, %41, %cst_38 {dimension_numbers = #tpu.dot_dimension_numbers<[1], [0], [0], [1], [0, 0, 1, 1], [], []>} : vector<8x32xf32>, vector<32x8xf32>, vector<8x8xf32> -> vector<8x8xf32>
    %c0_39 = arith.constant 0 : index
    %c0_40 = arith.constant 0 : index
    %c0_41 = arith.constant 0 : index
    %43 = vector.load %arg13[%c0_39, %c0_40, %c0_41] : memref<4x1x8xf32, #tpu.memory_space<vmem>>, vector<1x1x8xf32>
    %44 = vector.shape_cast %43 : vector<1x1x8xf32> to vector<1x8xf32>
    %45 = vector.broadcast %44 : vector<1x8xf32> to vector<8x8xf32>
    %46 = arith.addf %42, %45 : vector<8x8xf32>
    %47 = vector.shape_cast %32 : vector<2x8xf32> to vector<2x1x8xf32>
    %48 = vector.shape_cast %39 : vector<8x8xf32> to vector<2x4x8xf32>
    %49 = vector.shape_cast %46 : vector<8x8xf32> to vector<2x4x8xf32>
    "tpu.trace_start"() <{level = 10 : i32, message = "bld,bsd->bls"}> : () -> ()
    %cst_42 = arith.constant dense<0.000000e+00> : vector<2x1x4xf32>
    %50 = tpu.matmul %47, %48, %cst_42 {dimension_numbers = #tpu.dot_dimension_numbers<[2], [2], [1], [1], [0, 0, 0, 1, 1, 1], [0], [0]>} : vector<2x1x8xf32>, vector<2x4x8xf32>, vector<2x1x4xf32> -> vector<2x1x4xf32>
    "tpu.trace_stop"() : () -> ()
    %cst_43 = arith.constant dense<0xFF800000> : vector<2x1xf32>
    %51 = vector.multi_reduction <maximumf>, %50, %cst_43 [2] : vector<2x1x4xf32> to vector<2x1xf32>
    %52 = vector.shape_cast %51 : vector<2x1xf32> to vector<2x1x1xf32>
    %53 = vector.broadcast %52 : vector<2x1x1xf32> to vector<2x1x4xf32>
    %54 = arith.subf %50, %53 : vector<2x1x4xf32>
    %55 = math.exp %54 : vector<2x1x4xf32>
    %cst_44 = arith.constant dense<0.000000e+00> : vector<2x1xf32>
    %56 = vector.multi_reduction <add>, %55, %cst_44 [2] : vector<2x1x4xf32> to vector<2x1xf32>
    %57 = vector.shape_cast %56 : vector<2x1xf32> to vector<2x1x1xf32>
    %58 = tpu.reciprocal %57 {approx = true} : vector<2x1x1xf32> -> vector<2x1x1xf32>
    %59 = vector.broadcast %58 : vector<2x1x1xf32> to vector<2x1x4xf32>
    %60 = arith.mulf %55, %59 : vector<2x1x4xf32>
    %61 = arith.addf %23, %60 : vector<2x1x4xf32>
    "tpu.trace_start"() <{level = 10 : i32, message = "bls,bsd->bld"}> : () -> ()
    %cst_45 = arith.constant dense<0.000000e+00> : vector<2x1x8xf32>
    %62 = tpu.matmul %60, %49, %cst_45 {dimension_numbers = #tpu.dot_dimension_numbers<[2], [1], [1], [2], [0, 0, 0, 1, 1, 2], [0], [0]>} : vector<2x1x4xf32>, vector<2x4x8xf32>, vector<2x1x8xf32> -> vector<2x1x8xf32>
    "tpu.trace_stop"() : () -> ()
    %63 = vector.shape_cast %62 : vector<2x1x8xf32> to vector<2x8xf32>
    %c0_46 = arith.constant 0 : index
    %c0_47 = arith.constant 0 : index
    %c0_48 = arith.constant 0 : index
    %64 = vector.load %arg14[%c0_46, %c0_47, %c0_48] : memref<4x8x32xf32, #tpu.memory_space<vmem>>, vector<1x8x32xf32>
    %65 = vector.shape_cast %64 : vector<1x8x32xf32> to vector<8x32xf32>
    %cst_49 = arith.constant dense<0.000000e+00> : vector<2x32xf32>
    %66 = tpu.matmul %63, %65, %cst_49 {dimension_numbers = #tpu.dot_dimension_numbers<[1], [0], [0], [1], [0, 0, 1, 1], [], []>} : vector<2x8xf32>, vector<8x32xf32>, vector<2x32xf32> -> vector<2x32xf32>
    %67 = arith.addf %22, %66 : vector<2x32xf32>
    %c1 = arith.constant 1 : index
    %c0_50 = arith.constant 0 : index
    %c0_51 = arith.constant 0 : index
    %68 = vector.load %arg8[%c1, %c0_50, %c0_51] : memref<4x32x8xf32, #tpu.memory_space<vmem>>, vector<1x32x8xf32>
    %69 = vector.shape_cast %68 : vector<1x32x8xf32> to vector<32x8xf32>
    %cst_52 = arith.constant dense<0.000000e+00> : vector<2x8xf32>
    %70 = tpu.matmul %21, %69, %cst_52 {dimension_numbers = #tpu.dot_dimension_numbers<[1], [0], [0], [1], [0, 0, 1, 1], [], []>} : vector<2x32xf32>, vector<32x8xf32>, vector<2x8xf32> -> vector<2x8xf32>
    %c1_53 = arith.constant 1 : index
    %c0_54 = arith.constant 0 : index
    %c0_55 = arith.constant 0 : index
    %71 = vector.load %arg9[%c1_53, %c0_54, %c0_55] : memref<4x1x8xf32, #tpu.memory_space<vmem>>, vector<1x1x8xf32>
    %72 = vector.shape_cast %71 : vector<1x1x8xf32> to vector<1x8xf32>
    %73 = vector.broadcast %72 : vector<1x8xf32> to vector<2x8xf32>
    %74 = arith.addf %70, %73 : vector<2x8xf32>
    %cst_56 = arith.constant 0.353553385 : f32
    %75 = vector.broadcast %cst_56 : f32 to vector<2x8xf32>
    %76 = arith.mulf %74, %75 : vector<2x8xf32>
    %c1_57 = arith.constant 1 : index
    %c0_58 = arith.constant 0 : index
    %c0_59 = arith.constant 0 : index
    %77 = vector.load %arg10[%c1_57, %c0_58, %c0_59] : memref<4x32x8xf32, #tpu.memory_space<vmem>>, vector<1x32x8xf32>
    %78 = vector.shape_cast %77 : vector<1x32x8xf32> to vector<32x8xf32>
    %cst_60 = arith.constant dense<0.000000e+00> : vector<8x8xf32>
    %79 = tpu.matmul %6, %78, %cst_60 {dimension_numbers = #tpu.dot_dimension_numbers<[1], [0], [0], [1], [0, 0, 1, 1], [], []>} : vector<8x32xf32>, vector<32x8xf32>, vector<8x8xf32> -> vector<8x8xf32>
    %c1_61 = arith.constant 1 : index
    %c0_62 = arith.constant 0 : index
    %c0_63 = arith.constant 0 : index
    %80 = vector.load %arg11[%c1_61, %c0_62, %c0_63] : memref<4x1x8xf32, #tpu.memory_space<vmem>>, vector<1x1x8xf32>
    %81 = vector.shape_cast %80 : vector<1x1x8xf32> to vector<1x8xf32>
    %82 = vector.broadcast %81 : vector<1x8xf32> to vector<8x8xf32>
    %83 = arith.addf %79, %82 : vector<8x8xf32>
    %c1_64 = arith.constant 1 : index
    %c0_65 = arith.constant 0 : index
    %c0_66 = arith.constant 0 : index
    %84 = vector.load %arg12[%c1_64, %c0_65, %c0_66] : memref<4x32x8xf32, #tpu.memory_space<vmem>>, vector<1x32x8xf32>
    %85 = vector.shape_cast %84 : vector<1x32x8xf32> to vector<32x8xf32>
    %cst_67 = arith.constant dense<0.000000e+00> : vector<8x8xf32>
    %86 = tpu.matmul %11, %85, %cst_67 {dimension_numbers = #tpu.dot_dimension_numbers<[1], [0], [0], [1], [0, 0, 1, 1], [], []>} : vector<8x32xf32>, vector<32x8xf32>, vector<8x8xf32> -> vector<8x8xf32>
    %c1_68 = arith.constant 1 : index
    %c0_69 = arith.constant 0 : index
    %c0_70 = arith.constant 0 : index
    %87 = vector.load %arg13[%c1_68, %c0_69, %c0_70] : memref<4x1x8xf32, #tpu.memory_space<vmem>>, vector<1x1x8xf32>
    %88 = vector.shape_cast %87 : vector<1x1x8xf32> to vector<1x8xf32>
    %89 = vector.broadcast %88 : vector<1x8xf32> to vector<8x8xf32>
    %90 = arith.addf %86, %89 : vector<8x8xf32>
    %91 = vector.shape_cast %76 : vector<2x8xf32> to vector<2x1x8xf32>
    %92 = vector.shape_cast %83 : vector<8x8xf32> to vector<2x4x8xf32>
    %93 = vector.shape_cast %90 : vector<8x8xf32> to vector<2x4x8xf32>
    "tpu.trace_start"() <{level = 10 : i32, message = "bld,bsd->bls"}> : () -> ()
    %cst_71 = arith.constant dense<0.000000e+00> : vector<2x1x4xf32>
    %94 = tpu.matmul %91, %92, %cst_71 {dimension_numbers = #tpu.dot_dimension_numbers<[2], [2], [1], [1], [0, 0, 0, 1, 1, 1], [0], [0]>} : vector<2x1x8xf32>, vector<2x4x8xf32>, vector<2x1x4xf32> -> vector<2x1x4xf32>
    "tpu.trace_stop"() : () -> ()
    %cst_72 = arith.constant dense<0xFF800000> : vector<2x1xf32>
    %95 = vector.multi_reduction <maximumf>, %94, %cst_72 [2] : vector<2x1x4xf32> to vector<2x1xf32>
    %96 = vector.shape_cast %95 : vector<2x1xf32> to vector<2x1x1xf32>
    %97 = vector.broadcast %96 : vector<2x1x1xf32> to vector<2x1x4xf32>
    %98 = arith.subf %94, %97 : vector<2x1x4xf32>
    %99 = math.exp %98 : vector<2x1x4xf32>
    %cst_73 = arith.constant dense<0.000000e+00> : vector<2x1xf32>
    %100 = vector.multi_reduction <add>, %99, %cst_73 [2] : vector<2x1x4xf32> to vector<2x1xf32>
    %101 = vector.shape_cast %100 : vector<2x1xf32> to vector<2x1x1xf32>
    %102 = tpu.reciprocal %101 {approx = true} : vector<2x1x1xf32> -> vector<2x1x1xf32>
    %103 = vector.broadcast %102 : vector<2x1x1xf32> to vector<2x1x4xf32>
    %104 = arith.mulf %99, %103 : vector<2x1x4xf32>
    %105 = arith.addf %61, %104 : vector<2x1x4xf32>
    "tpu.trace_start"() <{level = 10 : i32, message = "bls,bsd->bld"}> : () -> ()
    %cst_74 = arith.constant dense<0.000000e+00> : vector<2x1x8xf32>
    %106 = tpu.matmul %104, %93, %cst_74 {dimension_numbers = #tpu.dot_dimension_numbers<[2], [1], [1], [2], [0, 0, 0, 1, 1, 2], [0], [0]>} : vector<2x1x4xf32>, vector<2x4x8xf32>, vector<2x1x8xf32> -> vector<2x1x8xf32>
    "tpu.trace_stop"() : () -> ()
    %107 = vector.shape_cast %106 : vector<2x1x8xf32> to vector<2x8xf32>
    %c1_75 = arith.constant 1 : index
    %c0_76 = arith.constant 0 : index
    %c0_77 = arith.constant 0 : index
    %108 = vector.load %arg14[%c1_75, %c0_76, %c0_77] : memref<4x8x32xf32, #tpu.memory_space<vmem>>, vector<1x8x32xf32>
    %109 = vector.shape_cast %108 : vector<1x8x32xf32> to vector<8x32xf32>
    %cst_78 = arith.constant dense<0.000000e+00> : vector<2x32xf32>
    %110 = tpu.matmul %107, %109, %cst_78 {dimension_numbers = #tpu.dot_dimension_numbers<[1], [0], [0], [1], [0, 0, 1, 1], [], []>} : vector<2x8xf32>, vector<8x32xf32>, vector<2x32xf32> -> vector<2x32xf32>
    %111 = arith.addf %67, %110 : vector<2x32xf32>
    %c2 = arith.constant 2 : index
    %c0_79 = arith.constant 0 : index
    %c0_80 = arith.constant 0 : index
    %112 = vector.load %arg8[%c2, %c0_79, %c0_80] : memref<4x32x8xf32, #tpu.memory_space<vmem>>, vector<1x32x8xf32>
    %113 = vector.shape_cast %112 : vector<1x32x8xf32> to vector<32x8xf32>
    %cst_81 = arith.constant dense<0.000000e+00> : vector<2x8xf32>
    %114 = tpu.matmul %21, %113, %cst_81 {dimension_numbers = #tpu.dot_dimension_numbers<[1], [0], [0], [1], [0, 0, 1, 1], [], []>} : vector<2x32xf32>, vector<32x8xf32>, vector<2x8xf32> -> vector<2x8xf32>
    %c2_82 = arith.constant 2 : index
    %c0_83 = arith.constant 0 : index
    %c0_84 = arith.constant 0 : index
    %115 = vector.load %arg9[%c2_82, %c0_83, %c0_84] : memref<4x1x8xf32, #tpu.memory_space<vmem>>, vector<1x1x8xf32>
    %116 = vector.shape_cast %115 : vector<1x1x8xf32> to vector<1x8xf32>
    %117 = vector.broadcast %116 : vector<1x8xf32> to vector<2x8xf32>
    %118 = arith.addf %114, %117 : vector<2x8xf32>
    %cst_85 = arith.constant 0.353553385 : f32
    %119 = vector.broadcast %cst_85 : f32 to vector<2x8xf32>
    %120 = arith.mulf %118, %119 : vector<2x8xf32>
    %c2_86 = arith.constant 2 : index
    %c0_87 = arith.constant 0 : index
    %c0_88 = arith.constant 0 : index
    %121 = vector.load %arg10[%c2_86, %c0_87, %c0_88] : memref<4x32x8xf32, #tpu.memory_space<vmem>>, vector<1x32x8xf32>
    %122 = vector.shape_cast %121 : vector<1x32x8xf32> to vector<32x8xf32>
    %cst_89 = arith.constant dense<0.000000e+00> : vector<8x8xf32>
    %123 = tpu.matmul %6, %122, %cst_89 {dimension_numbers = #tpu.dot_dimension_numbers<[1], [0], [0], [1], [0, 0, 1, 1], [], []>} : vector<8x32xf32>, vector<32x8xf32>, vector<8x8xf32> -> vector<8x8xf32>
    %c2_90 = arith.constant 2 : index
    %c0_91 = arith.constant 0 : index
    %c0_92 = arith.constant 0 : index
    %124 = vector.load %arg11[%c2_90, %c0_91, %c0_92] : memref<4x1x8xf32, #tpu.memory_space<vmem>>, vector<1x1x8xf32>
    %125 = vector.shape_cast %124 : vector<1x1x8xf32> to vector<1x8xf32>
    %126 = vector.broadcast %125 : vector<1x8xf32> to vector<8x8xf32>
    %127 = arith.addf %123, %126 : vector<8x8xf32>
    %c2_93 = arith.constant 2 : index
    %c0_94 = arith.constant 0 : index
    %c0_95 = arith.constant 0 : index
    %128 = vector.load %arg12[%c2_93, %c0_94, %c0_95] : memref<4x32x8xf32, #tpu.memory_space<vmem>>, vector<1x32x8xf32>
    %129 = vector.shape_cast %128 : vector<1x32x8xf32> to vector<32x8xf32>
    %cst_96 = arith.constant dense<0.000000e+00> : vector<8x8xf32>
    %130 = tpu.matmul %11, %129, %cst_96 {dimension_numbers = #tpu.dot_dimension_numbers<[1], [0], [0], [1], [0, 0, 1, 1], [], []>} : vector<8x32xf32>, vector<32x8xf32>, vector<8x8xf32> -> vector<8x8xf32>
    %c2_97 = arith.constant 2 : index
    %c0_98 = arith.constant 0 : index
    %c0_99 = arith.constant 0 : index
    %131 = vector.load %arg13[%c2_97, %c0_98, %c0_99] : memref<4x1x8xf32, #tpu.memory_space<vmem>>, vector<1x1x8xf32>
    %132 = vector.shape_cast %131 : vector<1x1x8xf32> to vector<1x8xf32>
    %133 = vector.broadcast %132 : vector<1x8xf32> to vector<8x8xf32>
    %134 = arith.addf %130, %133 : vector<8x8xf32>
    %135 = vector.shape_cast %120 : vector<2x8xf32> to vector<2x1x8xf32>
    %136 = vector.shape_cast %127 : vector<8x8xf32> to vector<2x4x8xf32>
    %137 = vector.shape_cast %134 : vector<8x8xf32> to vector<2x4x8xf32>
    "tpu.trace_start"() <{level = 10 : i32, message = "bld,bsd->bls"}> : () -> ()
    %cst_100 = arith.constant dense<0.000000e+00> : vector<2x1x4xf32>
    %138 = tpu.matmul %135, %136, %cst_100 {dimension_numbers = #tpu.dot_dimension_numbers<[2], [2], [1], [1], [0, 0, 0, 1, 1, 1], [0], [0]>} : vector<2x1x8xf32>, vector<2x4x8xf32>, vector<2x1x4xf32> -> vector<2x1x4xf32>
    "tpu.trace_stop"() : () -> ()
    %cst_101 = arith.constant dense<0xFF800000> : vector<2x1xf32>
    %139 = vector.multi_reduction <maximumf>, %138, %cst_101 [2] : vector<2x1x4xf32> to vector<2x1xf32>
    %140 = vector.shape_cast %139 : vector<2x1xf32> to vector<2x1x1xf32>
    %141 = vector.broadcast %140 : vector<2x1x1xf32> to vector<2x1x4xf32>
    %142 = arith.subf %138, %141 : vector<2x1x4xf32>
    %143 = math.exp %142 : vector<2x1x4xf32>
    %cst_102 = arith.constant dense<0.000000e+00> : vector<2x1xf32>
    %144 = vector.multi_reduction <add>, %143, %cst_102 [2] : vector<2x1x4xf32> to vector<2x1xf32>
    %145 = vector.shape_cast %144 : vector<2x1xf32> to vector<2x1x1xf32>
    %146 = tpu.reciprocal %145 {approx = true} : vector<2x1x1xf32> -> vector<2x1x1xf32>
    %147 = vector.broadcast %146 : vector<2x1x1xf32> to vector<2x1x4xf32>
    %148 = arith.mulf %143, %147 : vector<2x1x4xf32>
    %149 = arith.addf %105, %148 : vector<2x1x4xf32>
    "tpu.trace_start"() <{level = 10 : i32, message = "bls,bsd->bld"}> : () -> ()
    %cst_103 = arith.constant dense<0.000000e+00> : vector<2x1x8xf32>
    %150 = tpu.matmul %148, %137, %cst_103 {dimension_numbers = #tpu.dot_dimension_numbers<[2], [1], [1], [2], [0, 0, 0, 1, 1, 2], [0], [0]>} : vector<2x1x4xf32>, vector<2x4x8xf32>, vector<2x1x8xf32> -> vector<2x1x8xf32>
    "tpu.trace_stop"() : () -> ()
    %151 = vector.shape_cast %150 : vector<2x1x8xf32> to vector<2x8xf32>
    %c2_104 = arith.constant 2 : index
    %c0_105 = arith.constant 0 : index
    %c0_106 = arith.constant 0 : index
    %152 = vector.load %arg14[%c2_104, %c0_105, %c0_106] : memref<4x8x32xf32, #tpu.memory_space<vmem>>, vector<1x8x32xf32>
    %153 = vector.shape_cast %152 : vector<1x8x32xf32> to vector<8x32xf32>
    %cst_107 = arith.constant dense<0.000000e+00> : vector<2x32xf32>
    %154 = tpu.matmul %151, %153, %cst_107 {dimension_numbers = #tpu.dot_dimension_numbers<[1], [0], [0], [1], [0, 0, 1, 1], [], []>} : vector<2x8xf32>, vector<8x32xf32>, vector<2x32xf32> -> vector<2x32xf32>
    %155 = arith.addf %111, %154 : vector<2x32xf32>
    %c3 = arith.constant 3 : index
    %c0_108 = arith.constant 0 : index
    %c0_109 = arith.constant 0 : index
    %156 = vector.load %arg8[%c3, %c0_108, %c0_109] : memref<4x32x8xf32, #tpu.memory_space<vmem>>, vector<1x32x8xf32>
    %157 = vector.shape_cast %156 : vector<1x32x8xf32> to vector<32x8xf32>
    %cst_110 = arith.constant dense<0.000000e+00> : vector<2x8xf32>
    %158 = tpu.matmul %21, %157, %cst_110 {dimension_numbers = #tpu.dot_dimension_numbers<[1], [0], [0], [1], [0, 0, 1, 1], [], []>} : vector<2x32xf32>, vector<32x8xf32>, vector<2x8xf32> -> vector<2x8xf32>
    %c3_111 = arith.constant 3 : index
    %c0_112 = arith.constant 0 : index
    %c0_113 = arith.constant 0 : index
    %159 = vector.load %arg9[%c3_111, %c0_112, %c0_113] : memref<4x1x8xf32, #tpu.memory_space<vmem>>, vector<1x1x8xf32>
    %160 = vector.shape_cast %159 : vector<1x1x8xf32> to vector<1x8xf32>
    %161 = vector.broadcast %160 : vector<1x8xf32> to vector<2x8xf32>
    %162 = arith.addf %158, %161 : vector<2x8xf32>
    %cst_114 = arith.constant 0.353553385 : f32
    %163 = vector.broadcast %cst_114 : f32 to vector<2x8xf32>
    %164 = arith.mulf %162, %163 : vector<2x8xf32>
    %c3_115 = arith.constant 3 : index
    %c0_116 = arith.constant 0 : index
    %c0_117 = arith.constant 0 : index
    %165 = vector.load %arg10[%c3_115, %c0_116, %c0_117] : memref<4x32x8xf32, #tpu.memory_space<vmem>>, vector<1x32x8xf32>
    %166 = vector.shape_cast %165 : vector<1x32x8xf32> to vector<32x8xf32>
    %cst_118 = arith.constant dense<0.000000e+00> : vector<8x8xf32>
    %167 = tpu.matmul %6, %166, %cst_118 {dimension_numbers = #tpu.dot_dimension_numbers<[1], [0], [0], [1], [0, 0, 1, 1], [], []>} : vector<8x32xf32>, vector<32x8xf32>, vector<8x8xf32> -> vector<8x8xf32>
    %c3_119 = arith.constant 3 : index
    %c0_120 = arith.constant 0 : index
    %c0_121 = arith.constant 0 : index
    %168 = vector.load %arg11[%c3_119, %c0_120, %c0_121] : memref<4x1x8xf32, #tpu.memory_space<vmem>>, vector<1x1x8xf32>
    %169 = vector.shape_cast %168 : vector<1x1x8xf32> to vector<1x8xf32>
    %170 = vector.broadcast %169 : vector<1x8xf32> to vector<8x8xf32>
    %171 = arith.addf %167, %170 : vector<8x8xf32>
    %c3_122 = arith.constant 3 : index
    %c0_123 = arith.constant 0 : index
    %c0_124 = arith.constant 0 : index
    %172 = vector.load %arg12[%c3_122, %c0_123, %c0_124] : memref<4x32x8xf32, #tpu.memory_space<vmem>>, vector<1x32x8xf32>
    %173 = vector.shape_cast %172 : vector<1x32x8xf32> to vector<32x8xf32>
    %cst_125 = arith.constant dense<0.000000e+00> : vector<8x8xf32>
    %174 = tpu.matmul %11, %173, %cst_125 {dimension_numbers = #tpu.dot_dimension_numbers<[1], [0], [0], [1], [0, 0, 1, 1], [], []>} : vector<8x32xf32>, vector<32x8xf32>, vector<8x8xf32> -> vector<8x8xf32>
    %c3_126 = arith.constant 3 : index
    %c0_127 = arith.constant 0 : index
    %c0_128 = arith.constant 0 : index
    %175 = vector.load %arg13[%c3_126, %c0_127, %c0_128] : memref<4x1x8xf32, #tpu.memory_space<vmem>>, vector<1x1x8xf32>
    %176 = vector.shape_cast %175 : vector<1x1x8xf32> to vector<1x8xf32>
    %177 = vector.broadcast %176 : vector<1x8xf32> to vector<8x8xf32>
    %178 = arith.addf %174, %177 : vector<8x8xf32>
    %179 = vector.shape_cast %164 : vector<2x8xf32> to vector<2x1x8xf32>
    %180 = vector.shape_cast %171 : vector<8x8xf32> to vector<2x4x8xf32>
    %181 = vector.shape_cast %178 : vector<8x8xf32> to vector<2x4x8xf32>
    "tpu.trace_start"() <{level = 10 : i32, message = "bld,bsd->bls"}> : () -> ()
    %cst_129 = arith.constant dense<0.000000e+00> : vector<2x1x4xf32>
    %182 = tpu.matmul %179, %180, %cst_129 {dimension_numbers = #tpu.dot_dimension_numbers<[2], [2], [1], [1], [0, 0, 0, 1, 1, 1], [0], [0]>} : vector<2x1x8xf32>, vector<2x4x8xf32>, vector<2x1x4xf32> -> vector<2x1x4xf32>
    "tpu.trace_stop"() : () -> ()
    %cst_130 = arith.constant dense<0xFF800000> : vector<2x1xf32>
    %183 = vector.multi_reduction <maximumf>, %182, %cst_130 [2] : vector<2x1x4xf32> to vector<2x1xf32>
    %184 = vector.shape_cast %183 : vector<2x1xf32> to vector<2x1x1xf32>
    %185 = vector.broadcast %184 : vector<2x1x1xf32> to vector<2x1x4xf32>
    %186 = arith.subf %182, %185 : vector<2x1x4xf32>
    %187 = math.exp %186 : vector<2x1x4xf32>
    %cst_131 = arith.constant dense<0.000000e+00> : vector<2x1xf32>
    %188 = vector.multi_reduction <add>, %187, %cst_131 [2] : vector<2x1x4xf32> to vector<2x1xf32>
    %189 = vector.shape_cast %188 : vector<2x1xf32> to vector<2x1x1xf32>
    %190 = tpu.reciprocal %189 {approx = true} : vector<2x1x1xf32> -> vector<2x1x1xf32>
    %191 = vector.broadcast %190 : vector<2x1x1xf32> to vector<2x1x4xf32>
    %192 = arith.mulf %187, %191 : vector<2x1x4xf32>
    %193 = arith.addf %149, %192 : vector<2x1x4xf32>
    "tpu.trace_start"() <{level = 10 : i32, message = "bls,bsd->bld"}> : () -> ()
    %cst_132 = arith.constant dense<0.000000e+00> : vector<2x1x8xf32>
    %194 = tpu.matmul %192, %181, %cst_132 {dimension_numbers = #tpu.dot_dimension_numbers<[2], [1], [1], [2], [0, 0, 0, 1, 1, 2], [0], [0]>} : vector<2x1x4xf32>, vector<2x4x8xf32>, vector<2x1x8xf32> -> vector<2x1x8xf32>
    "tpu.trace_stop"() : () -> ()
    %195 = vector.shape_cast %194 : vector<2x1x8xf32> to vector<2x8xf32>
    %c3_133 = arith.constant 3 : index
    %c0_134 = arith.constant 0 : index
    %c0_135 = arith.constant 0 : index
    %196 = vector.load %arg14[%c3_133, %c0_134, %c0_135] : memref<4x8x32xf32, #tpu.memory_space<vmem>>, vector<1x8x32xf32>
    %197 = vector.shape_cast %196 : vector<1x8x32xf32> to vector<8x32xf32>
    %cst_136 = arith.constant dense<0.000000e+00> : vector<2x32xf32>
    %198 = tpu.matmul %195, %197, %cst_136 {dimension_numbers = #tpu.dot_dimension_numbers<[1], [0], [0], [1], [0, 0, 1, 1], [], []>} : vector<2x8xf32>, vector<8x32xf32>, vector<2x32xf32> -> vector<2x32xf32>
    %199 = arith.addf %155, %198 : vector<2x32xf32>
    %c0_137 = arith.constant 0 : index
    %c0_138 = arith.constant 0 : index
    %200 = vector.load %arg15[%c0_137, %c0_138] : memref<1x32xf32, #tpu.memory_space<vmem>>, vector<1x32xf32>
    %201 = vector.broadcast %200 : vector<1x32xf32> to vector<2x32xf32>
    %202 = arith.addf %199, %201 : vector<2x32xf32>
    %203 = vector.shape_cast %202 : vector<2x32xf32> to vector<2x1x32xf32>
    %cst_139 = arith.constant 2.500000e-01 : f32
    %204 = vector.broadcast %cst_139 : f32 to vector<2x1x4xf32>
    %205 = arith.mulf %193, %204 : vector<2x1x4xf32>
    %cst_140 = arith.constant 0.000000e+00 : f32
    %206 = vector.broadcast %cst_140 : f32 to vector<2x1x92xf32>
    %207 = tpu.concatenate %203, %205, %206 in 2 : vector<2x1x32xf32>, vector<2x1x4xf32>, vector<2x1x92xf32> -> vector<2x1x128xf32>
    %c0_141 = arith.constant 0 : index
    %c0_142 = arith.constant 0 : index
    %c0_143 = arith.constant 0 : index
    %208 = vector.load %arg16[%c0_141, %c0_142, %c0_143] : memref<2x1x128xf32, #tpu.memory_space<vmem>>, vector<2x1x128xf32>
    tpu.vector_store %arg16[%c0_141, %c0_142, %c0_143], %207 {strides = array<i32>} : memref<2x1x128xf32, #tpu.memory_space<vmem>>, vector<2x1x128xf32>,
    return
  }
  func.func @transform_0(%arg0: i32) -> (i32, i32, i32) {
    %c0_i32 = arith.constant 0 : i32
    %c0_i32_0 = arith.constant 0 : i32
    %c0_i32_1 = arith.constant 0 : i32
    return %arg0, %c0_i32, %c0_i32_0 : i32, i32, i32
  }
  func.func @transform_1(%arg0: i32) -> (i32, i32) {
    %c0_i32 = arith.constant 0 : i32
    %c0_i32_0 = arith.constant 0 : i32
    %c0_i32_1 = arith.constant 0 : i32
    return %c0_i32, %c0_i32_0 : i32, i32
  }
  func.func @transform_2(%arg0: i32) -> (i32, i32) {
    %c0_i32 = arith.constant 0 : i32
    %c0_i32_0 = arith.constant 0 : i32
    %c0_i32_1 = arith.constant 0 : i32
    return %c0_i32, %c0_i32_0 : i32, i32
  }
  func.func @transform_3(%arg0: i32) -> (i32, i32) {
    %c0_i32 = arith.constant 0 : i32
    %c0_i32_0 = arith.constant 0 : i32
    %c0_i32_1 = arith.constant 0 : i32
    return %c0_i32, %c0_i32_0 : i32, i32
  }
  func.func @transform_4(%arg0: i32) -> (i32, i32) {
    %c0_i32 = arith.constant 0 : i32
    %c0_i32_0 = arith.constant 0 : i32
    %c0_i32_1 = arith.constant 0 : i32
    return %c0_i32, %c0_i32_0 : i32, i32
  }
  func.func @transform_5(%arg0: i32) -> (i32, i32) {
    %c0_i32 = arith.constant 0 : i32
    %c0_i32_0 = arith.constant 0 : i32
    %c0_i32_1 = arith.constant 0 : i32
    return %c0_i32, %c0_i32_0 : i32, i32
  }
  func.func @transform_6(%arg0: i32) -> (i32, i32) {
    %c0_i32 = arith.constant 0 : i32
    %c0_i32_0 = arith.constant 0 : i32
    %c0_i32_1 = arith.constant 0 : i32
    return %c0_i32, %c0_i32_0 : i32, i32
  }
  func.func @transform_7(%arg0: i32) -> (i32, i32, i32) {
    %c0_i32 = arith.constant 0 : i32
    %c0_i32_0 = arith.constant 0 : i32
    %c0_i32_1 = arith.constant 0 : i32
    %c0_i32_2 = arith.constant 0 : i32
    return %c0_i32, %c0_i32_0, %c0_i32_1 : i32, i32, i32
  }
  func.func @transform_8(%arg0: i32) -> (i32, i32, i32) {
    %c0_i32 = arith.constant 0 : i32
    %c0_i32_0 = arith.constant 0 : i32
    %c0_i32_1 = arith.constant 0 : i32
    %c0_i32_2 = arith.constant 0 : i32
    return %c0_i32, %c0_i32_0, %c0_i32_1 : i32, i32, i32
  }
  func.func @transform_9(%arg0: i32) -> (i32, i32, i32) {
    %c0_i32 = arith.constant 0 : i32
    %c0_i32_0 = arith.constant 0 : i32
    %c0_i32_1 = arith.constant 0 : i32
    %c0_i32_2 = arith.constant 0 : i32
    return %c0_i32, %c0_i32_0, %c0_i32_1 : i32, i32, i32
  }
  func.func @transform_10(%arg0: i32) -> (i32, i32, i32) {
    %c0_i32 = arith.constant 0 : i32
    %c0_i32_0 = arith.constant 0 : i32
    %c0_i32_1 = arith.constant 0 : i32
    %c0_i32_2 = arith.constant 0 : i32
    return %c0_i32, %c0_i32_0, %c0_i32_1 : i32, i32, i32
  }
  func.func @transform_11(%arg0: i32) -> (i32, i32, i32) {
    %c0_i32 = arith.constant 0 : i32
    %c0_i32_0 = arith.constant 0 : i32
    %c0_i32_1 = arith.constant 0 : i32
    %c0_i32_2 = arith.constant 0 : i32
    return %c0_i32, %c0_i32_0, %c0_i32_1 : i32, i32, i32
  }
  func.func @transform_12(%arg0: i32) -> (i32, i32, i32) {
    %c0_i32 = arith.constant 0 : i32
    %c0_i32_0 = arith.constant 0 : i32
    %c0_i32_1 = arith.constant 0 : i32
    %c0_i32_2 = arith.constant 0 : i32
    return %c0_i32, %c0_i32_0, %c0_i32_1 : i32, i32, i32
  }
  func.func @transform_13(%arg0: i32) -> (i32, i32, i32) {
    %c0_i32 = arith.constant 0 : i32
    %c0_i32_0 = arith.constant 0 : i32
    %c0_i32_1 = arith.constant 0 : i32
    %c0_i32_2 = arith.constant 0 : i32
    return %c0_i32, %c0_i32_0, %c0_i32_1 : i32, i32, i32
  }
  func.func @transform_14(%arg0: i32) -> (i32, i32) {
    %c0_i32 = arith.constant 0 : i32
    %c0_i32_0 = arith.constant 0 : i32
    %c0_i32_1 = arith.constant 0 : i32
    return %c0_i32, %c0_i32_0 : i32, i32
  }
  func.func @transform_15(%arg0: i32) -> (i32, i32, i32) {
    %c0_i32 = arith.constant 0 : i32
    %c0_i32_0 = arith.constant 0 : i32
    %c0_i32_1 = arith.constant 0 : i32
    return %arg0, %c0_i32, %c0_i32_0 : i32, i32, i32
  }
}

</mosaic_0001>

<llo_original>
// kernel: multihead_attention_feature_pooling.1
$region0: #{multihead_attention_feature_pooling.1}
  #allocation0 [shape = 'u32[]', space=smem, size = 0x4, offset = 0x4, fixed_abs, tag = 'smem constant byte address 0x4 - core index']
  #allocation1 [shape = 'u32[144,128]{1,0:T(1,128)}', space=vmem, size = 0x12000, scoped, tag = 'internal scratch']
  %s0 = inlined_call_operand.vmem [shape: f32[2,4,16], index: 0, kind: input, shape index: {}]
  %s1 = inlined_call_operand.vmem [shape: f32[16,32], index: 1, kind: input, shape index: {}]
  %s2 = inlined_call_operand.vmem [shape: f32[1,32], index: 2, kind: input, shape index: {}]
  %s3 = inlined_call_operand.vmem [shape: f32[16,32], index: 3, kind: input, shape index: {}]
  %s4 = inlined_call_operand.vmem [shape: f32[1,32], index: 4, kind: input, shape index: {}]
  %s5 = inlined_call_operand.vmem [shape: f32[16,32], index: 5, kind: input, shape index: {}]
  %s6 = inlined_call_operand.vmem [shape: f32[1,32], index: 6, kind: input, shape index: {}]
  %s7 = inlined_call_operand.vmem [shape: f32[4,32,8], index: 7, kind: input, shape index: {}]
  %s8 = inlined_call_operand.vmem [shape: f32[4,1,8], index: 8, kind: input, shape index: {}]
  %s9 = inlined_call_operand.vmem [shape: f32[4,32,8], index: 9, kind: input, shape index: {}]
  %s10 = inlined_call_operand.vmem [shape: f32[4,1,8], index: 10, kind: input, shape index: {}]
  %s11 = inlined_call_operand.vmem [shape: f32[4,32,8], index: 11, kind: input, shape index: {}]
  %s12 = inlined_call_operand.vmem [shape: f32[4,1,8], index: 12, kind: input, shape index: {}]
  %s13 = inlined_call_operand.vmem [shape: f32[4,8,32], index: 13, kind: input, shape index: {}]
  %s14 = inlined_call_operand.vmem [shape: f32[1,32], index: 14, kind: input, shape index: {}]
  %s15 = inlined_call_operand.vmem [shape: f32[2,1,128], index: 15, kind: output, shape index: {}]
  %s16 = sld [smem:[#allocation0]]
  $region70: #{multihead_attention_feature_pooling.1} parent=0
    _
  %s18 = ssub.s32 1, %s16
  %s19 = scalar_select 0, %s18, %s16
  // Predicated region
  $region2: #{multihead_attention_feature_pooling.1} parent=0 // pred_check
    _
  $region3: #{multihead_attention_feature_pooling.1} parent=0 // pred_check_branch
    %21 = sbr.rel (0) target = $region5
  $region4: #{multihead_attention_feature_pooling.1} parent=0 // pred_region
    _
  $region5: #{multihead_attention_feature_pooling.1} parent=0 // pred_fallthru
    _
  // Predicated region
  $region6: #{multihead_attention_feature_pooling.1} parent=0 // pred_check
    _
  $region7: #{multihead_attention_feature_pooling.1} parent=0 // pred_check_branch
    %23 = sbr.rel (0) target = $region9
  $region8: #{multihead_attention_feature_pooling.1} parent=0 // pred_region
    _
  $region9: #{multihead_attention_feature_pooling.1} parent=0 // pred_fallthru
    _
  // Predicated region
  $region10: #{multihead_attention_feature_pooling.1} parent=0 // pred_check
    _
  $region11: #{multihead_attention_feature_pooling.1} parent=0 // pred_check_branch
    %25 = sbr.rel (0) target = $region13
  $region12: #{multihead_attention_feature_pooling.1} parent=0 // pred_region
    _
  $region13: #{multihead_attention_feature_pooling.1} parent=0 // pred_fallthru
    _
  // Predicated region
  $region14: #{multihead_attention_feature_pooling.1} parent=0 // pred_check
    _
  $region15: #{multihead_attention_feature_pooling.1} parent=0 // pred_check_branch
    %27 = sbr.rel (0) target = $region17
  $region16: #{multihead_attention_feature_pooling.1} parent=0 // pred_region
    _
  $region17: #{multihead_attention_feature_pooling.1} parent=0 // pred_fallthru
    _
  // Predicated region
  $region18: #{multihead_attention_feature_pooling.1} parent=0 // pred_check
    _
  $region19: #{multihead_attention_feature_pooling.1} parent=0 // pred_check_branch
    %29 = sbr.rel (0) target = $region21
  $region20: #{multihead_attention_feature_pooling.1} parent=0 // pred_region
    _
  $region21: #{multihead_attention_feature_pooling.1} parent=0 // pred_fallthru
    _
  // Predicated region
  $region22: #{multihead_attention_feature_pooling.1} parent=0 // pred_check
    _
  $region23: #{multihead_attention_feature_pooling.1} parent=0 // pred_check_branch
    %31 = sbr.rel (0) target = $region25
  $region24: #{multihead_attention_feature_pooling.1} parent=0 // pred_region
    _
  $region25: #{multihead_attention_feature_pooling.1} parent=0 // pred_fallthru
    _
  // Predicated region
  $region26: #{multihead_attention_feature_pooling.1} parent=0 // pred_check
    _
  $region27: #{multihead_attention_feature_pooling.1} parent=0 // pred_check_branch
    %33 = sbr.rel (0) target = $region29
  $region28: #{multihead_attention_feature_pooling.1} parent=0 // pred_region
    _
  $region29: #{multihead_attention_feature_pooling.1} parent=0 // pred_fallthru
    _
  // Predicated region
  $region30: #{multihead_attention_feature_pooling.1} parent=0 // pred_check
    _
  $region31: #{multihead_attention_feature_pooling.1} parent=0 // pred_check_branch
    %35 = sbr.rel (0) target = $region33
  $region32: #{multihead_attention_feature_pooling.1} parent=0 // pred_region
    _
  $region33: #{multihead_attention_feature_pooling.1} parent=0 // pred_fallthru
    _
  // Predicated region
  $region34: #{multihead_attention_feature_pooling.1} parent=0 // pred_check
    _
  $region35: #{multihead_attention_feature_pooling.1} parent=0 // pred_check_branch
    %37 = sbr.rel (0) target = $region37
  $region36: #{multihead_attention_feature_pooling.1} parent=0 // pred_region
    _
  $region37: #{multihead_attention_feature_pooling.1} parent=0 // pred_fallthru
    _
  // Predicated region
  $region38: #{multihead_attention_feature_pooling.1} parent=0 // pred_check
    _
  $region39: #{multihead_attention_feature_pooling.1} parent=0 // pred_check_branch
    %39 = sbr.rel (0) target = $region41
  $region40: #{multihead_attention_feature_pooling.1} parent=0 // pred_region
    _
  $region41: #{multihead_attention_feature_pooling.1} parent=0 // pred_fallthru
    _
  // Predicated region
  $region42: #{multihead_attention_feature_pooling.1} parent=0 // pred_check
    _
  $region43: #{multihead_attention_feature_pooling.1} parent=0 // pred_check_branch
    %41 = sbr.rel (0) target = $region45
  $region44: #{multihead_attention_feature_pooling.1} parent=0 // pred_region
    _
  $region45: #{multihead_attention_feature_pooling.1} parent=0 // pred_fallthru
    _
  // Predicated region
  $region46: #{multihead_attention_feature_pooling.1} parent=0 // pred_check
    _
  $region47: #{multihead_attention_feature_pooling.1} parent=0 // pred_check_branch
    %43 = sbr.rel (0) target = $region49
  $region48: #{multihead_attention_feature_pooling.1} parent=0 // pred_region
    _
  $region49: #{multihead_attention_feature_pooling.1} parent=0 // pred_fallthru
    _
  // Predicated region
  $region50: #{multihead_attention_feature_pooling.1} parent=0 // pred_check
    _
  $region51: #{multihead_attention_feature_pooling.1} parent=0 // pred_check_branch
    %45 = sbr.rel (0) target = $region53
  $region52: #{multihead_attention_feature_pooling.1} parent=0 // pred_region
    _
  $region53: #{multihead_attention_feature_pooling.1} parent=0 // pred_fallthru
    _
  // Predicated region
  $region54: #{multihead_attention_feature_pooling.1} parent=0 // pred_check
    _
  $region55: #{multihead_attention_feature_pooling.1} parent=0 // pred_check_branch
    %47 = sbr.rel (0) target = $region57
  $region56: #{multihead_attention_feature_pooling.1} parent=0 // pred_region
    _
  $region57: #{multihead_attention_feature_pooling.1} parent=0 // pred_fallthru
    _
  // Predicated region
  $region58: #{multihead_attention_feature_pooling.1} parent=0 // pred_check
    _
  $region59: #{multihead_attention_feature_pooling.1} parent=0 // pred_check_branch
    %49 = sbr.rel (0) target = $region61
  $region60: #{multihead_attention_feature_pooling.1} parent=0 // pred_region
    _
  $region61: #{multihead_attention_feature_pooling.1} parent=0 // pred_fallthru
    _
  %v50 = vld [vmem:[%s0] sm:$0xf]
  %v51 = vld [vmem:[%s0 + $0x4] sm:$0xf]
  %v52 = vld [vmem:[%s3] sm:$0xff]
  %v53 = vld [vmem:[%s3 + $0x8] sm:$0xff]
  %v54 = vld [vmem:[%s4] sm:$0x1]
  %v56 = vlaneseq
  %v57 = vshrl.u32 %v56, 7
  %v58 = vsub.s32 0, %v57
  %v59 = vrot.slane %v54, %v58
  %v63 = vcombine.low %v50, %v51
  %vm64 = vcmask 130048
  %v65 = vsel %vm64, %v63, 0
  %67 = vmatprep.subr.mxu0 0.0
  %68 = vmatpush1.msra.mxu0 %v52
  %69 = vmatprep.subr.mxu0 0.0
  %70 = vmatpush1.msra.mxu0 %v53
  %71 = vmatprep.subr.mxu0 0.0
  %72 = vmatpush1.msra.mxu0 0.0
  %73 = vmatprep.subr.mxu0 0.0
  %74 = vmatpush1.msra.mxu0 0.0
  %75 = vmatprep.subr.mxu0 0.0
  %76 = vmatpush1.msra.mxu0 0.0
  %77 = vmatprep.subr.mxu0 0.0
  %78 = vmatpush1.msra.mxu0 0.0
  %79 = vmatprep.subr.mxu0 0.0
  %80 = vmatpush1.msra.mxu0 0.0
  %81 = vmatprep.subr.mxu0 0.0
  %82 = vmatpush1.msra.mxu0 0.0
  %83 = vmatprep.subr.mxu0 0.0
  %84 = vmatpush1.msra.mxu0 0.0
  %85 = vmatprep.subr.mxu0 0.0
  %86 = vmatpush1.msra.mxu0 0.0
  %87 = vmatprep.subr.mxu0 0.0
  %88 = vmatpush1.msra.mxu0 0.0
  %89 = vmatprep.subr.mxu0 0.0
  %90 = vmatpush1.msra.mxu0 0.0
  %91 = vmatprep.subr.mxu0 0.0
  %92 = vmatpush1.msra.mxu0 0.0
  %93 = vmatprep.subr.mxu0 0.0
  %94 = vmatpush1.msra.mxu0 0.0
  %95 = vmatprep.subr.mxu0 0.0
  %96 = vmatpush1.msra.mxu0 0.0
  %97 = vmatprep.subr.mxu0 0.0
  %98 = vmatpush1.msra.mxu0 0.0
  %99 = vmatprep.subr.mxu0 0.0
  %100 = vmatpush1.msra.mxu0 0.0
  %101 = vmatprep.subr.mxu0 0.0
  %102 = vmatpush1.msra.mxu0 0.0
  %103 = vmatprep.subr.mxu0 0.0
  %104 = vmatpush1.msra.mxu0 0.0
  %105 = vmatprep.subr.mxu0 0.0
  %106 = vmatpush1.msra.mxu0 0.0
  %107 = vmatprep.subr.mxu0 0.0
  %108 = vmatpush1.msra.mxu0 0.0
  %109 = vmatprep.subr.mxu0 0.0
  %110 = vmatpush1.msra.mxu0 0.0
  %111 = vmatprep.subr.mxu0 0.0
  %112 = vmatpush1.msra.mxu0 0.0
  %113 = vmatprep.subr.mxu0 0.0
  %114 = vmatpush1.msra.mxu0 0.0
  %115 = vmatprep.subr.mxu0 0.0
  %116 = vmatpush1.msra.mxu0 0.0
  %117 = vmatprep.subr.mxu0 0.0
  %118 = vmatpush1.msra.mxu0 0.0
  %119 = vmatprep.subr.mxu0 0.0
  %120 = vmatpush1.msra.mxu0 0.0
  %121 = vmatprep.subr.mxu0 0.0
  %122 = vmatpush1.msra.mxu0 0.0
  %123 = vmatprep.subr.mxu0 0.0
  %124 = vmatpush1.msra.mxu0 0.0
  %125 = vmatprep.subr.mxu0 0.0
  %126 = vmatpush1.msra.mxu0 0.0
  %127 = vmatprep.subr.mxu0 0.0
  %128 = vmatpush1.msra.mxu0 0.0
  %129 = vmatprep.subr.mxu0 0.0
  %130 = vmatpush1.msra.mxu0 0.0
  %131 = vmatprep.mubr.f32.mxu0 0.0
  %132 = vmatmul.mubr.f32.gmra.mrb[0].mxu0 %v65
  %v133 = vpop.f32.mrb[0].mxu0
  %v134 = vadd.f32 %v59, %v133
  %v135 = vpop.f32.mrb[0].mxu0
  %136 = vdwg.mxu0
  %v137 = vld [vmem:[%s5] sm:$0xff]
  %v138 = vld [vmem:[%s5 + $0x8] sm:$0xff]
  %v139 = vld [vmem:[%s6] sm:$0x1]
  %v141 = vlaneseq
  %v142 = vshrl.u32 %v141, 7
  %v143 = vsub.s32 0, %v142
  %v144 = vrot.slane %v139, %v143
  %146 = vmatprep.subr.mxu0 0.0
  %147 = vmatpush1.msra.mxu0 %v137
  %148 = vmatprep.subr.mxu0 0.0
  %149 = vmatpush1.msra.mxu0 %v138
  %150 = vmatprep.subr.mxu0 0.0
  %151 = vmatpush1.msra.mxu0 0.0
  %152 = vmatprep.subr.mxu0 0.0
  %153 = vmatpush1.msra.mxu0 0.0
  %154 = vmatprep.subr.mxu0 0.0
  %155 = vmatpush1.msra.mxu0 0.0
  %156 = vmatprep.subr.mxu0 0.0
  %157 = vmatpush1.msra.mxu0 0.0
  %158 = vmatprep.subr.mxu0 0.0
  %159 = vmatpush1.msra.mxu0 0.0
  %160 = vmatprep.subr.mxu0 0.0
  %161 = vmatpush1.msra.mxu0 0.0
  %162 = vmatprep.subr.mxu0 0.0
  %163 = vmatpush1.msra.mxu0 0.0
  %164 = vmatprep.subr.mxu0 0.0
  %165 = vmatpush1.msra.mxu0 0.0
  %166 = vmatprep.subr.mxu0 0.0
  %167 = vmatpush1.msra.mxu0 0.0
  %168 = vmatprep.subr.mxu0 0.0
  %169 = vmatpush1.msra.mxu0 0.0
  %170 = vmatprep.subr.mxu0 0.0
  %171 = vmatpush1.msra.mxu0 0.0
  %172 = vmatprep.subr.mxu0 0.0
  %173 = vmatpush1.msra.mxu0 0.0
  %174 = vmatprep.subr.mxu0 0.0
  %175 = vmatpush1.msra.mxu0 0.0
  %176 = vmatprep.subr.mxu0 0.0
  %177 = vmatpush1.msra.mxu0 0.0
  %178 = vmatprep.subr.mxu0 0.0
  %179 = vmatpush1.msra.mxu0 0.0
  %180 = vmatprep.subr.mxu0 0.0
  %181 = vmatpush1.msra.mxu0 0.0
  %182 = vmatprep.subr.mxu0 0.0
  %183 = vmatpush1.msra.mxu0 0.0
  %184 = vmatprep.subr.mxu0 0.0
  %185 = vmatpush1.msra.mxu0 0.0
  %186 = vmatprep.subr.mxu0 0.0
  %187 = vmatpush1.msra.mxu0 0.0
  %188 = vmatprep.subr.mxu0 0.0
  %189 = vmatpush1.msra.mxu0 0.0
  %190 = vmatprep.subr.mxu0 0.0
  %191 = vmatpush1.msra.mxu0 0.0
  %192 = vmatprep.subr.mxu0 0.0
  %193 = vmatpush1.msra.mxu0 0.0
  %194 = vmatprep.subr.mxu0 0.0
  %195 = vmatpush1.msra.mxu0 0.0
  %196 = vmatprep.subr.mxu0 0.0
  %197 = vmatpush1.msra.mxu0 0.0
  %198 = vmatprep.subr.mxu0 0.0
  %199 = vmatpush1.msra.mxu0 0.0
  %200 = vmatprep.subr.mxu0 0.0
  %201 = vmatpush1.msra.mxu0 0.0
  %202 = vmatprep.subr.mxu0 0.0
  %203 = vmatpush1.msra.mxu0 0.0
  %204 = vmatprep.subr.mxu0 0.0
  %205 = vmatpush1.msra.mxu0 0.0
  %206 = vmatprep.subr.mxu0 0.0
  %207 = vmatpush1.msra.mxu0 0.0
  %208 = vmatprep.subr.mxu0 0.0
  %209 = vmatpush1.msra.mxu0 0.0
  %210 = vmatprep.mubr.f32.mxu0 0.0
  %211 = vmatmul.mubr.f32.gmra.mrb[0].mxu0 %v65
  %v212 = vpop.f32.mrb[0].mxu0
  %v213 = vadd.f32 %v144, %v212
  %v214 = vpop.f32.mrb[0].mxu0
  %215 = vdwg.mxu0
  %vm216 = vcmask 125952
  %v217 = vsel %vm216, %v50, 0.0
  %v218 = vrot.slane %v217, 4
  %v219 = vadd.f32 %v217, %v218
  %v220 = vrot.slane %v219, 2
  %v221 = vadd.f32 %v219, %v220
  %v222 = vrot.slane %v221, 1
  %v223 = vadd.f32 %v221, %v222
  %v224 = vsel %vm216, %v51, 0.0
  %v225 = vrot.slane %v224, 4
  %v226 = vadd.f32 %v224, %v225
  %v227 = vrot.slane %v226, 2
  %v228 = vadd.f32 %v226, %v227
  %v229 = vrot.slane %v228, 1
  %v230 = vadd.f32 %v228, %v229
  %v231 = vrcp.pop 4.0
  %v232 = vmul.f32 %v223, %v231
  %v233 = vmul.f32 %v230, %v231
  %v234 = vld [vmem:[%s1] sm:$0xff]
  %v235 = vld [vmem:[%s1 + $0x8] sm:$0xff]
  %v236 = vld [vmem:[%s2] sm:$0x1]
  %v238 = vlaneseq
  %v239 = vshrl.u32 %v238, 7
  %v240 = vsub.s32 0, %v239
  %v241 = vrot.slane %v236, %v240
  %vm245 = vcmask 1041409
  %v246 = vsel %vm245, %v233, %v232
  %v247 = vsel %vm64, %v246, 0
  %249 = vmatprep.subr.mxu0 0.0
  %250 = vmatpush1.msra.mxu0 %v234
  %251 = vmatprep.subr.mxu0 0.0
  %252 = vmatpush1.msra.mxu0 %v235
  %253 = vmatprep.subr.mxu0 0.0
  %254 = vmatpush1.msra.mxu0 0.0
  %255 = vmatprep.subr.mxu0 0.0
  %256 = vmatpush1.msra.mxu0 0.0
  %257 = vmatprep.subr.mxu0 0.0
  %258 = vmatpush1.msra.mxu0 0.0
  %259 = vmatprep.subr.mxu0 0.0
  %260 = vmatpush1.msra.mxu0 0.0
  %261 = vmatprep.subr.mxu0 0.0
  %262 = vmatpush1.msra.mxu0 0.0
  %263 = vmatprep.subr.mxu0 0.0
  %264 = vmatpush1.msra.mxu0 0.0
  %265 = vmatprep.subr.mxu0 0.0
  %266 = vmatpush1.msra.mxu0 0.0
  %267 = vmatprep.subr.mxu0 0.0
  %268 = vmatpush1.msra.mxu0 0.0
  %269 = vmatprep.subr.mxu0 0.0
  %270 = vmatpush1.msra.mxu0 0.0
  %271 = vmatprep.subr.mxu0 0.0
  %272 = vmatpush1.msra.mxu0 0.0
  %273 = vmatprep.subr.mxu0 0.0
  %274 = vmatpush1.msra.mxu0 0.0
  %275 = vmatprep.subr.mxu0 0.0
  %276 = vmatpush1.msra.mxu0 0.0
  %277 = vmatprep.subr.mxu0 0.0
  %278 = vmatpush1.msra.mxu0 0.0
  %279 = vmatprep.subr.mxu0 0.0
  %280 = vmatpush1.msra.mxu0 0.0
  %281 = vmatprep.subr.mxu0 0.0
  %282 = vmatpush1.msra.mxu0 0.0
  %283 = vmatprep.subr.mxu0 0.0
  %284 = vmatpush1.msra.mxu0 0.0
  %285 = vmatprep.subr.mxu0 0.0
  %286 = vmatpush1.msra.mxu0 0.0
  %287 = vmatprep.subr.mxu0 0.0
  %288 = vmatpush1.msra.mxu0 0.0
  %289 = vmatprep.subr.mxu0 0.0
  %290 = vmatpush1.msra.mxu0 0.0
  %291 = vmatprep.subr.mxu0 0.0
  %292 = vmatpush1.msra.mxu0 0.0
  %293 = vmatprep.subr.mxu0 0.0
  %294 = vmatpush1.msra.mxu0 0.0
  %295 = vmatprep.subr.mxu0 0.0
  %296 = vmatpush1.msra.mxu0 0.0
  %297 = vmatprep.subr.mxu0 0.0
  %298 = vmatpush1.msra.mxu0 0.0
  %299 = vmatprep.subr.mxu0 0.0
  %300 = vmatpush1.msra.mxu0 0.0
  %301 = vmatprep.subr.mxu0 0.0
  %302 = vmatpush1.msra.mxu0 0.0
  %303 = vmatprep.subr.mxu0 0.0
  %304 = vmatpush1.msra.mxu0 0.0
  %305 = vmatprep.subr.mxu0 0.0
  %306 = vmatpush1.msra.mxu0 0.0
  %307 = vmatprep.subr.mxu0 0.0
  %308 = vmatpush1.msra.mxu0 0.0
  %309 = vmatprep.subr.mxu0 0.0
  %310 = vmatpush1.msra.mxu0 0.0
  %311 = vmatprep.subr.mxu0 0.0
  %312 = vmatpush1.msra.mxu0 0.0
  %313 = vmatprep.mubr.f32.mxu0 0.0
  %314 = vmatmul.mubr.f32.gmra.mrb[0].mxu0 %v247
  %v315 = vpop.f32.mrb[0].mxu0
  %v316 = vadd.f32 %v241, %v315
  %v317 = vpop.f32.mrb[0].mxu0
  %318 = vdwg.mxu0
  %v319 = vld [vmem:[%s7] sm:$0xff]
  %v320 = vld [vmem:[%s7 + $0x8] sm:$0xff]
  %v321 = vld [vmem:[%s7 + $0x10] sm:$0xff]
  %v322 = vld [vmem:[%s7 + $0x18] sm:$0xff]
  %v323 = vld [vmem:[%s8] sm:$0x1]
  %v325 = vlaneseq
  %v326 = vshrl.u32 %v325, 7
  %v327 = vsub.s32 0, %v326
  %v328 = vrot.slane %v323, %v327
  %vm330 = vcmask 261120
  %v332 = vsel %vm330, %v316, 0
  %334 = vmatprep.subr.mxu0 0.0
  %335 = vmatpush1.msra.mxu0 %v319
  %336 = vmatprep.subr.mxu0 0.0
  %337 = vmatpush1.msra.mxu0 %v320
  %338 = vmatprep.subr.mxu0 0.0
  %339 = vmatpush1.msra.mxu0 %v321
  %340 = vmatprep.subr.mxu0 0.0
  %341 = vmatpush1.msra.mxu0 %v322
  %342 = vmatprep.subr.mxu0 0.0
  %343 = vmatpush1.msra.mxu0 0.0
  %344 = vmatprep.subr.mxu0 0.0
  %345 = vmatpush1.msra.mxu0 0.0
  %346 = vmatprep.subr.mxu0 0.0
  %347 = vmatpush1.msra.mxu0 0.0
  %348 = vmatprep.subr.mxu0 0.0
  %349 = vmatpush1.msra.mxu0 0.0
  %350 = vmatprep.subr.mxu0 0.0
  %351 = vmatpush1.msra.mxu0 0.0
  %352 = vmatprep.subr.mxu0 0.0
  %353 = vmatpush1.msra.mxu0 0.0
  %354 = vmatprep.subr.mxu0 0.0
  %355 = vmatpush1.msra.mxu0 0.0
  %356 = vmatprep.subr.mxu0 0.0
  %357 = vmatpush1.msra.mxu0 0.0
  %358 = vmatprep.subr.mxu0 0.0
  %359 = vmatpush1.msra.mxu0 0.0
  %360 = vmatprep.subr.mxu0 0.0
  %361 = vmatpush1.msra.mxu0 0.0
  %362 = vmatprep.subr.mxu0 0.0
  %363 = vmatpush1.msra.mxu0 0.0
  %364 = vmatprep.subr.mxu0 0.0
  %365 = vmatpush1.msra.mxu0 0.0
  %366 = vmatprep.subr.mxu0 0.0
  %367 = vmatpush1.msra.mxu0 0.0
  %368 = vmatprep.subr.mxu0 0.0
  %369 = vmatpush1.msra.mxu0 0.0
  %370 = vmatprep.subr.mxu0 0.0
  %371 = vmatpush1.msra.mxu0 0.0
  %372 = vmatprep.subr.mxu0 0.0
  %373 = vmatpush1.msra.mxu0 0.0
  %374 = vmatprep.subr.mxu0 0.0
  %375 = vmatpush1.msra.mxu0 0.0
  %376 = vmatprep.subr.mxu0 0.0
  %377 = vmatpush1.msra.mxu0 0.0
  %378 = vmatprep.subr.mxu0 0.0
  %379 = vmatpush1.msra.mxu0 0.0
  %380 = vmatprep.subr.mxu0 0.0
  %381 = vmatpush1.msra.mxu0 0.0
  %382 = vmatprep.subr.mxu0 0.0
  %383 = vmatpush1.msra.mxu0 0.0
  %384 = vmatprep.subr.mxu0 0.0
  %385 = vmatpush1.msra.mxu0 0.0
  %386 = vmatprep.subr.mxu0 0.0
  %387 = vmatpush1.msra.mxu0 0.0
  %388 = vmatprep.subr.mxu0 0.0
  %389 = vmatpush1.msra.mxu0 0.0
  %390 = vmatprep.subr.mxu0 0.0
  %391 = vmatpush1.msra.mxu0 0.0
  %392 = vmatprep.subr.mxu0 0.0
  %393 = vmatpush1.msra.mxu0 0.0
  %394 = vmatprep.subr.mxu0 0.0
  %395 = vmatpush1.msra.mxu0 0.0
  %396 = vmatprep.subr.mxu0 0.0
  %397 = vmatpush1.msra.mxu0 0.0
  %398 = vmatprep.mubr.f32.mxu0 0.0
  %399 = vmatmul.mubr.f32.gmra.mrb[0].mxu0 %v332
  %v400 = vpop.f32.mrb[0].mxu0
  %v401 = vadd.f32 %v328, %v400
  %v402 = vpop.f32.mrb[0].mxu0
  %403 = vdwg.mxu0
  %v404 = vmul.f32 %v401, 0.35355338
  %v405 = vld [vmem:[%s9] sm:$0xff]
  %v406 = vld [vmem:[%s9 + $0x8] sm:$0xff]
  %v407 = vld [vmem:[%s9 + $0x10] sm:$0xff]
  %v408 = vld [vmem:[%s9 + $0x18] sm:$0xff]
  %v409 = vld [vmem:[%s10] sm:$0x1]
  %v411 = vlaneseq
  %v412 = vshrl.u32 %v411, 7
  %v413 = vsub.s32 0, %v412
  %v414 = vrot.slane %v409, %v413
  %v417 = vsel %vm330, %v134, 0
  %419 = vmatprep.subr.mxu0 0.0
  %420 = vmatpush1.msra.mxu0 %v405
  %421 = vmatprep.subr.mxu0 0.0
  %422 = vmatpush1.msra.mxu0 %v406
  %423 = vmatprep.subr.mxu0 0.0
  %424 = vmatpush1.msra.mxu0 %v407
  %425 = vmatprep.subr.mxu0 0.0
  %426 = vmatpush1.msra.mxu0 %v408
  %427 = vmatprep.subr.mxu0 0.0
  %428 = vmatpush1.msra.mxu0 0.0
  %429 = vmatprep.subr.mxu0 0.0
  %430 = vmatpush1.msra.mxu0 0.0
  %431 = vmatprep.subr.mxu0 0.0
  %432 = vmatpush1.msra.mxu0 0.0
  %433 = vmatprep.subr.mxu0 0.0
  %434 = vmatpush1.msra.mxu0 0.0
  %435 = vmatprep.subr.mxu0 0.0
  %436 = vmatpush1.msra.mxu0 0.0
  %437 = vmatprep.subr.mxu0 0.0
  %438 = vmatpush1.msra.mxu0 0.0
  %439 = vmatprep.subr.mxu0 0.0
  %440 = vmatpush1.msra.mxu0 0.0
  %441 = vmatprep.subr.mxu0 0.0
  %442 = vmatpush1.msra.mxu0 0.0
  %443 = vmatprep.subr.mxu0 0.0
  %444 = vmatpush1.msra.mxu0 0.0
  %445 = vmatprep.subr.mxu0 0.0
  %446 = vmatpush1.msra.mxu0 0.0
  %447 = vmatprep.subr.mxu0 0.0
  %448 = vmatpush1.msra.mxu0 0.0
  %449 = vmatprep.subr.mxu0 0.0
  %450 = vmatpush1.msra.mxu0 0.0
  %451 = vmatprep.subr.mxu0 0.0
  %452 = vmatpush1.msra.mxu0 0.0
  %453 = vmatprep.subr.mxu0 0.0
  %454 = vmatpush1.msra.mxu0 0.0
  %455 = vmatprep.subr.mxu0 0.0
  %456 = vmatpush1.msra.mxu0 0.0
  %457 = vmatprep.subr.mxu0 0.0
  %458 = vmatpush1.msra.mxu0 0.0
  %459 = vmatprep.subr.mxu0 0.0
  %460 = vmatpush1.msra.mxu0 0.0
  %461 = vmatprep.subr.mxu0 0.0
  %462 = vmatpush1.msra.mxu0 0.0
  %463 = vmatprep.subr.mxu0 0.0
  %464 = vmatpush1.msra.mxu0 0.0
  %465 = vmatprep.subr.mxu0 0.0
  %466 = vmatpush1.msra.mxu0 0.0
  %467 = vmatprep.subr.mxu0 0.0
  %468 = vmatpush1.msra.mxu0 0.0
  %469 = vmatprep.subr.mxu0 0.0
  %470 = vmatpush1.msra.mxu0 0.0
  %471 = vmatprep.subr.mxu0 0.0
  %472 = vmatpush1.msra.mxu0 0.0
  %473 = vmatprep.subr.mxu0 0.0
  %474 = vmatpush1.msra.mxu0 0.0
  %475 = vmatprep.subr.mxu0 0.0
  %476 = vmatpush1.msra.mxu0 0.0
  %477 = vmatprep.subr.mxu0 0.0
  %478 = vmatpush1.msra.mxu0 0.0
  %479 = vmatprep.subr.mxu0 0.0
  %480 = vmatpush1.msra.mxu0 0.0
  %481 = vmatprep.subr.mxu0 0.0
  %482 = vmatpush1.msra.mxu0 0.0
  %483 = vmatprep.mubr.f32.mxu0 0.0
  %484 = vmatmul.mubr.f32.gmra.mrb[0].mxu0 %v417
  %v485 = vpop.f32.mrb[0].mxu0
  %v486 = vadd.f32 %v414, %v485
  %v487 = vpop.f32.mrb[0].mxu0
  %488 = vdwg.mxu0
  %v489 = vld [vmem:[%s11] sm:$0xff]
  %v490 = vld [vmem:[%s11 + $0x8] sm:$0xff]
  %v491 = vld [vmem:[%s11 + $0x10] sm:$0xff]
  %v492 = vld [vmem:[%s11 + $0x18] sm:$0xff]
  %v493 = vld [vmem:[%s12] sm:$0x1]
  %v495 = vlaneseq
  %v496 = vshrl.u32 %v495, 7
  %v497 = vsub.s32 0, %v496
  %v498 = vrot.slane %v493, %v497
  %v501 = vsel %vm330, %v213, 0
  %503 = vmatprep.subr.mxu0 0.0
  %504 = vmatpush1.msra.mxu0 %v489
  %505 = vmatprep.subr.mxu0 0.0
  %506 = vmatpush1.msra.mxu0 %v490
  %507 = vmatprep.subr.mxu0 0.0
  %508 = vmatpush1.msra.mxu0 %v491
  %509 = vmatprep.subr.mxu0 0.0
  %510 = vmatpush1.msra.mxu0 %v492
  %511 = vmatprep.subr.mxu0 0.0
  %512 = vmatpush1.msra.mxu0 0.0
  %513 = vmatprep.subr.mxu0 0.0
  %514 = vmatpush1.msra.mxu0 0.0
  %515 = vmatprep.subr.mxu0 0.0
  %516 = vmatpush1.msra.mxu0 0.0
  %517 = vmatprep.subr.mxu0 0.0
  %518 = vmatpush1.msra.mxu0 0.0
  %519 = vmatprep.subr.mxu0 0.0
  %520 = vmatpush1.msra.mxu0 0.0
  %521 = vmatprep.subr.mxu0 0.0
  %522 = vmatpush1.msra.mxu0 0.0
  %523 = vmatprep.subr.mxu0 0.0
  %524 = vmatpush1.msra.mxu0 0.0
  %525 = vmatprep.subr.mxu0 0.0
  %526 = vmatpush1.msra.mxu0 0.0
  %527 = vmatprep.subr.mxu0 0.0
  %528 = vmatpush1.msra.mxu0 0.0
  %529 = vmatprep.subr.mxu0 0.0
  %530 = vmatpush1.msra.mxu0 0.0
  %531 = vmatprep.subr.mxu0 0.0
  %532 = vmatpush1.msra.mxu0 0.0
  %533 = vmatprep.subr.mxu0 0.0
  %534 = vmatpush1.msra.mxu0 0.0
  %535 = vmatprep.subr.mxu0 0.0
  %536 = vmatpush1.msra.mxu0 0.0
  %537 = vmatprep.subr.mxu0 0.0
  %538 = vmatpush1.msra.mxu0 0.0
  %539 = vmatprep.subr.mxu0 0.0
  %540 = vmatpush1.msra.mxu0 0.0
  %541 = vmatprep.subr.mxu0 0.0
  %542 = vmatpush1.msra.mxu0 0.0
  %543 = vmatprep.subr.mxu0 0.0
  %544 = vmatpush1.msra.mxu0 0.0
  %545 = vmatprep.subr.mxu0 0.0
  %546 = vmatpush1.msra.mxu0 0.0
  %547 = vmatprep.subr.mxu0 0.0
  %548 = vmatpush1.msra.mxu0 0.0
  %549 = vmatprep.subr.mxu0 0.0
  %550 = vmatpush1.msra.mxu0 0.0
  %551 = vmatprep.subr.mxu0 0.0
  %552 = vmatpush1.msra.mxu0 0.0
  %553 = vmatprep.subr.mxu0 0.0
  %554 = vmatpush1.msra.mxu0 0.0
  %555 = vmatprep.subr.mxu0 0.0
  %556 = vmatpush1.msra.mxu0 0.0
  %557 = vmatprep.subr.mxu0 0.0
  %558 = vmatpush1.msra.mxu0 0.0
  %559 = vmatprep.subr.mxu0 0.0
  %560 = vmatpush1.msra.mxu0 0.0
  %561 = vmatprep.subr.mxu0 0.0
  %562 = vmatpush1.msra.mxu0 0.0
  %563 = vmatprep.subr.mxu0 0.0
  %564 = vmatpush1.msra.mxu0 0.0
  %565 = vmatprep.subr.mxu0 0.0
  %566 = vmatpush1.msra.mxu0 0.0
  %567 = vmatprep.mubr.f32.mxu0 0.0
  %568 = vmatmul.mubr.f32.gmra.mrb[0].mxu0 %v501
  %v569 = vpop.f32.mrb[0].mxu0
  %v570 = vadd.f32 %v498, %v569
  %v571 = vpop.f32.mrb[0].mxu0
  %572 = vdwg.mxu0
  %v575 = vunpack.c.l.s4 1966171168
  %v576 = vunpack.c.0.s8 %v575
  %v577 = vlaneseq
  %v578 = vshrl.u32 %v577, 7
  %v579 = vsub.s32 %v576, %v578
  %v580 = vrot.slane %v404, %v579
  %v581 = vcombine.high %v580, %v580
  %v583 = vunpack.c.l.s4 1966171168
  %v584 = vunpack.c.0.s8 %v583
  %v585 = vlaneseq
  %v586 = vshrl.u32 %v585, 7
  %v587 = vsub.s32 %v584, %v586
  %v588 = vrot.slane %v580, %v587
  %v590 = vunpack.c.l.s4 1966171168
  %v591 = vunpack.c.0.s8 %v590
  %v592 = vlaneseq
  %v593 = vshrl.u32 %v592, 7
  %v594 = vsub.s32 %v591, %v593
  %v595 = vrot.slane %v581, %v594
  %v597 = vcombine.high %v486, %v486
  %v599 = vcombine.high %v570, %v570
  %vm600 = vcmask 64512
  %v601 = vsel %vm600, %v588, 0
  %v603 = vsel %vm600, %v486, 0
  %605 = vmatprep.subr.mxu0 0.0
  %606 = vmatpush1.xpose.msra.mxu0 %v603
  %607 = vmatprep.subr.mxu0 0.0
  %608 = vmatpush1.xpose.msra.mxu0 0.0
  %609 = vmatprep.subr.mxu0 0.0
  %610 = vmatpush1.xpose.msra.mxu0 0.0
  %611 = vmatprep.subr.mxu0 0.0
  %612 = vmatpush1.xpose.msra.mxu0 0.0
  %613 = vmatprep.subr.mxu0 0.0
  %614 = vmatpush1.xpose.msra.mxu0 0.0
  %615 = vmatprep.subr.mxu0 0.0
  %616 = vmatpush1.xpose.msra.mxu0 0.0
  %617 = vmatprep.subr.mxu0 0.0
  %618 = vmatpush1.xpose.msra.mxu0 0.0
  %619 = vmatprep.subr.mxu0 0.0
  %620 = vmatpush1.xpose.msra.mxu0 0.0
  %621 = vmatprep.subr.mxu0 0.0
  %622 = vmatpush1.xpose.msra.mxu0 0.0
  %623 = vmatprep.subr.mxu0 0.0
  %624 = vmatpush1.xpose.msra.mxu0 0.0
  %625 = vmatprep.subr.mxu0 0.0
  %626 = vmatpush1.xpose.msra.mxu0 0.0
  %627 = vmatprep.subr.mxu0 0.0
  %628 = vmatpush1.xpose.msra.mxu0 0.0
  %629 = vmatprep.subr.mxu0 0.0
  %630 = vmatpush1.xpose.msra.mxu0 0.0
  %631 = vmatprep.subr.mxu0 0.0
  %632 = vmatpush1.xpose.msra.mxu0 0.0
  %633 = vmatprep.subr.mxu0 0.0
  %634 = vmatpush1.xpose.msra.mxu0 0.0
  %635 = vmatprep.subr.mxu0 0.0
  %636 = vmatpush1.xpose.msra.mxu0 0.0
  %637 = vmatprep.subr.mxu0 0.0
  %638 = vmatpush1.xpose.msra.mxu0 0.0
  %639 = vmatprep.subr.mxu0 0.0
  %640 = vmatpush1.xpose.msra.mxu0 0.0
  %641 = vmatprep.subr.mxu0 0.0
  %642 = vmatpush1.xpose.msra.mxu0 0.0
  %643 = vmatprep.subr.mxu0 0.0
  %644 = vmatpush1.xpose.msra.mxu0 0.0
  %645 = vmatprep.subr.mxu0 0.0
  %646 = vmatpush1.xpose.msra.mxu0 0.0
  %647 = vmatprep.subr.mxu0 0.0
  %648 = vmatpush1.xpose.msra.mxu0 0.0
  %649 = vmatprep.subr.mxu0 0.0
  %650 = vmatpush1.xpose.msra.mxu0 0.0
  %651 = vmatprep.subr.mxu0 0.0
  %652 = vmatpush1.xpose.msra.mxu0 0.0
  %653 = vmatprep.subr.mxu0 0.0
  %654 = vmatpush1.xpose.msra.mxu0 0.0
  %655 = vmatprep.subr.mxu0 0.0
  %656 = vmatpush1.xpose.msra.mxu0 0.0
  %657 = vmatprep.subr.mxu0 0.0
  %658 = vmatpush1.xpose.msra.mxu0 0.0
  %659 = vmatprep.subr.mxu0 0.0
  %660 = vmatpush1.xpose.msra.mxu0 0.0
  %661 = vmatprep.subr.mxu0 0.0
  %662 = vmatpush1.xpose.msra.mxu0 0.0
  %663 = vmatprep.subr.mxu0 0.0
  %664 = vmatpush1.xpose.msra.mxu0 0.0
  %665 = vmatprep.subr.mxu0 0.0
  %666 = vmatpush1.xpose.msra.mxu0 0.0
  %667 = vmatprep.subr.mxu0 0.0
  %668 = vmatpush1.xpose.msra.mxu0 0.0
  %669 = vmatprep.mubr.f32.mxu0 0.0
  %670 = vmatmul.mubr.f32.gmra.mrb[0].mxu0 %v601
  %v671 = vpop.f32.mrb[0].mxu0
  %v672 = vadd.f32 0.0, %v671
  %v673 = vpop.f32.mrb[0].mxu0
  %674 = vdwg.mxu0
  %v675 = vsel %vm600, %v595, 0
  %v677 = vsel %vm600, %v597, 0
  %679 = vmatprep.subr.mxu0 0.0
  %680 = vmatpush1.xpose.msra.mxu0 %v677
  %681 = vmatprep.subr.mxu0 0.0
  %682 = vmatpush1.xpose.msra.mxu0 0.0
  %683 = vmatprep.subr.mxu0 0.0
  %684 = vmatpush1.xpose.msra.mxu0 0.0
  %685 = vmatprep.subr.mxu0 0.0
  %686 = vmatpush1.xpose.msra.mxu0 0.0
  %687 = vmatprep.subr.mxu0 0.0
  %688 = vmatpush1.xpose.msra.mxu0 0.0
  %689 = vmatprep.subr.mxu0 0.0
  %690 = vmatpush1.xpose.msra.mxu0 0.0
  %691 = vmatprep.subr.mxu0 0.0
  %692 = vmatpush1.xpose.msra.mxu0 0.0
  %693 = vmatprep.subr.mxu0 0.0
  %694 = vmatpush1.xpose.msra.mxu0 0.0
  %695 = vmatprep.subr.mxu0 0.0
  %696 = vmatpush1.xpose.msra.mxu0 0.0
  %697 = vmatprep.subr.mxu0 0.0
  %698 = vmatpush1.xpose.msra.mxu0 0.0
  %699 = vmatprep.subr.mxu0 0.0
  %700 = vmatpush1.xpose.msra.mxu0 0.0
  %701 = vmatprep.subr.mxu0 0.0
  %702 = vmatpush1.xpose.msra.mxu0 0.0
  %703 = vmatprep.subr.mxu0 0.0
  %704 = vmatpush1.xpose.msra.mxu0 0.0
  %705 = vmatprep.subr.mxu0 0.0
  %706 = vmatpush1.xpose.msra.mxu0 0.0
  %707 = vmatprep.subr.mxu0 0.0
  %708 = vmatpush1.xpose.msra.mxu0 0.0
  %709 = vmatprep.subr.mxu0 0.0
  %710 = vmatpush1.xpose.msra.mxu0 0.0
  %711 = vmatprep.subr.mxu0 0.0
  %712 = vmatpush1.xpose.msra.mxu0 0.0
  %713 = vmatprep.subr.mxu0 0.0
  %714 = vmatpush1.xpose.msra.mxu0 0.0
  %715 = vmatprep.subr.mxu0 0.0
  %716 = vmatpush1.xpose.msra.mxu0 0.0
  %717 = vmatprep.subr.mxu0 0.0
  %718 = vmatpush1.xpose.msra.mxu0 0.0
  %719 = vmatprep.subr.mxu0 0.0
  %720 = vmatpush1.xpose.msra.mxu0 0.0
  %721 = vmatprep.subr.mxu0 0.0
  %722 = vmatpush1.xpose.msra.mxu0 0.0
  %723 = vmatprep.subr.mxu0 0.0
  %724 = vmatpush1.xpose.msra.mxu0 0.0
  %725 = vmatprep.subr.mxu0 0.0
  %726 = vmatpush1.xpose.msra.mxu0 0.0
  %727 = vmatprep.subr.mxu0 0.0
  %728 = vmatpush1.xpose.msra.mxu0 0.0
  %729 = vmatprep.subr.mxu0 0.0
  %730 = vmatpush1.xpose.msra.mxu0 0.0
  %731 = vmatprep.subr.mxu0 0.0
  %732 = vmatpush1.xpose.msra.mxu0 0.0
  %733 = vmatprep.subr.mxu0 0.0
  %734 = vmatpush1.xpose.msra.mxu0 0.0
  %735 = vmatprep.subr.mxu0 0.0
  %736 = vmatpush1.xpose.msra.mxu0 0.0
  %737 = vmatprep.subr.mxu0 0.0
  %738 = vmatpush1.xpose.msra.mxu0 0.0
  %739 = vmatprep.subr.mxu0 0.0
  %740 = vmatpush1.xpose.msra.mxu0 0.0
  %741 = vmatprep.subr.mxu0 0.0
  %742 = vmatpush1.xpose.msra.mxu0 0.0
  %743 = vmatprep.mubr.f32.mxu0 0.0
  %744 = vmatmul.mubr.f32.gmra.mrb[0].mxu0 %v675
  %v745 = vpop.f32.mrb[0].mxu0
  %v746 = vadd.f32 0.0, %v745
  %v747 = vpop.f32.mrb[0].mxu0
  %748 = vdwg.mxu0
  %vm749 = vcmask 24576
  %v750 = vsel %vm749, %v672, -inf
  %751 = vmax.xlane.f32.xlu0 %v750
  %v752 = vpop.xlane.xlu0 %751
  %v753 = vsel %vm749, %v746, -inf
  %754 = vmax.xlane.f32.xlu0 %v753
  %v755 = vpop.xlane.xlu0 %754
  %v756 = vsub.f32 %v672, %v752
  %v757 = vsub.f32 %v746, %v755
  %v758 = vmul.f32 %v756, 1.442695
  %v759 = vpow.pop %v758
  %v760 = vmul.f32 %v757, 1.442695
  %v761 = vpow.pop %v760
  %v762 = vsel %vm749, %v759, 0.0
  %763 = vadd.xlane.f32.xlu0 %v762
  %v764 = vpop.xlane.xlu0 %763
  %v765 = vsel %vm749, %v761, 0.0
  %766 = vadd.xlane.f32.xlu0 %v765
  %v767 = vpop.xlane.xlu0 %766
  %v768 = vrcp.pop %v764
  %v769 = vrcp.pop %v767
  %v770 = vmul.f32 %v759, %v768
  %v771 = vmul.f32 %v761, %v769
  %v772 = vadd.f32 %v770, 0.0
  %v773 = vadd.f32 %v771, 0.0
  %vm774 = vcmask 31744
  %v776 = vsel %vm774, %v770, 0
  %vm778 = vcmask 1043456
  %v779 = vsel %vm778, %v570, 0
  %781 = vmatprep.subr.mxu0 0.0
  %782 = vmatpush1.msra.mxu0 %v779
  %783 = vmatprep.subr.mxu0 0.0
  %784 = vmatpush1.msra.mxu0 0.0
  %785 = vmatprep.subr.mxu0 0.0
  %786 = vmatpush1.msra.mxu0 0.0
  %787 = vmatprep.subr.mxu0 0.0
  %788 = vmatpush1.msra.mxu0 0.0
  %789 = vmatprep.subr.mxu0 0.0
  %790 = vmatpush1.msra.mxu0 0.0
  %791 = vmatprep.subr.mxu0 0.0
  %792 = vmatpush1.msra.mxu0 0.0
  %793 = vmatprep.subr.mxu0 0.0
  %794 = vmatpush1.msra.mxu0 0.0
  %795 = vmatprep.subr.mxu0 0.0
  %796 = vmatpush1.msra.mxu0 0.0
  %797 = vmatprep.subr.mxu0 0.0
  %798 = vmatpush1.msra.mxu0 0.0
  %799 = vmatprep.subr.mxu0 0.0
  %800 = vmatpush1.msra.mxu0 0.0
  %801 = vmatprep.subr.mxu0 0.0
  %802 = vmatpush1.msra.mxu0 0.0
  %803 = vmatprep.subr.mxu0 0.0
  %804 = vmatpush1.msra.mxu0 0.0
  %805 = vmatprep.subr.mxu0 0.0
  %806 = vmatpush1.msra.mxu0 0.0
  %807 = vmatprep.subr.mxu0 0.0
  %808 = vmatpush1.msra.mxu0 0.0
  %809 = vmatprep.subr.mxu0 0.0
  %810 = vmatpush1.msra.mxu0 0.0
  %811 = vmatprep.subr.mxu0 0.0
  %812 = vmatpush1.msra.mxu0 0.0
  %813 = vmatprep.subr.mxu0 0.0
  %814 = vmatpush1.msra.mxu0 0.0
  %815 = vmatprep.subr.mxu0 0.0
  %816 = vmatpush1.msra.mxu0 0.0
  %817 = vmatprep.subr.mxu0 0.0
  %818 = vmatpush1.msra.mxu0 0.0
  %819 = vmatprep.subr.mxu0 0.0
  %820 = vmatpush1.msra.mxu0 0.0
  %821 = vmatprep.subr.mxu0 0.0
  %822 = vmatpush1.msra.mxu0 0.0
  %823 = vmatprep.subr.mxu0 0.0
  %824 = vmatpush1.msra.mxu0 0.0
  %825 = vmatprep.subr.mxu0 0.0
  %826 = vmatpush1.msra.mxu0 0.0
  %827 = vmatprep.subr.mxu0 0.0
  %828 = vmatpush1.msra.mxu0 0.0
  %829 = vmatprep.subr.mxu0 0.0
  %830 = vmatpush1.msra.mxu0 0.0
  %831 = vmatprep.subr.mxu0 0.0
  %832 = vmatpush1.msra.mxu0 0.0
  %833 = vmatprep.subr.mxu0 0.0
  %834 = vmatpush1.msra.mxu0 0.0
  %835 = vmatprep.subr.mxu0 0.0
  %836 = vmatpush1.msra.mxu0 0.0
  %837 = vmatprep.subr.mxu0 0.0
  %838 = vmatpush1.msra.mxu0 0.0
  %839 = vmatprep.subr.mxu0 0.0
  %840 = vmatpush1.msra.mxu0 0.0
  %841 = vmatprep.subr.mxu0 0.0
  %842 = vmatpush1.msra.mxu0 0.0
  %843 = vmatprep.subr.mxu0 0.0
  %844 = vmatpush1.msra.mxu0 0.0
  %845 = vmatprep.mubr.f32.mxu0 0.0
  %846 = vmatmul.mubr.f32.gmra.mrb[0].mxu0 %v776
  %v847 = vpop.f32.mrb[0].mxu0
  %v848 = vadd.f32 0.0, %v847
  %v849 = vpop.f32.mrb[0].mxu0
  %850 = vdwg.mxu0
  %v852 = vsel %vm774, %v771, 0
  %v854 = vsel %vm778, %v599, 0
  %856 = vmatprep.subr.mxu0 0.0
  %857 = vmatpush1.msra.mxu0 %v854
  %858 = vmatprep.subr.mxu0 0.0
  %859 = vmatpush1.msra.mxu0 0.0
  %860 = vmatprep.subr.mxu0 0.0
  %861 = vmatpush1.msra.mxu0 0.0
  %862 = vmatprep.subr.mxu0 0.0
  %863 = vmatpush1.msra.mxu0 0.0
  %864 = vmatprep.subr.mxu0 0.0
  %865 = vmatpush1.msra.mxu0 0.0
  %866 = vmatprep.subr.mxu0 0.0
  %867 = vmatpush1.msra.mxu0 0.0
  %868 = vmatprep.subr.mxu0 0.0
  %869 = vmatpush1.msra.mxu0 0.0
  %870 = vmatprep.subr.mxu0 0.0
  %871 = vmatpush1.msra.mxu0 0.0
  %872 = vmatprep.subr.mxu0 0.0
  %873 = vmatpush1.msra.mxu0 0.0
  %874 = vmatprep.subr.mxu0 0.0
  %875 = vmatpush1.msra.mxu0 0.0
  %876 = vmatprep.subr.mxu0 0.0
  %877 = vmatpush1.msra.mxu0 0.0
  %878 = vmatprep.subr.mxu0 0.0
  %879 = vmatpush1.msra.mxu0 0.0
  %880 = vmatprep.subr.mxu0 0.0
  %881 = vmatpush1.msra.mxu0 0.0
  %882 = vmatprep.subr.mxu0 0.0
  %883 = vmatpush1.msra.mxu0 0.0
  %884 = vmatprep.subr.mxu0 0.0
  %885 = vmatpush1.msra.mxu0 0.0
  %886 = vmatprep.subr.mxu0 0.0
  %887 = vmatpush1.msra.mxu0 0.0
  %888 = vmatprep.subr.mxu0 0.0
  %889 = vmatpush1.msra.mxu0 0.0
  %890 = vmatprep.subr.mxu0 0.0
  %891 = vmatpush1.msra.mxu0 0.0
  %892 = vmatprep.subr.mxu0 0.0
  %893 = vmatpush1.msra.mxu0 0.0
  %894 = vmatprep.subr.mxu0 0.0
  %895 = vmatpush1.msra.mxu0 0.0
  %896 = vmatprep.subr.mxu0 0.0
  %897 = vmatpush1.msra.mxu0 0.0
  %898 = vmatprep.subr.mxu0 0.0
  %899 = vmatpush1.msra.mxu0 0.0
  %900 = vmatprep.subr.mxu0 0.0
  %901 = vmatpush1.msra.mxu0 0.0
  %902 = vmatprep.subr.mxu0 0.0
  %903 = vmatpush1.msra.mxu0 0.0
  %904 = vmatprep.subr.mxu0 0.0
  %905 = vmatpush1.msra.mxu0 0.0
  %906 = vmatprep.subr.mxu0 0.0
  %907 = vmatpush1.msra.mxu0 0.0
  %908 = vmatprep.subr.mxu0 0.0
  %909 = vmatpush1.msra.mxu0 0.0
  %910 = vmatprep.subr.mxu0 0.0
  %911 = vmatpush1.msra.mxu0 0.0
  %912 = vmatprep.subr.mxu0 0.0
  %913 = vmatpush1.msra.mxu0 0.0
  %914 = vmatprep.subr.mxu0 0.0
  %915 = vmatpush1.msra.mxu0 0.0
  %916 = vmatprep.subr.mxu0 0.0
  %917 = vmatpush1.msra.mxu0 0.0
  %918 = vmatprep.subr.mxu0 0.0
  %919 = vmatpush1.msra.mxu0 0.0
  %920 = vmatprep.mubr.f32.mxu0 0.0
  %921 = vmatmul.mubr.f32.gmra.mrb[0].mxu0 %v852
  %v922 = vpop.f32.mrb[0].mxu0
  %v923 = vadd.f32 0.0, %v922
  %v924 = vpop.f32.mrb[0].mxu0
  %925 = vdwg.mxu0
  %v926 = vld [vmem:[%s13] sm:$0xff]
  %s927 = scalar_lea.vmem %s7, 32
  %v928 = vld [vmem:[%s927] sm:$0xff]
  %v929 = vld [vmem:[%s927 + $0x8] sm:$0xff]
  %v930 = vld [vmem:[%s927 + $0x10] sm:$0xff]
  %v931 = vld [vmem:[%s927 + $0x18] sm:$0xff]
  %s932 = scalar_lea.vmem %s8, 1
  %v933 = vld [vmem:[%s932] sm:$0x1]
  %v935 = vlaneseq
  %v936 = vshrl.u32 %v935, 7
  %v937 = vsub.s32 0, %v936
  %v938 = vrot.slane %v933, %v937
  %940 = vmatprep.subr.mxu0 0.0
  %941 = vmatpush1.msra.mxu0 %v928
  %942 = vmatprep.subr.mxu0 0.0
  %943 = vmatpush1.msra.mxu0 %v929
  %944 = vmatprep.subr.mxu0 0.0
  %945 = vmatpush1.msra.mxu0 %v930
  %946 = vmatprep.subr.mxu0 0.0
  %947 = vmatpush1.msra.mxu0 %v931
  %948 = vmatprep.subr.mxu0 0.0
  %949 = vmatpush1.msra.mxu0 0.0
  %950 = vmatprep.subr.mxu0 0.0
  %951 = vmatpush1.msra.mxu0 0.0
  %952 = vmatprep.subr.mxu0 0.0
  %953 = vmatpush1.msra.mxu0 0.0
  %954 = vmatprep.subr.mxu0 0.0
  %955 = vmatpush1.msra.mxu0 0.0
  %956 = vmatprep.subr.mxu0 0.0
  %957 = vmatpush1.msra.mxu0 0.0
  %958 = vmatprep.subr.mxu0 0.0
  %959 = vmatpush1.msra.mxu0 0.0
  %960 = vmatprep.subr.mxu0 0.0
  %961 = vmatpush1.msra.mxu0 0.0
  %962 = vmatprep.subr.mxu0 0.0
  %963 = vmatpush1.msra.mxu0 0.0
  %964 = vmatprep.subr.mxu0 0.0
  %965 = vmatpush1.msra.mxu0 0.0
  %966 = vmatprep.subr.mxu0 0.0
  %967 = vmatpush1.msra.mxu0 0.0
  %968 = vmatprep.subr.mxu0 0.0
  %969 = vmatpush1.msra.mxu0 0.0
  %970 = vmatprep.subr.mxu0 0.0
  %971 = vmatpush1.msra.mxu0 0.0
  %972 = vmatprep.subr.mxu0 0.0
  %973 = vmatpush1.msra.mxu0 0.0
  %974 = vmatprep.subr.mxu0 0.0
  %975 = vmatpush1.msra.mxu0 0.0
  %976 = vmatprep.subr.mxu0 0.0
  %977 = vmatpush1.msra.mxu0 0.0
  %978 = vmatprep.subr.mxu0 0.0
  %979 = vmatpush1.msra.mxu0 0.0
  %980 = vmatprep.subr.mxu0 0.0
  %981 = vmatpush1.msra.mxu0 0.0
  %982 = vmatprep.subr.mxu0 0.0
  %983 = vmatpush1.msra.mxu0 0.0
  %984 = vmatprep.subr.mxu0 0.0
  %985 = vmatpush1.msra.mxu0 0.0
  %986 = vmatprep.subr.mxu0 0.0
  %987 = vmatpush1.msra.mxu0 0.0
  %988 = vmatprep.subr.mxu0 0.0
  %989 = vmatpush1.msra.mxu0 0.0
  %990 = vmatprep.subr.mxu0 0.0
  %991 = vmatpush1.msra.mxu0 0.0
  %992 = vmatprep.subr.mxu0 0.0
  %993 = vmatpush1.msra.mxu0 0.0
  %994 = vmatprep.subr.mxu0 0.0
  %995 = vmatpush1.msra.mxu0 0.0
  %996 = vmatprep.subr.mxu0 0.0
  %997 = vmatpush1.msra.mxu0 0.0
  %998 = vmatprep.subr.mxu0 0.0
  %999 = vmatpush1.msra.mxu0 0.0
  %1000 = vmatprep.subr.mxu0 0.0
  %1001 = vmatpush1.msra.mxu0 0.0
  %1002 = vmatprep.subr.mxu0 0.0
  %1003 = vmatpush1.msra.mxu0 0.0
  %1004 = vmatprep.mubr.f32.mxu0 0.0
  %1005 = vmatmul.mubr.f32.gmra.mrb[0].mxu0 %v332
  %v1006 = vpop.f32.mrb[0].mxu0
  %v1007 = vadd.f32 %v938, %v1006
  %v1008 = vpop.f32.mrb[0].mxu0
  %1009 = vdwg.mxu0
  %v1010 = vmul.f32 %v1007, 0.35355338
  %s1011 = scalar_lea.vmem %s9, 32
  %v1012 = vld [vmem:[%s1011] sm:$0xff]
  %v1013 = vld [vmem:[%s1011 + $0x8] sm:$0xff]
  %v1014 = vld [vmem:[%s1011 + $0x10] sm:$0xff]
  %v1015 = vld [vmem:[%s1011 + $0x18] sm:$0xff]
  %s1016 = scalar_lea.vmem %s10, 1
  %v1017 = vld [vmem:[%s1016] sm:$0x1]
  %v1019 = vlaneseq
  %v1020 = vshrl.u32 %v1019, 7
  %v1021 = vsub.s32 0, %v1020
  %v1022 = vrot.slane %v1017, %v1021
  %1024 = vmatprep.subr.mxu0 0.0
  %1025 = vmatpush1.msra.mxu0 %v1012
  %1026 = vmatprep.subr.mxu0 0.0
  %1027 = vmatpush1.msra.mxu0 %v1013
  %1028 = vmatprep.subr.mxu0 0.0
  %1029 = vmatpush1.msra.mxu0 %v1014
  %1030 = vmatprep.subr.mxu0 0.0
  %1031 = vmatpush1.msra.mxu0 %v1015
  %1032 = vmatprep.subr.mxu0 0.0
  %1033 = vmatpush1.msra.mxu0 0.0
  %1034 = vmatprep.subr.mxu0 0.0
  %1035 = vmatpush1.msra.mxu0 0.0
  %1036 = vmatprep.subr.mxu0 0.0
  %1037 = vmatpush1.msra.mxu0 0.0
  %1038 = vmatprep.subr.mxu0 0.0
  %1039 = vmatpush1.msra.mxu0 0.0
  %1040 = vmatprep.subr.mxu0 0.0
  %1041 = vmatpush1.msra.mxu0 0.0
  %1042 = vmatprep.subr.mxu0 0.0
  %1043 = vmatpush1.msra.mxu0 0.0
  %1044 = vmatprep.subr.mxu0 0.0
  %1045 = vmatpush1.msra.mxu0 0.0
  %1046 = vmatprep.subr.mxu0 0.0
  %1047 = vmatpush1.msra.mxu0 0.0
  %1048 = vmatprep.subr.mxu0 0.0
  %1049 = vmatpush1.msra.mxu0 0.0
  %1050 = vmatprep.subr.mxu0 0.0
  %1051 = vmatpush1.msra.mxu0 0.0
  %1052 = vmatprep.subr.mxu0 0.0
  %1053 = vmatpush1.msra.mxu0 0.0
  %1054 = vmatprep.subr.mxu0 0.0
  %1055 = vmatpush1.msra.mxu0 0.0
  %1056 = vmatprep.subr.mxu0 0.0
  %1057 = vmatpush1.msra.mxu0 0.0
  %1058 = vmatprep.subr.mxu0 0.0
  %1059 = vmatpush1.msra.mxu0 0.0
  %1060 = vmatprep.subr.mxu0 0.0
  %1061 = vmatpush1.msra.mxu0 0.0
  %1062 = vmatprep.subr.mxu0 0.0
  %1063 = vmatpush1.msra.mxu0 0.0
  %1064 = vmatprep.subr.mxu0 0.0
  %1065 = vmatpush1.msra.mxu0 0.0
  %1066 = vmatprep.subr.mxu0 0.0
  %1067 = vmatpush1.msra.mxu0 0.0
  %1068 = vmatprep.subr.mxu0 0.0
  %1069 = vmatpush1.msra.mxu0 0.0
  %1070 = vmatprep.subr.mxu0 0.0
  %1071 = vmatpush1.msra.mxu0 0.0
  %1072 = vmatprep.subr.mxu0 0.0
  %1073 = vmatpush1.msra.mxu0 0.0
  %1074 = vmatprep.subr.mxu0 0.0
  %1075 = vmatpush1.msra.mxu0 0.0
  %1076 = vmatprep.subr.mxu0 0.0
  %1077 = vmatpush1.msra.mxu0 0.0
  %1078 = vmatprep.subr.mxu0 0.0
  %1079 = vmatpush1.msra.mxu0 0.0
  %1080 = vmatprep.subr.mxu0 0.0
  %1081 = vmatpush1.msra.mxu0 0.0
  %1082 = vmatprep.subr.mxu0 0.0
  %1083 = vmatpush1.msra.mxu0 0.0
  %1084 = vmatprep.subr.mxu0 0.0
  %1085 = vmatpush1.msra.mxu0 0.0
  %1086 = vmatprep.subr.mxu0 0.0
  %1087 = vmatpush1.msra.mxu0 0.0
  %1088 = vmatprep.mubr.f32.mxu0 0.0
  %1089 = vmatmul.mubr.f32.gmra.mrb[0].mxu0 %v417
  %v1090 = vpop.f32.mrb[0].mxu0
  %v1091 = vadd.f32 %v1022, %v1090
  %v1092 = vpop.f32.mrb[0].mxu0
  %1093 = vdwg.mxu0
  %s1094 = scalar_lea.vmem %s11, 32
  %v1095 = vld [vmem:[%s1094] sm:$0xff]
  %v1096 = vld [vmem:[%s1094 + $0x8] sm:$0xff]
  %v1097 = vld [vmem:[%s1094 + $0x10] sm:$0xff]
  %v1098 = vld [vmem:[%s1094 + $0x18] sm:$0xff]
  %s1099 = scalar_lea.vmem %s12, 1
  %v1100 = vld [vmem:[%s1099] sm:$0x1]
  %v1102 = vlaneseq
  %v1103 = vshrl.u32 %v1102, 7
  %v1104 = vsub.s32 0, %v1103
  %v1105 = vrot.slane %v1100, %v1104
  %1107 = vmatprep.subr.mxu0 0.0
  %1108 = vmatpush1.msra.mxu0 %v1095
  %1109 = vmatprep.subr.mxu0 0.0
  %1110 = vmatpush1.msra.mxu0 %v1096
  %1111 = vmatprep.subr.mxu0 0.0
  %1112 = vmatpush1.msra.mxu0 %v1097
  %1113 = vmatprep.subr.mxu0 0.0
  %1114 = vmatpush1.msra.mxu0 %v1098
  %1115 = vmatprep.subr.mxu0 0.0
  %1116 = vmatpush1.msra.mxu0 0.0
  %1117 = vmatprep.subr.mxu0 0.0
  %1118 = vmatpush1.msra.mxu0 0.0
  %1119 = vmatprep.subr.mxu0 0.0
  %1120 = vmatpush1.msra.mxu0 0.0
  %1121 = vmatprep.subr.mxu0 0.0
  %1122 = vmatpush1.msra.mxu0 0.0
  %1123 = vmatprep.subr.mxu0 0.0
  %1124 = vmatpush1.msra.mxu0 0.0
  %1125 = vmatprep.subr.mxu0 0.0
  %1126 = vmatpush1.msra.mxu0 0.0
  %1127 = vmatprep.subr.mxu0 0.0
  %1128 = vmatpush1.msra.mxu0 0.0
  %1129 = vmatprep.subr.mxu0 0.0
  %1130 = vmatpush1.msra.mxu0 0.0
  %1131 = vmatprep.subr.mxu0 0.0
  %1132 = vmatpush1.msra.mxu0 0.0
  %1133 = vmatprep.subr.mxu0 0.0
  %1134 = vmatpush1.msra.mxu0 0.0
  %1135 = vmatprep.subr.mxu0 0.0
  %1136 = vmatpush1.msra.mxu0 0.0
  %1137 = vmatprep.subr.mxu0 0.0
  %1138 = vmatpush1.msra.mxu0 0.0
  %1139 = vmatprep.subr.mxu0 0.0
  %1140 = vmatpush1.msra.mxu0 0.0
  %1141 = vmatprep.subr.mxu0 0.0
  %1142 = vmatpush1.msra.mxu0 0.0
  %1143 = vmatprep.subr.mxu0 0.0
  %1144 = vmatpush1.msra.mxu0 0.0
  %1145 = vmatprep.subr.mxu0 0.0
  %1146 = vmatpush1.msra.mxu0 0.0
  %1147 = vmatprep.subr.mxu0 0.0
  %1148 = vmatpush1.msra.mxu0 0.0
  %1149 = vmatprep.subr.mxu0 0.0
  %1150 = vmatpush1.msra.mxu0 0.0
  %1151 = vmatprep.subr.mxu0 0.0
  %1152 = vmatpush1.msra.mxu0 0.0
  %1153 = vmatprep.subr.mxu0 0.0
  %1154 = vmatpush1.msra.mxu0 0.0
  %1155 = vmatprep.subr.mxu0 0.0
  %1156 = vmatpush1.msra.mxu0 0.0
  %1157 = vmatprep.subr.mxu0 0.0
  %1158 = vmatpush1.msra.mxu0 0.0
  %1159 = vmatprep.subr.mxu0 0.0
  %1160 = vmatpush1.msra.mxu0 0.0
  %1161 = vmatprep.subr.mxu0 0.0
  %1162 = vmatpush1.msra.mxu0 0.0
  %1163 = vmatprep.subr.mxu0 0.0
  %1164 = vmatpush1.msra.mxu0 0.0
  %1165 = vmatprep.subr.mxu0 0.0
  %1166 = vmatpush1.msra.mxu0 0.0
  %1167 = vmatprep.subr.mxu0 0.0
  %1168 = vmatpush1.msra.mxu0 0.0
  %1169 = vmatprep.subr.mxu0 0.0
  %1170 = vmatpush1.msra.mxu0 0.0
  %1171 = vmatprep.mubr.f32.mxu0 0.0
  %1172 = vmatmul.mubr.f32.gmra.mrb[0].mxu0 %v501
  %v1173 = vpop.f32.mrb[0].mxu0
  %v1174 = vadd.f32 %v1105, %v1173
  %v1175 = vpop.f32.mrb[0].mxu0
  %1176 = vdwg.mxu0
  %v1179 = vunpack.c.l.s4 1966171168
  %v1180 = vunpack.c.0.s8 %v1179
  %v1181 = vlaneseq
  %v1182 = vshrl.u32 %v1181, 7
  %v1183 = vsub.s32 %v1180, %v1182
  %v1184 = vrot.slane %v1010, %v1183
  %v1185 = vcombine.high %v1184, %v1184
  %v1187 = vunpack.c.l.s4 1966171168
  %v1188 = vunpack.c.0.s8 %v1187
  %v1189 = vlaneseq
  %v1190 = vshrl.u32 %v1189, 7
  %v1191 = vsub.s32 %v1188, %v1190
  %v1192 = vrot.slane %v1184, %v1191
  %v1194 = vunpack.c.l.s4 1966171168
  %v1195 = vunpack.c.0.s8 %v1194
  %v1196 = vlaneseq
  %v1197 = vshrl.u32 %v1196, 7
  %v1198 = vsub.s32 %v1195, %v1197
  %v1199 = vrot.slane %v1185, %v1198
  %v1201 = vcombine.high %v1091, %v1091
  %v1203 = vcombine.high %v1174, %v1174
  %v1204 = vsel %vm600, %v1192, 0
  %v1206 = vsel %vm600, %v1091, 0
  %1208 = vmatprep.subr.mxu0 0.0
  %1209 = vmatpush1.xpose.msra.mxu0 %v1206
  %1210 = vmatprep.subr.mxu0 0.0
  %1211 = vmatpush1.xpose.msra.mxu0 0.0
  %1212 = vmatprep.subr.mxu0 0.0
  %1213 = vmatpush1.xpose.msra.mxu0 0.0
  %1214 = vmatprep.subr.mxu0 0.0
  %1215 = vmatpush1.xpose.msra.mxu0 0.0
  %1216 = vmatprep.subr.mxu0 0.0
  %1217 = vmatpush1.xpose.msra.mxu0 0.0
  %1218 = vmatprep.subr.mxu0 0.0
  %1219 = vmatpush1.xpose.msra.mxu0 0.0
  %1220 = vmatprep.subr.mxu0 0.0
  %1221 = vmatpush1.xpose.msra.mxu0 0.0
  %1222 = vmatprep.subr.mxu0 0.0
  %1223 = vmatpush1.xpose.msra.mxu0 0.0
  %1224 = vmatprep.subr.mxu0 0.0
  %1225 = vmatpush1.xpose.msra.mxu0 0.0
  %1226 = vmatprep.subr.mxu0 0.0
  %1227 = vmatpush1.xpose.msra.mxu0 0.0
  %1228 = vmatprep.subr.mxu0 0.0
  %1229 = vmatpush1.xpose.msra.mxu0 0.0
  %1230 = vmatprep.subr.mxu0 0.0
  %1231 = vmatpush1.xpose.msra.mxu0 0.0
  %1232 = vmatprep.subr.mxu0 0.0
  %1233 = vmatpush1.xpose.msra.mxu0 0.0
  %1234 = vmatprep.subr.mxu0 0.0
  %1235 = vmatpush1.xpose.msra.mxu0 0.0
  %1236 = vmatprep.subr.mxu0 0.0
  %1237 = vmatpush1.xpose.msra.mxu0 0.0
  %1238 = vmatprep.subr.mxu0 0.0
  %1239 = vmatpush1.xpose.msra.mxu0 0.0
  %1240 = vmatprep.subr.mxu0 0.0
  %1241 = vmatpush1.xpose.msra.mxu0 0.0
  %1242 = vmatprep.subr.mxu0 0.0
  %1243 = vmatpush1.xpose.msra.mxu0 0.0
  %1244 = vmatprep.subr.mxu0 0.0
  %1245 = vmatpush1.xpose.msra.mxu0 0.0
  %1246 = vmatprep.subr.mxu0 0.0
  %1247 = vmatpush1.xpose.msra.mxu0 0.0
  %1248 = vmatprep.subr.mxu0 0.0
  %1249 = vmatpush1.xpose.msra.mxu0 0.0
  %1250 = vmatprep.subr.mxu0 0.0
  %1251 = vmatpush1.xpose.msra.mxu0 0.0
  %1252 = vmatprep.subr.mxu0 0.0
  %1253 = vmatpush1.xpose.msra.mxu0 0.0
  %1254 = vmatprep.subr.mxu0 0.0
  %1255 = vmatpush1.xpose.msra.mxu0 0.0
  %1256 = vmatprep.subr.mxu0 0.0
  %1257 = vmatpush1.xpose.msra.mxu0 0.0
  %1258 = vmatprep.subr.mxu0 0.0
  %1259 = vmatpush1.xpose.msra.mxu0 0.0
  %1260 = vmatprep.subr.mxu0 0.0
  %1261 = vmatpush1.xpose.msra.mxu0 0.0
  %1262 = vmatprep.subr.mxu0 0.0
  %1263 = vmatpush1.xpose.msra.mxu0 0.0
  %1264 = vmatprep.subr.mxu0 0.0
  %1265 = vmatpush1.xpose.msra.mxu0 0.0
  %1266 = vmatprep.subr.mxu0 0.0
  %1267 = vmatpush1.xpose.msra.mxu0 0.0
  %1268 = vmatprep.subr.mxu0 0.0
  %1269 = vmatpush1.xpose.msra.mxu0 0.0
  %1270 = vmatprep.subr.mxu0 0.0
  %1271 = vmatpush1.xpose.msra.mxu0 0.0
  %1272 = vmatprep.mubr.f32.mxu0 0.0
  %1273 = vmatmul.mubr.f32.gmra.mrb[0].mxu0 %v1204
  %v1274 = vpop.f32.mrb[0].mxu0
  %v1275 = vadd.f32 0.0, %v1274
  %v1276 = vpop.f32.mrb[0].mxu0
  %1277 = vdwg.mxu0
  %v1278 = vsel %vm600, %v1199, 0
  %v1280 = vsel %vm600, %v1201, 0
  %1282 = vmatprep.subr.mxu0 0.0
  %1283 = vmatpush1.xpose.msra.mxu0 %v1280
  %1284 = vmatprep.subr.mxu0 0.0
  %1285 = vmatpush1.xpose.msra.mxu0 0.0
  %1286 = vmatprep.subr.mxu0 0.0
  %1287 = vmatpush1.xpose.msra.mxu0 0.0
  %1288 = vmatprep.subr.mxu0 0.0
  %1289 = vmatpush1.xpose.msra.mxu0 0.0
  %1290 = vmatprep.subr.mxu0 0.0
  %1291 = vmatpush1.xpose.msra.mxu0 0.0
  %1292 = vmatprep.subr.mxu0 0.0
  %1293 = vmatpush1.xpose.msra.mxu0 0.0
  %1294 = vmatprep.subr.mxu0 0.0
  %1295 = vmatpush1.xpose.msra.mxu0 0.0
  %1296 = vmatprep.subr.mxu0 0.0
  %1297 = vmatpush1.xpose.msra.mxu0 0.0
  %1298 = vmatprep.subr.mxu0 0.0
  %1299 = vmatpush1.xpose.msra.mxu0 0.0
  %1300 = vmatprep.subr.mxu0 0.0
  %1301 = vmatpush1.xpose.msra.mxu0 0.0
  %1302 = vmatprep.subr.mxu0 0.0
  %1303 = vmatpush1.xpose.msra.mxu0 0.0
  %1304 = vmatprep.subr.mxu0 0.0
  %1305 = vmatpush1.xpose.msra.mxu0 0.0
  %1306 = vmatprep.subr.mxu0 0.0
  %1307 = vmatpush1.xpose.msra.mxu0 0.0
  %1308 = vmatprep.subr.mxu0 0.0
  %1309 = vmatpush1.xpose.msra.mxu0 0.0
  %1310 = vmatprep.subr.mxu0 0.0
  %1311 = vmatpush1.xpose.msra.mxu0 0.0
  %1312 = vmatprep.subr.mxu0 0.0
  %1313 = vmatpush1.xpose.msra.mxu0 0.0
  %1314 = vmatprep.subr.mxu0 0.0
  %1315 = vmatpush1.xpose.msra.mxu0 0.0
  %1316 = vmatprep.subr.mxu0 0.0
  %1317 = vmatpush1.xpose.msra.mxu0 0.0
  %1318 = vmatprep.subr.mxu0 0.0
  %1319 = vmatpush1.xpose.msra.mxu0 0.0
  %1320 = vmatprep.subr.mxu0 0.0
  %1321 = vmatpush1.xpose.msra.mxu0 0.0
  %1322 = vmatprep.subr.mxu0 0.0
  %1323 = vmatpush1.xpose.msra.mxu0 0.0
  %1324 = vmatprep.subr.mxu0 0.0
  %1325 = vmatpush1.xpose.msra.mxu0 0.0
  %1326 = vmatprep.subr.mxu0 0.0
  %1327 = vmatpush1.xpose.msra.mxu0 0.0
  %1328 = vmatprep.subr.mxu0 0.0
  %1329 = vmatpush1.xpose.msra.mxu0 0.0
  %1330 = vmatprep.subr.mxu0 0.0
  %1331 = vmatpush1.xpose.msra.mxu0 0.0
  %1332 = vmatprep.subr.mxu0 0.0
  %1333 = vmatpush1.xpose.msra.mxu0 0.0
  %1334 = vmatprep.subr.mxu0 0.0
  %1335 = vmatpush1.xpose.msra.mxu0 0.0
  %1336 = vmatprep.subr.mxu0 0.0
  %1337 = vmatpush1.xpose.msra.mxu0 0.0
  %1338 = vmatprep.subr.mxu0 0.0
  %1339 = vmatpush1.xpose.msra.mxu0 0.0
  %1340 = vmatprep.subr.mxu0 0.0
  %1341 = vmatpush1.xpose.msra.mxu0 0.0
  %1342 = vmatprep.subr.mxu0 0.0
  %1343 = vmatpush1.xpose.msra.mxu0 0.0
  %1344 = vmatprep.subr.mxu0 0.0
  %1345 = vmatpush1.xpose.msra.mxu0 0.0
  %1346 = vmatprep.mubr.f32.mxu0 0.0
  %1347 = vmatmul.mubr.f32.gmra.mrb[0].mxu0 %v1278
  %v1348 = vpop.f32.mrb[0].mxu0
  %v1349 = vadd.f32 0.0, %v1348
  %v1350 = vpop.f32.mrb[0].mxu0
  %1351 = vdwg.mxu0
  %v1352 = vsel %vm749, %v1275, -inf
  %1353 = vmax.xlane.f32.xlu0 %v1352
  %v1354 = vpop.xlane.xlu0 %1353
  %v1355 = vsel %vm749, %v1349, -inf
  %1356 = vmax.xlane.f32.xlu0 %v1355
  %v1357 = vpop.xlane.xlu0 %1356
  %v1358 = vsub.f32 %v1275, %v1354
  %v1359 = vsub.f32 %v1349, %v1357
  %v1360 = vmul.f32 %v1358, 1.442695
  %v1361 = vpow.pop %v1360
  %v1362 = vmul.f32 %v1359, 1.442695
  %v1363 = vpow.pop %v1362
  %v1364 = vsel %vm749, %v1361, 0.0
  %1365 = vadd.xlane.f32.xlu0 %v1364
  %v1366 = vpop.xlane.xlu0 %1365
  %v1367 = vsel %vm749, %v1363, 0.0
  %1368 = vadd.xlane.f32.xlu0 %v1367
  %v1369 = vpop.xlane.xlu0 %1368
  %v1370 = vrcp.pop %v1366
  %v1371 = vrcp.pop %v1369
  %v1372 = vmul.f32 %v1361, %v1370
  %v1373 = vmul.f32 %v1363, %v1371
  %v1374 = vadd.f32 %v772, %v1372
  %v1375 = vadd.f32 %v773, %v1373
  %v1377 = vsel %vm774, %v1372, 0
  %v1379 = vsel %vm778, %v1174, 0
  %1381 = vmatprep.subr.mxu0 0.0
  %1382 = vmatpush1.msra.mxu0 %v1379
  %1383 = vmatprep.subr.mxu0 0.0
  %1384 = vmatpush1.msra.mxu0 0.0
  %1385 = vmatprep.subr.mxu0 0.0
  %1386 = vmatpush1.msra.mxu0 0.0
  %1387 = vmatprep.subr.mxu0 0.0
  %1388 = vmatpush1.msra.mxu0 0.0
  %1389 = vmatprep.subr.mxu0 0.0
  %1390 = vmatpush1.msra.mxu0 0.0
  %1391 = vmatprep.subr.mxu0 0.0
  %1392 = vmatpush1.msra.mxu0 0.0
  %1393 = vmatprep.subr.mxu0 0.0
  %1394 = vmatpush1.msra.mxu0 0.0
  %1395 = vmatprep.subr.mxu0 0.0
  %1396 = vmatpush1.msra.mxu0 0.0
  %1397 = vmatprep.subr.mxu0 0.0
  %1398 = vmatpush1.msra.mxu0 0.0
  %1399 = vmatprep.subr.mxu0 0.0
  %1400 = vmatpush1.msra.mxu0 0.0
  %1401 = vmatprep.subr.mxu0 0.0
  %1402 = vmatpush1.msra.mxu0 0.0
  %1403 = vmatprep.subr.mxu0 0.0
  %1404 = vmatpush1.msra.mxu0 0.0
  %1405 = vmatprep.subr.mxu0 0.0
  %1406 = vmatpush1.msra.mxu0 0.0
  %1407 = vmatprep.subr.mxu0 0.0
  %1408 = vmatpush1.msra.mxu0 0.0
  %1409 = vmatprep.subr.mxu0 0.0
  %1410 = vmatpush1.msra.mxu0 0.0
  %1411 = vmatprep.subr.mxu0 0.0
  %1412 = vmatpush1.msra.mxu0 0.0
  %1413 = vmatprep.subr.mxu0 0.0
  %1414 = vmatpush1.msra.mxu0 0.0
  %1415 = vmatprep.subr.mxu0 0.0
  %1416 = vmatpush1.msra.mxu0 0.0
  %1417 = vmatprep.subr.mxu0 0.0
  %1418 = vmatpush1.msra.mxu0 0.0
  %1419 = vmatprep.subr.mxu0 0.0
  %1420 = vmatpush1.msra.mxu0 0.0
  %1421 = vmatprep.subr.mxu0 0.0
  %1422 = vmatpush1.msra.mxu0 0.0
  %1423 = vmatprep.subr.mxu0 0.0
  %1424 = vmatpush1.msra.mxu0 0.0
  %1425 = vmatprep.subr.mxu0 0.0
  %1426 = vmatpush1.msra.mxu0 0.0
  %1427 = vmatprep.subr.mxu0 0.0
  %1428 = vmatpush1.msra.mxu0 0.0
  %1429 = vmatprep.subr.mxu0 0.0
  %1430 = vmatpush1.msra.mxu0 0.0
  %1431 = vmatprep.subr.mxu0 0.0
  %1432 = vmatpush1.msra.mxu0 0.0
  %1433 = vmatprep.subr.mxu0 0.0
  %1434 = vmatpush1.msra.mxu0 0.0
  %1435 = vmatprep.subr.mxu0 0.0
  %1436 = vmatpush1.msra.mxu0 0.0
  %1437 = vmatprep.subr.mxu0 0.0
  %1438 = vmatpush1.msra.mxu0 0.0
  %1439 = vmatprep.subr.mxu0 0.0
  %1440 = vmatpush1.msra.mxu0 0.0
  %1441 = vmatprep.subr.mxu0 0.0
  %1442 = vmatpush1.msra.mxu0 0.0
  %1443 = vmatprep.subr.mxu0 0.0
  %1444 = vmatpush1.msra.mxu0 0.0
  %1445 = vmatprep.mubr.f32.mxu0 0.0
  %1446 = vmatmul.mubr.f32.gmra.mrb[0].mxu0 %v1377
  %v1447 = vpop.f32.mrb[0].mxu0
  %v1448 = vadd.f32 0.0, %v1447
  %v1449 = vpop.f32.mrb[0].mxu0
  %1450 = vdwg.mxu0
  %v1452 = vsel %vm774, %v1373, 0
  %v1454 = vsel %vm778, %v1203, 0
  %1456 = vmatprep.subr.mxu0 0.0
  %1457 = vmatpush1.msra.mxu0 %v1454
  %1458 = vmatprep.subr.mxu0 0.0
  %1459 = vmatpush1.msra.mxu0 0.0
  %1460 = vmatprep.subr.mxu0 0.0
  %1461 = vmatpush1.msra.mxu0 0.0
  %1462 = vmatprep.subr.mxu0 0.0
  %1463 = vmatpush1.msra.mxu0 0.0
  %1464 = vmatprep.subr.mxu0 0.0
  %1465 = vmatpush1.msra.mxu0 0.0
  %1466 = vmatprep.subr.mxu0 0.0
  %1467 = vmatpush1.msra.mxu0 0.0
  %1468 = vmatprep.subr.mxu0 0.0
  %1469 = vmatpush1.msra.mxu0 0.0
  %1470 = vmatprep.subr.mxu0 0.0
  %1471 = vmatpush1.msra.mxu0 0.0
  %1472 = vmatprep.subr.mxu0 0.0
  %1473 = vmatpush1.msra.mxu0 0.0
  %1474 = vmatprep.subr.mxu0 0.0
  %1475 = vmatpush1.msra.mxu0 0.0
  %1476 = vmatprep.subr.mxu0 0.0
  %1477 = vmatpush1.msra.mxu0 0.0
  %1478 = vmatprep.subr.mxu0 0.0
  %1479 = vmatpush1.msra.mxu0 0.0
  %1480 = vmatprep.subr.mxu0 0.0
  %1481 = vmatpush1.msra.mxu0 0.0
  %1482 = vmatprep.subr.mxu0 0.0
  %1483 = vmatpush1.msra.mxu0 0.0
  %1484 = vmatprep.subr.mxu0 0.0
  %1485 = vmatpush1.msra.mxu0 0.0
  %1486 = vmatprep.subr.mxu0 0.0
  %1487 = vmatpush1.msra.mxu0 0.0
  %1488 = vmatprep.subr.mxu0 0.0
  %1489 = vmatpush1.msra.mxu0 0.0
  %1490 = vmatprep.subr.mxu0 0.0
  %1491 = vmatpush1.msra.mxu0 0.0
  %1492 = vmatprep.subr.mxu0 0.0
  %1493 = vmatpush1.msra.mxu0 0.0
  %1494 = vmatprep.subr.mxu0 0.0
  %1495 = vmatpush1.msra.mxu0 0.0
  %1496 = vmatprep.subr.mxu0 0.0
  %1497 = vmatpush1.msra.mxu0 0.0
  %1498 = vmatprep.subr.mxu0 0.0
  %1499 = vmatpush1.msra.mxu0 0.0
  %1500 = vmatprep.subr.mxu0 0.0
  %1501 = vmatpush1.msra.mxu0 0.0
  %1502 = vmatprep.subr.mxu0 0.0
  %1503 = vmatpush1.msra.mxu0 0.0
  %1504 = vmatprep.subr.mxu0 0.0
  %1505 = vmatpush1.msra.mxu0 0.0
  %1506 = vmatprep.subr.mxu0 0.0
  %1507 = vmatpush1.msra.mxu0 0.0
  %1508 = vmatprep.subr.mxu0 0.0
  %1509 = vmatpush1.msra.mxu0 0.0
  %1510 = vmatprep.subr.mxu0 0.0
  %1511 = vmatpush1.msra.mxu0 0.0
  %1512 = vmatprep.subr.mxu0 0.0
  %1513 = vmatpush1.msra.mxu0 0.0
  %1514 = vmatprep.subr.mxu0 0.0
  %1515 = vmatpush1.msra.mxu0 0.0
  %1516 = vmatprep.subr.mxu0 0.0
  %1517 = vmatpush1.msra.mxu0 0.0
  %1518 = vmatprep.subr.mxu0 0.0
  %1519 = vmatpush1.msra.mxu0 0.0
  %1520 = vmatprep.mubr.f32.mxu0 0.0
  %1521 = vmatmul.mubr.f32.gmra.mrb[0].mxu0 %v1452
  %v1522 = vpop.f32.mrb[0].mxu0
  %v1523 = vadd.f32 0.0, %v1522
  %v1524 = vpop.f32.mrb[0].mxu0
  %1525 = vdwg.mxu0
  %s1526 = scalar_lea.vmem %s13, 8
  %v1527 = vld [vmem:[%s1526] sm:$0xff]
  %v1530 = vrot.slane %v1523, 7
  %v1531 = vsel %vm245, %v1530, %v1448
  %v1532 = vsel %vm600, %v1531, 0
  %1534 = vmatprep.subr.mxu0 0.0
  %1535 = vmatpush1.msra.mxu0 %v1527
  %1536 = vmatprep.subr.mxu0 0.0
  %1537 = vmatpush1.msra.mxu0 0.0
  %1538 = vmatprep.subr.mxu0 0.0
  %1539 = vmatpush1.msra.mxu0 0.0
  %1540 = vmatprep.subr.mxu0 0.0
  %1541 = vmatpush1.msra.mxu0 0.0
  %1542 = vmatprep.subr.mxu0 0.0
  %1543 = vmatpush1.msra.mxu0 0.0
  %1544 = vmatprep.subr.mxu0 0.0
  %1545 = vmatpush1.msra.mxu0 0.0
  %1546 = vmatprep.subr.mxu0 0.0
  %1547 = vmatpush1.msra.mxu0 0.0
  %1548 = vmatprep.subr.mxu0 0.0
  %1549 = vmatpush1.msra.mxu0 0.0
  %1550 = vmatprep.subr.mxu0 0.0
  %1551 = vmatpush1.msra.mxu0 0.0
  %1552 = vmatprep.subr.mxu0 0.0
  %1553 = vmatpush1.msra.mxu0 0.0
  %1554 = vmatprep.subr.mxu0 0.0
  %1555 = vmatpush1.msra.mxu0 0.0
  %1556 = vmatprep.subr.mxu0 0.0
  %1557 = vmatpush1.msra.mxu0 0.0
  %1558 = vmatprep.subr.mxu0 0.0
  %1559 = vmatpush1.msra.mxu0 0.0
  %1560 = vmatprep.subr.mxu0 0.0
  %1561 = vmatpush1.msra.mxu0 0.0
  %1562 = vmatprep.subr.mxu0 0.0
  %1563 = vmatpush1.msra.mxu0 0.0
  %1564 = vmatprep.subr.mxu0 0.0
  %1565 = vmatpush1.msra.mxu0 0.0
  %1566 = vmatprep.subr.mxu0 0.0
  %1567 = vmatpush1.msra.mxu0 0.0
  %1568 = vmatprep.subr.mxu0 0.0
  %1569 = vmatpush1.msra.mxu0 0.0
  %1570 = vmatprep.subr.mxu0 0.0
  %1571 = vmatpush1.msra.mxu0 0.0
  %1572 = vmatprep.subr.mxu0 0.0
  %1573 = vmatpush1.msra.mxu0 0.0
  %1574 = vmatprep.subr.mxu0 0.0
  %1575 = vmatpush1.msra.mxu0 0.0
  %1576 = vmatprep.subr.mxu0 0.0
  %1577 = vmatpush1.msra.mxu0 0.0
  %1578 = vmatprep.subr.mxu0 0.0
  %1579 = vmatpush1.msra.mxu0 0.0
  %1580 = vmatprep.subr.mxu0 0.0
  %1581 = vmatpush1.msra.mxu0 0.0
  %1582 = vmatprep.subr.mxu0 0.0
  %1583 = vmatpush1.msra.mxu0 0.0
  %1584 = vmatprep.subr.mxu0 0.0
  %1585 = vmatpush1.msra.mxu0 0.0
  %1586 = vmatprep.subr.mxu0 0.0
  %1587 = vmatpush1.msra.mxu0 0.0
  %1588 = vmatprep.subr.mxu0 0.0
  %1589 = vmatpush1.msra.mxu0 0.0
  %1590 = vmatprep.subr.mxu0 0.0
  %1591 = vmatpush1.msra.mxu0 0.0
  %1592 = vmatprep.subr.mxu0 0.0
  %1593 = vmatpush1.msra.mxu0 0.0
  %1594 = vmatprep.subr.mxu0 0.0
  %1595 = vmatpush1.msra.mxu0 0.0
  %1596 = vmatprep.subr.mxu0 0.0
  %1597 = vmatpush1.msra.mxu0 0.0
  %1598 = vmatprep.mubr.f32.mxu0 0.0
  %1599 = vmatmul.mubr.f32.gmra.mrb[0].mxu0 %v1532
  %v1600 = vpop.f32.mrb[0].mxu0
  %v1601 = vadd.f32 0.0, %v1600
  %v1602 = vpop.f32.mrb[0].mxu0
  %1603 = vdwg.mxu0
  %v1606 = vrot.slane %v923, 7
  %v1607 = vsel %vm245, %v1606, %v848
  %v1608 = vsel %vm600, %v1607, 0
  %1610 = vmatprep.subr.mxu0 0.0
  %1611 = vmatpush1.msra.mxu0 %v926
  %1612 = vmatprep.subr.mxu0 0.0
  %1613 = vmatpush1.msra.mxu0 0.0
  %1614 = vmatprep.subr.mxu0 0.0
  %1615 = vmatpush1.msra.mxu0 0.0
  %1616 = vmatprep.subr.mxu0 0.0
  %1617 = vmatpush1.msra.mxu0 0.0
  %1618 = vmatprep.subr.mxu0 0.0
  %1619 = vmatpush1.msra.mxu0 0.0
  %1620 = vmatprep.subr.mxu0 0.0
  %1621 = vmatpush1.msra.mxu0 0.0
  %1622 = vmatprep.subr.mxu0 0.0
  %1623 = vmatpush1.msra.mxu0 0.0
  %1624 = vmatprep.subr.mxu0 0.0
  %1625 = vmatpush1.msra.mxu0 0.0
  %1626 = vmatprep.subr.mxu0 0.0
  %1627 = vmatpush1.msra.mxu0 0.0
  %1628 = vmatprep.subr.mxu0 0.0
  %1629 = vmatpush1.msra.mxu0 0.0
  %1630 = vmatprep.subr.mxu0 0.0
  %1631 = vmatpush1.msra.mxu0 0.0
  %1632 = vmatprep.subr.mxu0 0.0
  %1633 = vmatpush1.msra.mxu0 0.0
  %1634 = vmatprep.subr.mxu0 0.0
  %1635 = vmatpush1.msra.mxu0 0.0
  %1636 = vmatprep.subr.mxu0 0.0
  %1637 = vmatpush1.msra.mxu0 0.0
  %1638 = vmatprep.subr.mxu0 0.0
  %1639 = vmatpush1.msra.mxu0 0.0
  %1640 = vmatprep.subr.mxu0 0.0
  %1641 = vmatpush1.msra.mxu0 0.0
  %1642 = vmatprep.subr.mxu0 0.0
  %1643 = vmatpush1.msra.mxu0 0.0
  %1644 = vmatprep.subr.mxu0 0.0
  %1645 = vmatpush1.msra.mxu0 0.0
  %1646 = vmatprep.subr.mxu0 0.0
  %1647 = vmatpush1.msra.mxu0 0.0
  %1648 = vmatprep.subr.mxu0 0.0
  %1649 = vmatpush1.msra.mxu0 0.0
  %1650 = vmatprep.subr.mxu0 0.0
  %1651 = vmatpush1.msra.mxu0 0.0
  %1652 = vmatprep.subr.mxu0 0.0
  %1653 = vmatpush1.msra.mxu0 0.0
  %1654 = vmatprep.subr.mxu0 0.0
  %1655 = vmatpush1.msra.mxu0 0.0
  %1656 = vmatprep.subr.mxu0 0.0
  %1657 = vmatpush1.msra.mxu0 0.0
  %1658 = vmatprep.subr.mxu0 0.0
  %1659 = vmatpush1.msra.mxu0 0.0
  %1660 = vmatprep.subr.mxu0 0.0
  %1661 = vmatpush1.msra.mxu0 0.0
  %1662 = vmatprep.subr.mxu0 0.0
  %1663 = vmatpush1.msra.mxu0 0.0
  %1664 = vmatprep.subr.mxu0 0.0
  %1665 = vmatpush1.msra.mxu0 0.0
  %1666 = vmatprep.subr.mxu0 0.0
  %1667 = vmatpush1.msra.mxu0 0.0
  %1668 = vmatprep.subr.mxu0 0.0
  %1669 = vmatpush1.msra.mxu0 0.0
  %1670 = vmatprep.subr.mxu0 0.0
  %1671 = vmatpush1.msra.mxu0 0.0
  %1672 = vmatprep.subr.mxu0 0.0
  %1673 = vmatpush1.msra.mxu0 0.0
  %1674 = vmatprep.mubr.f32.mxu0 0.0
  %1675 = vmatmul.mubr.f32.gmra.mrb[0].mxu0 %v1608
  %v1676 = vpop.f32.mrb[0].mxu0
  %v1677 = vadd.f32 %v1601, %v1676
  %v1678 = vpop.f32.mrb[0].mxu0
  %1679 = vdwg.mxu0
  %s1680 = scalar_lea.vmem %s7, 64
  %v1681 = vld [vmem:[%s1680] sm:$0xff]
  %v1682 = vld [vmem:[%s1680 + $0x8] sm:$0xff]
  %v1683 = vld [vmem:[%s1680 + $0x10] sm:$0xff]
  %v1684 = vld [vmem:[%s1680 + $0x18] sm:$0xff]
  %s1685 = scalar_lea.vmem %s8, 2
  %v1686 = vld [vmem:[%s1685] sm:$0x1]
  %v1688 = vlaneseq
  %v1689 = vshrl.u32 %v1688, 7
  %v1690 = vsub.s32 0, %v1689
  %v1691 = vrot.slane %v1686, %v1690
  %1693 = vmatprep.subr.mxu0 0.0
  %1694 = vmatpush1.msra.mxu0 %v1681
  %1695 = vmatprep.subr.mxu0 0.0
  %1696 = vmatpush1.msra.mxu0 %v1682
  %1697 = vmatprep.subr.mxu0 0.0
  %1698 = vmatpush1.msra.mxu0 %v1683
  %1699 = vmatprep.subr.mxu0 0.0
  %1700 = vmatpush1.msra.mxu0 %v1684
  %1701 = vmatprep.subr.mxu0 0.0
  %1702 = vmatpush1.msra.mxu0 0.0
  %1703 = vmatprep.subr.mxu0 0.0
  %1704 = vmatpush1.msra.mxu0 0.0
  %1705 = vmatprep.subr.mxu0 0.0
  %1706 = vmatpush1.msra.mxu0 0.0
  %1707 = vmatprep.subr.mxu0 0.0
  %1708 = vmatpush1.msra.mxu0 0.0
  %1709 = vmatprep.subr.mxu0 0.0
  %1710 = vmatpush1.msra.mxu0 0.0
  %1711 = vmatprep.subr.mxu0 0.0
  %1712 = vmatpush1.msra.mxu0 0.0
  %1713 = vmatprep.subr.mxu0 0.0
  %1714 = vmatpush1.msra.mxu0 0.0
  %1715 = vmatprep.subr.mxu0 0.0
  %1716 = vmatpush1.msra.mxu0 0.0
  %1717 = vmatprep.subr.mxu0 0.0
  %1718 = vmatpush1.msra.mxu0 0.0
  %1719 = vmatprep.subr.mxu0 0.0
  %1720 = vmatpush1.msra.mxu0 0.0
  %1721 = vmatprep.subr.mxu0 0.0
  %1722 = vmatpush1.msra.mxu0 0.0
  %1723 = vmatprep.subr.mxu0 0.0
  %1724 = vmatpush1.msra.mxu0 0.0
  %1725 = vmatprep.subr.mxu0 0.0
  %1726 = vmatpush1.msra.mxu0 0.0
  %1727 = vmatprep.subr.mxu0 0.0
  %1728 = vmatpush1.msra.mxu0 0.0
  %1729 = vmatprep.subr.mxu0 0.0
  %1730 = vmatpush1.msra.mxu0 0.0
  %1731 = vmatprep.subr.mxu0 0.0
  %1732 = vmatpush1.msra.mxu0 0.0
  %1733 = vmatprep.subr.mxu0 0.0
  %1734 = vmatpush1.msra.mxu0 0.0
  %1735 = vmatprep.subr.mxu0 0.0
  %1736 = vmatpush1.msra.mxu0 0.0
  %1737 = vmatprep.subr.mxu0 0.0
  %1738 = vmatpush1.msra.mxu0 0.0
  %1739 = vmatprep.subr.mxu0 0.0
  %1740 = vmatpush1.msra.mxu0 0.0
  %1741 = vmatprep.subr.mxu0 0.0
  %1742 = vmatpush1.msra.mxu0 0.0
  %1743 = vmatprep.subr.mxu0 0.0
  %1744 = vmatpush1.msra.mxu0 0.0
  %1745 = vmatprep.subr.mxu0 0.0
  %1746 = vmatpush1.msra.mxu0 0.0
  %1747 = vmatprep.subr.mxu0 0.0
  %1748 = vmatpush1.msra.mxu0 0.0
  %1749 = vmatprep.subr.mxu0 0.0
  %1750 = vmatpush1.msra.mxu0 0.0
  %1751 = vmatprep.subr.mxu0 0.0
  %1752 = vmatpush1.msra.mxu0 0.0
  %1753 = vmatprep.subr.mxu0 0.0
  %1754 = vmatpush1.msra.mxu0 0.0
  %1755 = vmatprep.subr.mxu0 0.0
  %1756 = vmatpush1.msra.mxu0 0.0
  %1757 = vmatprep.mubr.f32.mxu0 0.0
  %1758 = vmatmul.mubr.f32.gmra.mrb[0].mxu0 %v332
  %v1759 = vpop.f32.mrb[0].mxu0
  %v1760 = vadd.f32 %v1691, %v1759
  %v1761 = vpop.f32.mrb[0].mxu0
  %1762 = vdwg.mxu0
  %v1763 = vmul.f32 %v1760, 0.35355338
  %s1764 = scalar_lea.vmem %s9, 64
  %v1765 = vld [vmem:[%s1764] sm:$0xff]
  %v1766 = vld [vmem:[%s1764 + $0x8] sm:$0xff]
  %v1767 = vld [vmem:[%s1764 + $0x10] sm:$0xff]
  %v1768 = vld [vmem:[%s1764 + $0x18] sm:$0xff]
  %s1769 = scalar_lea.vmem %s10, 2
  %v1770 = vld [vmem:[%s1769] sm:$0x1]
  %v1772 = vlaneseq
  %v1773 = vshrl.u32 %v1772, 7
  %v1774 = vsub.s32 0, %v1773
  %v1775 = vrot.slane %v1770, %v1774
  %1777 = vmatprep.subr.mxu0 0.0
  %1778 = vmatpush1.msra.mxu0 %v1765
  %1779 = vmatprep.subr.mxu0 0.0
  %1780 = vmatpush1.msra.mxu0 %v1766
  %1781 = vmatprep.subr.mxu0 0.0
  %1782 = vmatpush1.msra.mxu0 %v1767
  %1783 = vmatprep.subr.mxu0 0.0
  %1784 = vmatpush1.msra.mxu0 %v1768
  %1785 = vmatprep.subr.mxu0 0.0
  %1786 = vmatpush1.msra.mxu0 0.0
  %1787 = vmatprep.subr.mxu0 0.0
  %1788 = vmatpush1.msra.mxu0 0.0
  %1789 = vmatprep.subr.mxu0 0.0
  %1790 = vmatpush1.msra.mxu0 0.0
  %1791 = vmatprep.subr.mxu0 0.0
  %1792 = vmatpush1.msra.mxu0 0.0
  %1793 = vmatprep.subr.mxu0 0.0
  %1794 = vmatpush1.msra.mxu0 0.0
  %1795 = vmatprep.subr.mxu0 0.0
  %1796 = vmatpush1.msra.mxu0 0.0
  %1797 = vmatprep.subr.mxu0 0.0
  %1798 = vmatpush1.msra.mxu0 0.0
  %1799 = vmatprep.subr.mxu0 0.0
  %1800 = vmatpush1.msra.mxu0 0.0
  %1801 = vmatprep.subr.mxu0 0.0
  %1802 = vmatpush1.msra.mxu0 0.0
  %1803 = vmatprep.subr.mxu0 0.0
  %1804 = vmatpush1.msra.mxu0 0.0
  %1805 = vmatprep.subr.mxu0 0.0
  %1806 = vmatpush1.msra.mxu0 0.0
  %1807 = vmatprep.subr.mxu0 0.0
  %1808 = vmatpush1.msra.mxu0 0.0
  %1809 = vmatprep.subr.mxu0 0.0
  %1810 = vmatpush1.msra.mxu0 0.0
  %1811 = vmatprep.subr.mxu0 0.0
  %1812 = vmatpush1.msra.mxu0 0.0
  %1813 = vmatprep.subr.mxu0 0.0
  %1814 = vmatpush1.msra.mxu0 0.0
  %1815 = vmatprep.subr.mxu0 0.0
  %1816 = vmatpush1.msra.mxu0 0.0
  %1817 = vmatprep.subr.mxu0 0.0
  %1818 = vmatpush1.msra.mxu0 0.0
  %1819 = vmatprep.subr.mxu0 0.0
  %1820 = vmatpush1.msra.mxu0 0.0
  %1821 = vmatprep.subr.mxu0 0.0
  %1822 = vmatpush1.msra.mxu0 0.0
  %1823 = vmatprep.subr.mxu0 0.0
  %1824 = vmatpush1.msra.mxu0 0.0
  %1825 = vmatprep.subr.mxu0 0.0
  %1826 = vmatpush1.msra.mxu0 0.0
  %1827 = vmatprep.subr.mxu0 0.0
  %1828 = vmatpush1.msra.mxu0 0.0
  %1829 = vmatprep.subr.mxu0 0.0
  %1830 = vmatpush1.msra.mxu0 0.0
  %1831 = vmatprep.subr.mxu0 0.0
  %1832 = vmatpush1.msra.mxu0 0.0
  %1833 = vmatprep.subr.mxu0 0.0
  %1834 = vmatpush1.msra.mxu0 0.0
  %1835 = vmatprep.subr.mxu0 0.0
  %1836 = vmatpush1.msra.mxu0 0.0
  %1837 = vmatprep.subr.mxu0 0.0
  %1838 = vmatpush1.msra.mxu0 0.0
  %1839 = vmatprep.subr.mxu0 0.0
  %1840 = vmatpush1.msra.mxu0 0.0
  %1841 = vmatprep.mubr.f32.mxu0 0.0
  %1842 = vmatmul.mubr.f32.gmra.mrb[0].mxu0 %v417
  %v1843 = vpop.f32.mrb[0].mxu0
  %v1844 = vadd.f32 %v1775, %v1843
  %v1845 = vpop.f32.mrb[0].mxu0
  %1846 = vdwg.mxu0
  %s1847 = scalar_lea.vmem %s11, 64
  %v1848 = vld [vmem:[%s1847] sm:$0xff]
  %v1849 = vld [vmem:[%s1847 + $0x8] sm:$0xff]
  %v1850 = vld [vmem:[%s1847 + $0x10] sm:$0xff]
  %v1851 = vld [vmem:[%s1847 + $0x18] sm:$0xff]
  %s1852 = scalar_lea.vmem %s12, 2
  %v1853 = vld [vmem:[%s1852] sm:$0x1]
  %v1855 = vlaneseq
  %v1856 = vshrl.u32 %v1855, 7
  %v1857 = vsub.s32 0, %v1856
  %v1858 = vrot.slane %v1853, %v1857
  %1860 = vmatprep.subr.mxu0 0.0
  %1861 = vmatpush1.msra.mxu0 %v1848
  %1862 = vmatprep.subr.mxu0 0.0
  %1863 = vmatpush1.msra.mxu0 %v1849
  %1864 = vmatprep.subr.mxu0 0.0
  %1865 = vmatpush1.msra.mxu0 %v1850
  %1866 = vmatprep.subr.mxu0 0.0
  %1867 = vmatpush1.msra.mxu0 %v1851
  %1868 = vmatprep.subr.mxu0 0.0
  %1869 = vmatpush1.msra.mxu0 0.0
  %1870 = vmatprep.subr.mxu0 0.0
  %1871 = vmatpush1.msra.mxu0 0.0
  %1872 = vmatprep.subr.mxu0 0.0
  %1873 = vmatpush1.msra.mxu0 0.0
  %1874 = vmatprep.subr.mxu0 0.0
  %1875 = vmatpush1.msra.mxu0 0.0
  %1876 = vmatprep.subr.mxu0 0.0
  %1877 = vmatpush1.msra.mxu0 0.0
  %1878 = vmatprep.subr.mxu0 0.0
  %1879 = vmatpush1.msra.mxu0 0.0
  %1880 = vmatprep.subr.mxu0 0.0
  %1881 = vmatpush1.msra.mxu0 0.0
  %1882 = vmatprep.subr.mxu0 0.0
  %1883 = vmatpush1.msra.mxu0 0.0
  %1884 = vmatprep.subr.mxu0 0.0
  %1885 = vmatpush1.msra.mxu0 0.0
  %1886 = vmatprep.subr.mxu0 0.0
  %1887 = vmatpush1.msra.mxu0 0.0
  %1888 = vmatprep.subr.mxu0 0.0
  %1889 = vmatpush1.msra.mxu0 0.0
  %1890 = vmatprep.subr.mxu0 0.0
  %1891 = vmatpush1.msra.mxu0 0.0
  %1892 = vmatprep.subr.mxu0 0.0
  %1893 = vmatpush1.msra.mxu0 0.0
  %1894 = vmatprep.subr.mxu0 0.0
  %1895 = vmatpush1.msra.mxu0 0.0
  %1896 = vmatprep.subr.mxu0 0.0
  %1897 = vmatpush1.msra.mxu0 0.0
  %1898 = vmatprep.subr.mxu0 0.0
  %1899 = vmatpush1.msra.mxu0 0.0
  %1900 = vmatprep.subr.mxu0 0.0
  %1901 = vmatpush1.msra.mxu0 0.0
  %1902 = vmatprep.subr.mxu0 0.0
  %1903 = vmatpush1.msra.mxu0 0.0
  %1904 = vmatprep.subr.mxu0 0.0
  %1905 = vmatpush1.msra.mxu0 0.0
  %1906 = vmatprep.subr.mxu0 0.0
  %1907 = vmatpush1.msra.mxu0 0.0
  %1908 = vmatprep.subr.mxu0 0.0
  %1909 = vmatpush1.msra.mxu0 0.0
  %1910 = vmatprep.subr.mxu0 0.0
  %1911 = vmatpush1.msra.mxu0 0.0
  %1912 = vmatprep.subr.mxu0 0.0
  %1913 = vmatpush1.msra.mxu0 0.0
  %1914 = vmatprep.subr.mxu0 0.0
  %1915 = vmatpush1.msra.mxu0 0.0
  %1916 = vmatprep.subr.mxu0 0.0
  %1917 = vmatpush1.msra.mxu0 0.0
  %1918 = vmatprep.subr.mxu0 0.0
  %1919 = vmatpush1.msra.mxu0 0.0
  %1920 = vmatprep.subr.mxu0 0.0
  %1921 = vmatpush1.msra.mxu0 0.0
  %1922 = vmatprep.subr.mxu0 0.0
  %1923 = vmatpush1.msra.mxu0 0.0
  %1924 = vmatprep.mubr.f32.mxu0 0.0
  %1925 = vmatmul.mubr.f32.gmra.mrb[0].mxu0 %v501
  %v1926 = vpop.f32.mrb[0].mxu0
  %v1927 = vadd.f32 %v1858, %v1926
  %v1928 = vpop.f32.mrb[0].mxu0
  %1929 = vdwg.mxu0
  %v1932 = vunpack.c.l.s4 1966171168
  %v1933 = vunpack.c.0.s8 %v1932
  %v1934 = vlaneseq
  %v1935 = vshrl.u32 %v1934, 7
  %v1936 = vsub.s32 %v1933, %v1935
  %v1937 = vrot.slane %v1763, %v1936
  %v1938 = vcombine.high %v1937, %v1937
  %v1940 = vunpack.c.l.s4 1966171168
  %v1941 = vunpack.c.0.s8 %v1940
  %v1942 = vlaneseq
  %v1943 = vshrl.u32 %v1942, 7
  %v1944 = vsub.s32 %v1941, %v1943
  %v1945 = vrot.slane %v1937, %v1944
  %v1947 = vunpack.c.l.s4 1966171168
  %v1948 = vunpack.c.0.s8 %v1947
  %v1949 = vlaneseq
  %v1950 = vshrl.u32 %v1949, 7
  %v1951 = vsub.s32 %v1948, %v1950
  %v1952 = vrot.slane %v1938, %v1951
  %v1954 = vcombine.high %v1844, %v1844
  %v1956 = vcombine.high %v1927, %v1927
  %v1957 = vsel %vm600, %v1945, 0
  %v1959 = vsel %vm600, %v1844, 0
  %1961 = vmatprep.subr.mxu0 0.0
  %1962 = vmatpush1.xpose.msra.mxu0 %v1959
  %1963 = vmatprep.subr.mxu0 0.0
  %1964 = vmatpush1.xpose.msra.mxu0 0.0
  %1965 = vmatprep.subr.mxu0 0.0
  %1966 = vmatpush1.xpose.msra.mxu0 0.0
  %1967 = vmatprep.subr.mxu0 0.0
  %1968 = vmatpush1.xpose.msra.mxu0 0.0
  %1969 = vmatprep.subr.mxu0 0.0
  %1970 = vmatpush1.xpose.msra.mxu0 0.0
  %1971 = vmatprep.subr.mxu0 0.0
  %1972 = vmatpush1.xpose.msra.mxu0 0.0
  %1973 = vmatprep.subr.mxu0 0.0
  %1974 = vmatpush1.xpose.msra.mxu0 0.0
  %1975 = vmatprep.subr.mxu0 0.0
  %1976 = vmatpush1.xpose.msra.mxu0 0.0
  %1977 = vmatprep.subr.mxu0 0.0
  %1978 = vmatpush1.xpose.msra.mxu0 0.0
  %1979 = vmatprep.subr.mxu0 0.0
  %1980 = vmatpush1.xpose.msra.mxu0 0.0
  %1981 = vmatprep.subr.mxu0 0.0
  %1982 = vmatpush1.xpose.msra.mxu0 0.0
  %1983 = vmatprep.subr.mxu0 0.0
  %1984 = vmatpush1.xpose.msra.mxu0 0.0
  %1985 = vmatprep.subr.mxu0 0.0
  %1986 = vmatpush1.xpose.msra.mxu0 0.0
  %1987 = vmatprep.subr.mxu0 0.0
  %1988 = vmatpush1.xpose.msra.mxu0 0.0
  %1989 = vmatprep.subr.mxu0 0.0
  %1990 = vmatpush1.xpose.msra.mxu0 0.0
  %1991 = vmatprep.subr.mxu0 0.0
  %1992 = vmatpush1.xpose.msra.mxu0 0.0
  %1993 = vmatprep.subr.mxu0 0.0
  %1994 = vmatpush1.xpose.msra.mxu0 0.0
  %1995 = vmatprep.subr.mxu0 0.0
  %1996 = vmatpush1.xpose.msra.mxu0 0.0
  %1997 = vmatprep.subr.mxu0 0.0
  %1998 = vmatpush1.xpose.msra.mxu0 0.0
  %1999 = vmatprep.subr.mxu0 0.0
  %2000 = vmatpush1.xpose.msra.mxu0 0.0
  %2001 = vmatprep.subr.mxu0 0.0
  %2002 = vmatpush1.xpose.msra.mxu0 0.0
  %2003 = vmatprep.subr.mxu0 0.0
  %2004 = vmatpush1.xpose.msra.mxu0 0.0
  %2005 = vmatprep.subr.mxu0 0.0
  %2006 = vmatpush1.xpose.msra.mxu0 0.0
  %2007 = vmatprep.subr.mxu0 0.0
  %2008 = vmatpush1.xpose.msra.mxu0 0.0
  %2009 = vmatprep.subr.mxu0 0.0
  %2010 = vmatpush1.xpose.msra.mxu0 0.0
  %2011 = vmatprep.subr.mxu0 0.0
  %2012 = vmatpush1.xpose.msra.mxu0 0.0
  %2013 = vmatprep.subr.mxu0 0.0
  %2014 = vmatpush1.xpose.msra.mxu0 0.0
  %2015 = vmatprep.subr.mxu0 0.0
  %2016 = vmatpush1.xpose.msra.mxu0 0.0
  %2017 = vmatprep.subr.mxu0 0.0
  %2018 = vmatpush1.xpose.msra.mxu0 0.0
  %2019 = vmatprep.subr.mxu0 0.0
  %2020 = vmatpush1.xpose.msra.mxu0 0.0
  %2021 = vmatprep.subr.mxu0 0.0
  %2022 = vmatpush1.xpose.msra.mxu0 0.0
  %2023 = vmatprep.subr.mxu0 0.0
  %2024 = vmatpush1.xpose.msra.mxu0 0.0
  %2025 = vmatprep.mubr.f32.mxu0 0.0
  %2026 = vmatmul.mubr.f32.gmra.mrb[0].mxu0 %v1957
  %v2027 = vpop.f32.mrb[0].mxu0
  %v2028 = vadd.f32 0.0, %v2027
  %v2029 = vpop.f32.mrb[0].mxu0
  %2030 = vdwg.mxu0
  %v2031 = vsel %vm600, %v1952, 0
  %v2033 = vsel %vm600, %v1954, 0
  %2035 = vmatprep.subr.mxu0 0.0
  %2036 = vmatpush1.xpose.msra.mxu0 %v2033
  %2037 = vmatprep.subr.mxu0 0.0
  %2038 = vmatpush1.xpose.msra.mxu0 0.0
  %2039 = vmatprep.subr.mxu0 0.0
  %2040 = vmatpush1.xpose.msra.mxu0 0.0
  %2041 = vmatprep.subr.mxu0 0.0
  %2042 = vmatpush1.xpose.msra.mxu0 0.0
  %2043 = vmatprep.subr.mxu0 0.0
  %2044 = vmatpush1.xpose.msra.mxu0 0.0
  %2045 = vmatprep.subr.mxu0 0.0
  %2046 = vmatpush1.xpose.msra.mxu0 0.0
  %2047 = vmatprep.subr.mxu0 0.0
  %2048 = vmatpush1.xpose.msra.mxu0 0.0
  %2049 = vmatprep.subr.mxu0 0.0
  %2050 = vmatpush1.xpose.msra.mxu0 0.0
  %2051 = vmatprep.subr.mxu0 0.0
  %2052 = vmatpush1.xpose.msra.mxu0 0.0
  %2053 = vmatprep.subr.mxu0 0.0
  %2054 = vmatpush1.xpose.msra.mxu0 0.0
  %2055 = vmatprep.subr.mxu0 0.0
  %2056 = vmatpush1.xpose.msra.mxu0 0.0
  %2057 = vmatprep.subr.mxu0 0.0
  %2058 = vmatpush1.xpose.msra.mxu0 0.0
  %2059 = vmatprep.subr.mxu0 0.0
  %2060 = vmatpush1.xpose.msra.mxu0 0.0
  %2061 = vmatprep.subr.mxu0 0.0
  %2062 = vmatpush1.xpose.msra.mxu0 0.0
  %2063 = vmatprep.subr.mxu0 0.0
  %2064 = vmatpush1.xpose.msra.mxu0 0.0
  %2065 = vmatprep.subr.mxu0 0.0
  %2066 = vmatpush1.xpose.msra.mxu0 0.0
  %2067 = vmatprep.subr.mxu0 0.0
  %2068 = vmatpush1.xpose.msra.mxu0 0.0
  %2069 = vmatprep.subr.mxu0 0.0
  %2070 = vmatpush1.xpose.msra.mxu0 0.0
  %2071 = vmatprep.subr.mxu0 0.0
  %2072 = vmatpush1.xpose.msra.mxu0 0.0
  %2073 = vmatprep.subr.mxu0 0.0
  %2074 = vmatpush1.xpose.msra.mxu0 0.0
  %2075 = vmatprep.subr.mxu0 0.0
  %2076 = vmatpush1.xpose.msra.mxu0 0.0
  %2077 = vmatprep.subr.mxu0 0.0
  %2078 = vmatpush1.xpose.msra.mxu0 0.0
  %2079 = vmatprep.subr.mxu0 0.0
  %2080 = vmatpush1.xpose.msra.mxu0 0.0
  %2081 = vmatprep.subr.mxu0 0.0
  %2082 = vmatpush1.xpose.msra.mxu0 0.0
  %2083 = vmatprep.subr.mxu0 0.0
  %2084 = vmatpush1.xpose.msra.mxu0 0.0
  %2085 = vmatprep.subr.mxu0 0.0
  %2086 = vmatpush1.xpose.msra.mxu0 0.0
  %2087 = vmatprep.subr.mxu0 0.0
  %2088 = vmatpush1.xpose.msra.mxu0 0.0
  %2089 = vmatprep.subr.mxu0 0.0
  %2090 = vmatpush1.xpose.msra.mxu0 0.0
  %2091 = vmatprep.subr.mxu0 0.0
  %2092 = vmatpush1.xpose.msra.mxu0 0.0
  %2093 = vmatprep.subr.mxu0 0.0
  %2094 = vmatpush1.xpose.msra.mxu0 0.0
  %2095 = vmatprep.subr.mxu0 0.0
  %2096 = vmatpush1.xpose.msra.mxu0 0.0
  %2097 = vmatprep.subr.mxu0 0.0
  %2098 = vmatpush1.xpose.msra.mxu0 0.0
  %2099 = vmatprep.mubr.f32.mxu0 0.0
  %2100 = vmatmul.mubr.f32.gmra.mrb[0].mxu0 %v2031
  %v2101 = vpop.f32.mrb[0].mxu0
  %v2102 = vadd.f32 0.0, %v2101
  %v2103 = vpop.f32.mrb[0].mxu0
  %2104 = vdwg.mxu0
  %v2105 = vsel %vm749, %v2028, -inf
  %2106 = vmax.xlane.f32.xlu0 %v2105
  %v2107 = vpop.xlane.xlu0 %2106
  %v2108 = vsel %vm749, %v2102, -inf
  %2109 = vmax.xlane.f32.xlu0 %v2108
  %v2110 = vpop.xlane.xlu0 %2109
  %v2111 = vsub.f32 %v2028, %v2107
  %v2112 = vsub.f32 %v2102, %v2110
  %v2113 = vmul.f32 %v2111, 1.442695
  %v2114 = vpow.pop %v2113
  %v2115 = vmul.f32 %v2112, 1.442695
  %v2116 = vpow.pop %v2115
  %v2117 = vsel %vm749, %v2114, 0.0
  %2118 = vadd.xlane.f32.xlu0 %v2117
  %v2119 = vpop.xlane.xlu0 %2118
  %v2120 = vsel %vm749, %v2116, 0.0
  %2121 = vadd.xlane.f32.xlu0 %v2120
  %v2122 = vpop.xlane.xlu0 %2121
  %v2123 = vrcp.pop %v2119
  %v2124 = vrcp.pop %v2122
  %v2125 = vmul.f32 %v2114, %v2123
  %v2126 = vmul.f32 %v2116, %v2124
  %v2127 = vadd.f32 %v1374, %v2125
  %v2128 = vadd.f32 %v1375, %v2126
  %v2130 = vsel %vm774, %v2125, 0
  %v2132 = vsel %vm778, %v1927, 0
  %2134 = vmatprep.subr.mxu0 0.0
  %2135 = vmatpush1.msra.mxu0 %v2132
  %2136 = vmatprep.subr.mxu0 0.0
  %2137 = vmatpush1.msra.mxu0 0.0
  %2138 = vmatprep.subr.mxu0 0.0
  %2139 = vmatpush1.msra.mxu0 0.0
  %2140 = vmatprep.subr.mxu0 0.0
  %2141 = vmatpush1.msra.mxu0 0.0
  %2142 = vmatprep.subr.mxu0 0.0
  %2143 = vmatpush1.msra.mxu0 0.0
  %2144 = vmatprep.subr.mxu0 0.0
  %2145 = vmatpush1.msra.mxu0 0.0
  %2146 = vmatprep.subr.mxu0 0.0
  %2147 = vmatpush1.msra.mxu0 0.0
  %2148 = vmatprep.subr.mxu0 0.0
  %2149 = vmatpush1.msra.mxu0 0.0
  %2150 = vmatprep.subr.mxu0 0.0
  %2151 = vmatpush1.msra.mxu0 0.0
  %2152 = vmatprep.subr.mxu0 0.0
  %2153 = vmatpush1.msra.mxu0 0.0
  %2154 = vmatprep.subr.mxu0 0.0
  %2155 = vmatpush1.msra.mxu0 0.0
  %2156 = vmatprep.subr.mxu0 0.0
  %2157 = vmatpush1.msra.mxu0 0.0
  %2158 = vmatprep.subr.mxu0 0.0
  %2159 = vmatpush1.msra.mxu0 0.0
  %2160 = vmatprep.subr.mxu0 0.0
  %2161 = vmatpush1.msra.mxu0 0.0
  %2162 = vmatprep.subr.mxu0 0.0
  %2163 = vmatpush1.msra.mxu0 0.0
  %2164 = vmatprep.subr.mxu0 0.0
  %2165 = vmatpush1.msra.mxu0 0.0
  %2166 = vmatprep.subr.mxu0 0.0
  %2167 = vmatpush1.msra.mxu0 0.0
  %2168 = vmatprep.subr.mxu0 0.0
  %2169 = vmatpush1.msra.mxu0 0.0
  %2170 = vmatprep.subr.mxu0 0.0
  %2171 = vmatpush1.msra.mxu0 0.0
  %2172 = vmatprep.subr.mxu0 0.0
  %2173 = vmatpush1.msra.mxu0 0.0
  %2174 = vmatprep.subr.mxu0 0.0
  %2175 = vmatpush1.msra.mxu0 0.0
  %2176 = vmatprep.subr.mxu0 0.0
  %2177 = vmatpush1.msra.mxu0 0.0
  %2178 = vmatprep.subr.mxu0 0.0
  %2179 = vmatpush1.msra.mxu0 0.0
  %2180 = vmatprep.subr.mxu0 0.0
  %2181 = vmatpush1.msra.mxu0 0.0
  %2182 = vmatprep.subr.mxu0 0.0
  %2183 = vmatpush1.msra.mxu0 0.0
  %2184 = vmatprep.subr.mxu0 0.0
  %2185 = vmatpush1.msra.mxu0 0.0
  %2186 = vmatprep.subr.mxu0 0.0
  %2187 = vmatpush1.msra.mxu0 0.0
  %2188 = vmatprep.subr.mxu0 0.0
  %2189 = vmatpush1.msra.mxu0 0.0
  %2190 = vmatprep.subr.mxu0 0.0
  %2191 = vmatpush1.msra.mxu0 0.0
  %2192 = vmatprep.subr.mxu0 0.0
  %2193 = vmatpush1.msra.mxu0 0.0
  %2194 = vmatprep.subr.mxu0 0.0
  %2195 = vmatpush1.msra.mxu0 0.0
  %2196 = vmatprep.subr.mxu0 0.0
  %2197 = vmatpush1.msra.mxu0 0.0
  %2198 = vmatprep.mubr.f32.mxu0 0.0
  %2199 = vmatmul.mubr.f32.gmra.mrb[0].mxu0 %v2130
  %v2200 = vpop.f32.mrb[0].mxu0
  %v2201 = vadd.f32 0.0, %v2200
  %v2202 = vpop.f32.mrb[0].mxu0
  %2203 = vdwg.mxu0
  %v2205 = vsel %vm774, %v2126, 0
  %v2207 = vsel %vm778, %v1956, 0
  %2209 = vmatprep.subr.mxu0 0.0
  %2210 = vmatpush1.msra.mxu0 %v2207
  %2211 = vmatprep.subr.mxu0 0.0
  %2212 = vmatpush1.msra.mxu0 0.0
  %2213 = vmatprep.subr.mxu0 0.0
  %2214 = vmatpush1.msra.mxu0 0.0
  %2215 = vmatprep.subr.mxu0 0.0
  %2216 = vmatpush1.msra.mxu0 0.0
  %2217 = vmatprep.subr.mxu0 0.0
  %2218 = vmatpush1.msra.mxu0 0.0
  %2219 = vmatprep.subr.mxu0 0.0
  %2220 = vmatpush1.msra.mxu0 0.0
  %2221 = vmatprep.subr.mxu0 0.0
  %2222 = vmatpush1.msra.mxu0 0.0
  %2223 = vmatprep.subr.mxu0 0.0
  %2224 = vmatpush1.msra.mxu0 0.0
  %2225 = vmatprep.subr.mxu0 0.0
  %2226 = vmatpush1.msra.mxu0 0.0
  %2227 = vmatprep.subr.mxu0 0.0
  %2228 = vmatpush1.msra.mxu0 0.0
  %2229 = vmatprep.subr.mxu0 0.0
  %2230 = vmatpush1.msra.mxu0 0.0
  %2231 = vmatprep.subr.mxu0 0.0
  %2232 = vmatpush1.msra.mxu0 0.0
  %2233 = vmatprep.subr.mxu0 0.0
  %2234 = vmatpush1.msra.mxu0 0.0
  %2235 = vmatprep.subr.mxu0 0.0
  %2236 = vmatpush1.msra.mxu0 0.0
  %2237 = vmatprep.subr.mxu0 0.0
  %2238 = vmatpush1.msra.mxu0 0.0
  %2239 = vmatprep.subr.mxu0 0.0
  %2240 = vmatpush1.msra.mxu0 0.0
  %2241 = vmatprep.subr.mxu0 0.0
  %2242 = vmatpush1.msra.mxu0 0.0
  %2243 = vmatprep.subr.mxu0 0.0
  %2244 = vmatpush1.msra.mxu0 0.0
  %2245 = vmatprep.subr.mxu0 0.0
  %2246 = vmatpush1.msra.mxu0 0.0
  %2247 = vmatprep.subr.mxu0 0.0
  %2248 = vmatpush1.msra.mxu0 0.0
  %2249 = vmatprep.subr.mxu0 0.0
  %2250 = vmatpush1.msra.mxu0 0.0
  %2251 = vmatprep.subr.mxu0 0.0
  %2252 = vmatpush1.msra.mxu0 0.0
  %2253 = vmatprep.subr.mxu0 0.0
  %2254 = vmatpush1.msra.mxu0 0.0
  %2255 = vmatprep.subr.mxu0 0.0
  %2256 = vmatpush1.msra.mxu0 0.0
  %2257 = vmatprep.subr.mxu0 0.0
  %2258 = vmatpush1.msra.mxu0 0.0
  %2259 = vmatprep.subr.mxu0 0.0
  %2260 = vmatpush1.msra.mxu0 0.0
  %2261 = vmatprep.subr.mxu0 0.0
  %2262 = vmatpush1.msra.mxu0 0.0
  %2263 = vmatprep.subr.mxu0 0.0
  %2264 = vmatpush1.msra.mxu0 0.0
  %2265 = vmatprep.subr.mxu0 0.0
  %2266 = vmatpush1.msra.mxu0 0.0
  %2267 = vmatprep.subr.mxu0 0.0
  %2268 = vmatpush1.msra.mxu0 0.0
  %2269 = vmatprep.subr.mxu0 0.0
  %2270 = vmatpush1.msra.mxu0 0.0
  %2271 = vmatprep.subr.mxu0 0.0
  %2272 = vmatpush1.msra.mxu0 0.0
  %2273 = vmatprep.mubr.f32.mxu0 0.0
  %2274 = vmatmul.mubr.f32.gmra.mrb[0].mxu0 %v2205
  %v2275 = vpop.f32.mrb[0].mxu0
  %v2276 = vadd.f32 0.0, %v2275
  %v2277 = vpop.f32.mrb[0].mxu0
  %2278 = vdwg.mxu0
  %s2279 = scalar_lea.vmem %s13, 16
  %v2280 = vld [vmem:[%s2279] sm:$0xff]
  %v2283 = vrot.slane %v2276, 7
  %v2284 = vsel %vm245, %v2283, %v2201
  %v2285 = vsel %vm600, %v2284, 0
  %2287 = vmatprep.subr.mxu0 0.0
  %2288 = vmatpush1.msra.mxu0 %v2280
  %2289 = vmatprep.subr.mxu0 0.0
  %2290 = vmatpush1.msra.mxu0 0.0
  %2291 = vmatprep.subr.mxu0 0.0
  %2292 = vmatpush1.msra.mxu0 0.0
  %2293 = vmatprep.subr.mxu0 0.0
  %2294 = vmatpush1.msra.mxu0 0.0
  %2295 = vmatprep.subr.mxu0 0.0
  %2296 = vmatpush1.msra.mxu0 0.0
  %2297 = vmatprep.subr.mxu0 0.0
  %2298 = vmatpush1.msra.mxu0 0.0
  %2299 = vmatprep.subr.mxu0 0.0
  %2300 = vmatpush1.msra.mxu0 0.0
  %2301 = vmatprep.subr.mxu0 0.0
  %2302 = vmatpush1.msra.mxu0 0.0
  %2303 = vmatprep.subr.mxu0 0.0
  %2304 = vmatpush1.msra.mxu0 0.0
  %2305 = vmatprep.subr.mxu0 0.0
  %2306 = vmatpush1.msra.mxu0 0.0
  %2307 = vmatprep.subr.mxu0 0.0
  %2308 = vmatpush1.msra.mxu0 0.0
  %2309 = vmatprep.subr.mxu0 0.0
  %2310 = vmatpush1.msra.mxu0 0.0
  %2311 = vmatprep.subr.mxu0 0.0
  %2312 = vmatpush1.msra.mxu0 0.0
  %2313 = vmatprep.subr.mxu0 0.0
  %2314 = vmatpush1.msra.mxu0 0.0
  %2315 = vmatprep.subr.mxu0 0.0
  %2316 = vmatpush1.msra.mxu0 0.0
  %2317 = vmatprep.subr.mxu0 0.0
  %2318 = vmatpush1.msra.mxu0 0.0
  %2319 = vmatprep.subr.mxu0 0.0
  %2320 = vmatpush1.msra.mxu0 0.0
  %2321 = vmatprep.subr.mxu0 0.0
  %2322 = vmatpush1.msra.mxu0 0.0
  %2323 = vmatprep.subr.mxu0 0.0
  %2324 = vmatpush1.msra.mxu0 0.0
  %2325 = vmatprep.subr.mxu0 0.0
  %2326 = vmatpush1.msra.mxu0 0.0
  %2327 = vmatprep.subr.mxu0 0.0
  %2328 = vmatpush1.msra.mxu0 0.0
  %2329 = vmatprep.subr.mxu0 0.0
  %2330 = vmatpush1.msra.mxu0 0.0
  %2331 = vmatprep.subr.mxu0 0.0
  %2332 = vmatpush1.msra.mxu0 0.0
  %2333 = vmatprep.subr.mxu0 0.0
  %2334 = vmatpush1.msra.mxu0 0.0
  %2335 = vmatprep.subr.mxu0 0.0
  %2336 = vmatpush1.msra.mxu0 0.0
  %2337 = vmatprep.subr.mxu0 0.0
  %2338 = vmatpush1.msra.mxu0 0.0
  %2339 = vmatprep.subr.mxu0 0.0
  %2340 = vmatpush1.msra.mxu0 0.0
  %2341 = vmatprep.subr.mxu0 0.0
  %2342 = vmatpush1.msra.mxu0 0.0
  %2343 = vmatprep.subr.mxu0 0.0
  %2344 = vmatpush1.msra.mxu0 0.0
  %2345 = vmatprep.subr.mxu0 0.0
  %2346 = vmatpush1.msra.mxu0 0.0
  %2347 = vmatprep.subr.mxu0 0.0
  %2348 = vmatpush1.msra.mxu0 0.0
  %2349 = vmatprep.subr.mxu0 0.0
  %2350 = vmatpush1.msra.mxu0 0.0
  %2351 = vmatprep.mubr.f32.mxu0 0.0
  %2352 = vmatmul.mubr.f32.gmra.mrb[0].mxu0 %v2285
  %v2353 = vpop.f32.mrb[0].mxu0
  %v2354 = vadd.f32 0.0, %v2353
  %v2355 = vpop.f32.mrb[0].mxu0
  %2356 = vdwg.mxu0
  %v2357 = vadd.f32 %v1677, %v2354
  %s2358 = scalar_lea.vmem %s7, 96
  %v2359 = vld [vmem:[%s2358] sm:$0xff]
  %v2360 = vld [vmem:[%s2358 + $0x8] sm:$0xff]
  %v2361 = vld [vmem:[%s2358 + $0x10] sm:$0xff]
  %v2362 = vld [vmem:[%s2358 + $0x18] sm:$0xff]
  %s2363 = scalar_lea.vmem %s8, 3
  %v2364 = vld [vmem:[%s2363] sm:$0x1]
  %v2366 = vlaneseq
  %v2367 = vshrl.u32 %v2366, 7
  %v2368 = vsub.s32 0, %v2367
  %v2369 = vrot.slane %v2364, %v2368
  %2371 = vmatprep.subr.mxu0 0.0
  %2372 = vmatpush1.msra.mxu0 %v2359
  %2373 = vmatprep.subr.mxu0 0.0
  %2374 = vmatpush1.msra.mxu0 %v2360
  %2375 = vmatprep.subr.mxu0 0.0
  %2376 = vmatpush1.msra.mxu0 %v2361
  %2377 = vmatprep.subr.mxu0 0.0
  %2378 = vmatpush1.msra.mxu0 %v2362
  %2379 = vmatprep.subr.mxu0 0.0
  %2380 = vmatpush1.msra.mxu0 0.0
  %2381 = vmatprep.subr.mxu0 0.0
  %2382 = vmatpush1.msra.mxu0 0.0
  %2383 = vmatprep.subr.mxu0 0.0
  %2384 = vmatpush1.msra.mxu0 0.0
  %2385 = vmatprep.subr.mxu0 0.0
  %2386 = vmatpush1.msra.mxu0 0.0
  %2387 = vmatprep.subr.mxu0 0.0
  %2388 = vmatpush1.msra.mxu0 0.0
  %2389 = vmatprep.subr.mxu0 0.0
  %2390 = vmatpush1.msra.mxu0 0.0
  %2391 = vmatprep.subr.mxu0 0.0
  %2392 = vmatpush1.msra.mxu0 0.0
  %2393 = vmatprep.subr.mxu0 0.0
  %2394 = vmatpush1.msra.mxu0 0.0
  %2395 = vmatprep.subr.mxu0 0.0
  %2396 = vmatpush1.msra.mxu0 0.0
  %2397 = vmatprep.subr.mxu0 0.0
  %2398 = vmatpush1.msra.mxu0 0.0
  %2399 = vmatprep.subr.mxu0 0.0
  %2400 = vmatpush1.msra.mxu0 0.0
  %2401 = vmatprep.subr.mxu0 0.0
  %2402 = vmatpush1.msra.mxu0 0.0
  %2403 = vmatprep.subr.mxu0 0.0
  %2404 = vmatpush1.msra.mxu0 0.0
  %2405 = vmatprep.subr.mxu0 0.0
  %2406 = vmatpush1.msra.mxu0 0.0
  %2407 = vmatprep.subr.mxu0 0.0
  %2408 = vmatpush1.msra.mxu0 0.0
  %2409 = vmatprep.subr.mxu0 0.0
  %2410 = vmatpush1.msra.mxu0 0.0
  %2411 = vmatprep.subr.mxu0 0.0
  %2412 = vmatpush1.msra.mxu0 0.0
  %2413 = vmatprep.subr.mxu0 0.0
  %2414 = vmatpush1.msra.mxu0 0.0
  %2415 = vmatprep.subr.mxu0 0.0
  %2416 = vmatpush1.msra.mxu0 0.0
  %2417 = vmatprep.subr.mxu0 0.0
  %2418 = vmatpush1.msra.mxu0 0.0
  %2419 = vmatprep.subr.mxu0 0.0
  %2420 = vmatpush1.msra.mxu0 0.0
  %2421 = vmatprep.subr.mxu0 0.0
  %2422 = vmatpush1.msra.mxu0 0.0
  %2423 = vmatprep.subr.mxu0 0.0
  %2424 = vmatpush1.msra.mxu0 0.0
  %2425 = vmatprep.subr.mxu0 0.0
  %2426 = vmatpush1.msra.mxu0 0.0
  %2427 = vmatprep.subr.mxu0 0.0
  %2428 = vmatpush1.msra.mxu0 0.0
  %2429 = vmatprep.subr.mxu0 0.0
  %2430 = vmatpush1.msra.mxu0 0.0
  %2431 = vmatprep.subr.mxu0 0.0
  %2432 = vmatpush1.msra.mxu0 0.0
  %2433 = vmatprep.subr.mxu0 0.0
  %2434 = vmatpush1.msra.mxu0 0.0
  %2435 = vmatprep.mubr.f32.mxu0 0.0
  %2436 = vmatmul.mubr.f32.gmra.mrb[0].mxu0 %v332
  %v2437 = vpop.f32.mrb[0].mxu0
  %v2438 = vadd.f32 %v2369, %v2437
  %v2439 = vpop.f32.mrb[0].mxu0
  %2440 = vdwg.mxu0
  %v2441 = vmul.f32 %v2438, 0.35355338
  %s2442 = scalar_lea.vmem %s9, 96
  %v2443 = vld [vmem:[%s2442] sm:$0xff]
  %v2444 = vld [vmem:[%s2442 + $0x8] sm:$0xff]
  %v2445 = vld [vmem:[%s2442 + $0x10] sm:$0xff]
  %v2446 = vld [vmem:[%s2442 + $0x18] sm:$0xff]
  %s2447 = scalar_lea.vmem %s10, 3
  %v2448 = vld [vmem:[%s2447] sm:$0x1]
  %v2450 = vlaneseq
  %v2451 = vshrl.u32 %v2450, 7
  %v2452 = vsub.s32 0, %v2451
  %v2453 = vrot.slane %v2448, %v2452
  %2455 = vmatprep.subr.mxu0 0.0
  %2456 = vmatpush1.msra.mxu0 %v2443
  %2457 = vmatprep.subr.mxu0 0.0
  %2458 = vmatpush1.msra.mxu0 %v2444
  %2459 = vmatprep.subr.mxu0 0.0
  %2460 = vmatpush1.msra.mxu0 %v2445
  %2461 = vmatprep.subr.mxu0 0.0
  %2462 = vmatpush1.msra.mxu0 %v2446
  %2463 = vmatprep.subr.mxu0 0.0
  %2464 = vmatpush1.msra.mxu0 0.0
  %2465 = vmatprep.subr.mxu0 0.0
  %2466 = vmatpush1.msra.mxu0 0.0
  %2467 = vmatprep.subr.mxu0 0.0
  %2468 = vmatpush1.msra.mxu0 0.0
  %2469 = vmatprep.subr.mxu0 0.0
  %2470 = vmatpush1.msra.mxu0 0.0
  %2471 = vmatprep.subr.mxu0 0.0
  %2472 = vmatpush1.msra.mxu0 0.0
  %2473 = vmatprep.subr.mxu0 0.0
  %2474 = vmatpush1.msra.mxu0 0.0
  %2475 = vmatprep.subr.mxu0 0.0
  %2476 = vmatpush1.msra.mxu0 0.0
  %2477 = vmatprep.subr.mxu0 0.0
  %2478 = vmatpush1.msra.mxu0 0.0
  %2479 = vmatprep.subr.mxu0 0.0
  %2480 = vmatpush1.msra.mxu0 0.0
  %2481 = vmatprep.subr.mxu0 0.0
  %2482 = vmatpush1.msra.mxu0 0.0
  %2483 = vmatprep.subr.mxu0 0.0
  %2484 = vmatpush1.msra.mxu0 0.0
  %2485 = vmatprep.subr.mxu0 0.0
  %2486 = vmatpush1.msra.mxu0 0.0
  %2487 = vmatprep.subr.mxu0 0.0
  %2488 = vmatpush1.msra.mxu0 0.0
  %2489 = vmatprep.subr.mxu0 0.0
  %2490 = vmatpush1.msra.mxu0 0.0
  %2491 = vmatprep.subr.mxu0 0.0
  %2492 = vmatpush1.msra.mxu0 0.0
  %2493 = vmatprep.subr.mxu0 0.0
  %2494 = vmatpush1.msra.mxu0 0.0
  %2495 = vmatprep.subr.mxu0 0.0
  %2496 = vmatpush1.msra.mxu0 0.0
  %2497 = vmatprep.subr.mxu0 0.0
  %2498 = vmatpush1.msra.mxu0 0.0
  %2499 = vmatprep.subr.mxu0 0.0
  %2500 = vmatpush1.msra.mxu0 0.0
  %2501 = vmatprep.subr.mxu0 0.0
  %2502 = vmatpush1.msra.mxu0 0.0
  %2503 = vmatprep.subr.mxu0 0.0
  %2504 = vmatpush1.msra.mxu0 0.0
  %2505 = vmatprep.subr.mxu0 0.0
  %2506 = vmatpush1.msra.mxu0 0.0
  %2507 = vmatprep.subr.mxu0 0.0
  %2508 = vmatpush1.msra.mxu0 0.0
  %2509 = vmatprep.subr.mxu0 0.0
  %2510 = vmatpush1.msra.mxu0 0.0
  %2511 = vmatprep.subr.mxu0 0.0
  %2512 = vmatpush1.msra.mxu0 0.0
  %2513 = vmatprep.subr.mxu0 0.0
  %2514 = vmatpush1.msra.mxu0 0.0
  %2515 = vmatprep.subr.mxu0 0.0
  %2516 = vmatpush1.msra.mxu0 0.0
  %2517 = vmatprep.subr.mxu0 0.0
  %2518 = vmatpush1.msra.mxu0 0.0
  %2519 = vmatprep.mubr.f32.mxu0 0.0
  %2520 = vmatmul.mubr.f32.gmra.mrb[0].mxu0 %v417
  %v2521 = vpop.f32.mrb[0].mxu0
  %v2522 = vadd.f32 %v2453, %v2521
  %v2523 = vpop.f32.mrb[0].mxu0
  %2524 = vdwg.mxu0
  %s2525 = scalar_lea.vmem %s11, 96
  %v2526 = vld [vmem:[%s2525] sm:$0xff]
  %v2527 = vld [vmem:[%s2525 + $0x8] sm:$0xff]
  %v2528 = vld [vmem:[%s2525 + $0x10] sm:$0xff]
  %v2529 = vld [vmem:[%s2525 + $0x18] sm:$0xff]
  %s2530 = scalar_lea.vmem %s12, 3
  %v2531 = vld [vmem:[%s2530] sm:$0x1]
  %v2533 = vlaneseq
  %v2534 = vshrl.u32 %v2533, 7
  %v2535 = vsub.s32 0, %v2534
  %v2536 = vrot.slane %v2531, %v2535
  %2538 = vmatprep.subr.mxu0 0.0
  %2539 = vmatpush1.msra.mxu0 %v2526
  %2540 = vmatprep.subr.mxu0 0.0
  %2541 = vmatpush1.msra.mxu0 %v2527
  %2542 = vmatprep.subr.mxu0 0.0
  %2543 = vmatpush1.msra.mxu0 %v2528
  %2544 = vmatprep.subr.mxu0 0.0
  %2545 = vmatpush1.msra.mxu0 %v2529
  %2546 = vmatprep.subr.mxu0 0.0
  %2547 = vmatpush1.msra.mxu0 0.0
  %2548 = vmatprep.subr.mxu0 0.0
  %2549 = vmatpush1.msra.mxu0 0.0
  %2550 = vmatprep.subr.mxu0 0.0
  %2551 = vmatpush1.msra.mxu0 0.0
  %2552 = vmatprep.subr.mxu0 0.0
  %2553 = vmatpush1.msra.mxu0 0.0
  %2554 = vmatprep.subr.mxu0 0.0
  %2555 = vmatpush1.msra.mxu0 0.0
  %2556 = vmatprep.subr.mxu0 0.0
  %2557 = vmatpush1.msra.mxu0 0.0
  %2558 = vmatprep.subr.mxu0 0.0
  %2559 = vmatpush1.msra.mxu0 0.0
  %2560 = vmatprep.subr.mxu0 0.0
  %2561 = vmatpush1.msra.mxu0 0.0
  %2562 = vmatprep.subr.mxu0 0.0
  %2563 = vmatpush1.msra.mxu0 0.0
  %2564 = vmatprep.subr.mxu0 0.0
  %2565 = vmatpush1.msra.mxu0 0.0
  %2566 = vmatprep.subr.mxu0 0.0
  %2567 = vmatpush1.msra.mxu0 0.0
  %2568 = vmatprep.subr.mxu0 0.0
  %2569 = vmatpush1.msra.mxu0 0.0
  %2570 = vmatprep.subr.mxu0 0.0
  %2571 = vmatpush1.msra.mxu0 0.0
  %2572 = vmatprep.subr.mxu0 0.0
  %2573 = vmatpush1.msra.mxu0 0.0
  %2574 = vmatprep.subr.mxu0 0.0
  %2575 = vmatpush1.msra.mxu0 0.0
  %2576 = vmatprep.subr.mxu0 0.0
  %2577 = vmatpush1.msra.mxu0 0.0
  %2578 = vmatprep.subr.mxu0 0.0
  %2579 = vmatpush1.msra.mxu0 0.0
  %2580 = vmatprep.subr.mxu0 0.0
  %2581 = vmatpush1.msra.mxu0 0.0
  %2582 = vmatprep.subr.mxu0 0.0
  %2583 = vmatpush1.msra.mxu0 0.0
  %2584 = vmatprep.subr.mxu0 0.0
  %2585 = vmatpush1.msra.mxu0 0.0
  %2586 = vmatprep.subr.mxu0 0.0
  %2587 = vmatpush1.msra.mxu0 0.0
  %2588 = vmatprep.subr.mxu0 0.0
  %2589 = vmatpush1.msra.mxu0 0.0
  %2590 = vmatprep.subr.mxu0 0.0
  %2591 = vmatpush1.msra.mxu0 0.0
  %2592 = vmatprep.subr.mxu0 0.0
  %2593 = vmatpush1.msra.mxu0 0.0
  %2594 = vmatprep.subr.mxu0 0.0
  %2595 = vmatpush1.msra.mxu0 0.0
  %2596 = vmatprep.subr.mxu0 0.0
  %2597 = vmatpush1.msra.mxu0 0.0
  %2598 = vmatprep.subr.mxu0 0.0
  %2599 = vmatpush1.msra.mxu0 0.0
  %2600 = vmatprep.subr.mxu0 0.0
  %2601 = vmatpush1.msra.mxu0 0.0
  %2602 = vmatprep.mubr.f32.mxu0 0.0
  %2603 = vmatmul.mubr.f32.gmra.mrb[0].mxu0 %v501
  %v2604 = vpop.f32.mrb[0].mxu0
  %v2605 = vadd.f32 %v2536, %v2604
  %v2606 = vpop.f32.mrb[0].mxu0
  %2607 = vdwg.mxu0
  %v2610 = vunpack.c.l.s4 1966171168
  %v2611 = vunpack.c.0.s8 %v2610
  %v2612 = vlaneseq
  %v2613 = vshrl.u32 %v2612, 7
  %v2614 = vsub.s32 %v2611, %v2613
  %v2615 = vrot.slane %v2441, %v2614
  %v2616 = vcombine.high %v2615, %v2615
  %v2618 = vunpack.c.l.s4 1966171168
  %v2619 = vunpack.c.0.s8 %v2618
  %v2620 = vlaneseq
  %v2621 = vshrl.u32 %v2620, 7
  %v2622 = vsub.s32 %v2619, %v2621
  %v2623 = vrot.slane %v2615, %v2622
  %v2625 = vunpack.c.l.s4 1966171168
  %v2626 = vunpack.c.0.s8 %v2625
  %v2627 = vlaneseq
  %v2628 = vshrl.u32 %v2627, 7
  %v2629 = vsub.s32 %v2626, %v2628
  %v2630 = vrot.slane %v2616, %v2629
  %v2632 = vcombine.high %v2522, %v2522
  %v2634 = vcombine.high %v2605, %v2605
  %v2635 = vsel %vm600, %v2623, 0
  %v2637 = vsel %vm600, %v2522, 0
  %2639 = vmatprep.subr.mxu0 0.0
  %2640 = vmatpush1.xpose.msra.mxu0 %v2637
  %2641 = vmatprep.subr.mxu0 0.0
  %2642 = vmatpush1.xpose.msra.mxu0 0.0
  %2643 = vmatprep.subr.mxu0 0.0
  %2644 = vmatpush1.xpose.msra.mxu0 0.0
  %2645 = vmatprep.subr.mxu0 0.0
  %2646 = vmatpush1.xpose.msra.mxu0 0.0
  %2647 = vmatprep.subr.mxu0 0.0
  %2648 = vmatpush1.xpose.msra.mxu0 0.0
  %2649 = vmatprep.subr.mxu0 0.0
  %2650 = vmatpush1.xpose.msra.mxu0 0.0
  %2651 = vmatprep.subr.mxu0 0.0
  %2652 = vmatpush1.xpose.msra.mxu0 0.0
  %2653 = vmatprep.subr.mxu0 0.0
  %2654 = vmatpush1.xpose.msra.mxu0 0.0
  %2655 = vmatprep.subr.mxu0 0.0
  %2656 = vmatpush1.xpose.msra.mxu0 0.0
  %2657 = vmatprep.subr.mxu0 0.0
  %2658 = vmatpush1.xpose.msra.mxu0 0.0
  %2659 = vmatprep.subr.mxu0 0.0
  %2660 = vmatpush1.xpose.msra.mxu0 0.0
  %2661 = vmatprep.subr.mxu0 0.0
  %2662 = vmatpush1.xpose.msra.mxu0 0.0
  %2663 = vmatprep.subr.mxu0 0.0
  %2664 = vmatpush1.xpose.msra.mxu0 0.0
  %2665 = vmatprep.subr.mxu0 0.0
  %2666 = vmatpush1.xpose.msra.mxu0 0.0
  %2667 = vmatprep.subr.mxu0 0.0
  %2668 = vmatpush1.xpose.msra.mxu0 0.0
  %2669 = vmatprep.subr.mxu0 0.0
  %2670 = vmatpush1.xpose.msra.mxu0 0.0
  %2671 = vmatprep.subr.mxu0 0.0
  %2672 = vmatpush1.xpose.msra.mxu0 0.0
  %2673 = vmatprep.subr.mxu0 0.0
  %2674 = vmatpush1.xpose.msra.mxu0 0.0
  %2675 = vmatprep.subr.mxu0 0.0
  %2676 = vmatpush1.xpose.msra.mxu0 0.0
  %2677 = vmatprep.subr.mxu0 0.0
  %2678 = vmatpush1.xpose.msra.mxu0 0.0
  %2679 = vmatprep.subr.mxu0 0.0
  %2680 = vmatpush1.xpose.msra.mxu0 0.0
  %2681 = vmatprep.subr.mxu0 0.0
  %2682 = vmatpush1.xpose.msra.mxu0 0.0
  %2683 = vmatprep.subr.mxu0 0.0
  %2684 = vmatpush1.xpose.msra.mxu0 0.0
  %2685 = vmatprep.subr.mxu0 0.0
  %2686 = vmatpush1.xpose.msra.mxu0 0.0
  %2687 = vmatprep.subr.mxu0 0.0
  %2688 = vmatpush1.xpose.msra.mxu0 0.0
  %2689 = vmatprep.subr.mxu0 0.0
  %2690 = vmatpush1.xpose.msra.mxu0 0.0
  %2691 = vmatprep.subr.mxu0 0.0
  %2692 = vmatpush1.xpose.msra.mxu0 0.0
  %2693 = vmatprep.subr.mxu0 0.0
  %2694 = vmatpush1.xpose.msra.mxu0 0.0
  %2695 = vmatprep.subr.mxu0 0.0
  %2696 = vmatpush1.xpose.msra.mxu0 0.0
  %2697 = vmatprep.subr.mxu0 0.0
  %2698 = vmatpush1.xpose.msra.mxu0 0.0
  %2699 = vmatprep.subr.mxu0 0.0
  %2700 = vmatpush1.xpose.msra.mxu0 0.0
  %2701 = vmatprep.subr.mxu0 0.0
  %2702 = vmatpush1.xpose.msra.mxu0 0.0
  %2703 = vmatprep.mubr.f32.mxu0 0.0
  %2704 = vmatmul.mubr.f32.gmra.mrb[0].mxu0 %v2635
  %v2705 = vpop.f32.mrb[0].mxu0
  %v2706 = vadd.f32 0.0, %v2705
  %v2707 = vpop.f32.mrb[0].mxu0
  %2708 = vdwg.mxu0
  %v2709 = vsel %vm600, %v2630, 0
  %v2711 = vsel %vm600, %v2632, 0
  %2713 = vmatprep.subr.mxu0 0.0
  %2714 = vmatpush1.xpose.msra.mxu0 %v2711
  %2715 = vmatprep.subr.mxu0 0.0
  %2716 = vmatpush1.xpose.msra.mxu0 0.0
  %2717 = vmatprep.subr.mxu0 0.0
  %2718 = vmatpush1.xpose.msra.mxu0 0.0
  %2719 = vmatprep.subr.mxu0 0.0
  %2720 = vmatpush1.xpose.msra.mxu0 0.0
  %2721 = vmatprep.subr.mxu0 0.0
  %2722 = vmatpush1.xpose.msra.mxu0 0.0
  %2723 = vmatprep.subr.mxu0 0.0
  %2724 = vmatpush1.xpose.msra.mxu0 0.0
  %2725 = vmatprep.subr.mxu0 0.0
  %2726 = vmatpush1.xpose.msra.mxu0 0.0
  %2727 = vmatprep.subr.mxu0 0.0
  %2728 = vmatpush1.xpose.msra.mxu0 0.0
  %2729 = vmatprep.subr.mxu0 0.0
  %2730 = vmatpush1.xpose.msra.mxu0 0.0
  %2731 = vmatprep.subr.mxu0 0.0
  %2732 = vmatpush1.xpose.msra.mxu0 0.0
  %2733 = vmatprep.subr.mxu0 0.0
  %2734 = vmatpush1.xpose.msra.mxu0 0.0
  %2735 = vmatprep.subr.mxu0 0.0
  %2736 = vmatpush1.xpose.msra.mxu0 0.0
  %2737 = vmatprep.subr.mxu0 0.0
  %2738 = vmatpush1.xpose.msra.mxu0 0.0
  %2739 = vmatprep.subr.mxu0 0.0
  %2740 = vmatpush1.xpose.msra.mxu0 0.0
  %2741 = vmatprep.subr.mxu0 0.0
  %2742 = vmatpush1.xpose.msra.mxu0 0.0
  %2743 = vmatprep.subr.mxu0 0.0
  %2744 = vmatpush1.xpose.msra.mxu0 0.0
  %2745 = vmatprep.subr.mxu0 0.0
  %2746 = vmatpush1.xpose.msra.mxu0 0.0
  %2747 = vmatprep.subr.mxu0 0.0
  %2748 = vmatpush1.xpose.msra.mxu0 0.0
  %2749 = vmatprep.subr.mxu0 0.0
  %2750 = vmatpush1.xpose.msra.mxu0 0.0
  %2751 = vmatprep.subr.mxu0 0.0
  %2752 = vmatpush1.xpose.msra.mxu0 0.0
  %2753 = vmatprep.subr.mxu0 0.0
  %2754 = vmatpush1.xpose.msra.mxu0 0.0
  %2755 = vmatprep.subr.mxu0 0.0
  %2756 = vmatpush1.xpose.msra.mxu0 0.0
  %2757 = vmatprep.subr.mxu0 0.0
  %2758 = vmatpush1.xpose.msra.mxu0 0.0
  %2759 = vmatprep.subr.mxu0 0.0
  %2760 = vmatpush1.xpose.msra.mxu0 0.0
  %2761 = vmatprep.subr.mxu0 0.0
  %2762 = vmatpush1.xpose.msra.mxu0 0.0
  %2763 = vmatprep.subr.mxu0 0.0
  %2764 = vmatpush1.xpose.msra.mxu0 0.0
  %2765 = vmatprep.subr.mxu0 0.0
  %2766 = vmatpush1.xpose.msra.mxu0 0.0
  %2767 = vmatprep.subr.mxu0 0.0
  %2768 = vmatpush1.xpose.msra.mxu0 0.0
  %2769 = vmatprep.subr.mxu0 0.0
  %2770 = vmatpush1.xpose.msra.mxu0 0.0
  %2771 = vmatprep.subr.mxu0 0.0
  %2772 = vmatpush1.xpose.msra.mxu0 0.0
  %2773 = vmatprep.subr.mxu0 0.0
  %2774 = vmatpush1.xpose.msra.mxu0 0.0
  %2775 = vmatprep.subr.mxu0 0.0
  %2776 = vmatpush1.xpose.msra.mxu0 0.0
  %2777 = vmatprep.mubr.f32.mxu0 0.0
  %2778 = vmatmul.mubr.f32.gmra.mrb[0].mxu0 %v2709
  %v2779 = vpop.f32.mrb[0].mxu0
  %v2780 = vadd.f32 0.0, %v2779
  %v2781 = vpop.f32.mrb[0].mxu0
  %2782 = vdwg.mxu0
  %v2783 = vsel %vm749, %v2706, -inf
  %2784 = vmax.xlane.f32.xlu0 %v2783
  %v2785 = vpop.xlane.xlu0 %2784
  %v2786 = vsel %vm749, %v2780, -inf
  %2787 = vmax.xlane.f32.xlu0 %v2786
  %v2788 = vpop.xlane.xlu0 %2787
  %v2789 = vsub.f32 %v2706, %v2785
  %v2790 = vsub.f32 %v2780, %v2788
  %v2791 = vmul.f32 %v2789, 1.442695
  %v2792 = vpow.pop %v2791
  %v2793 = vmul.f32 %v2790, 1.442695
  %v2794 = vpow.pop %v2793
  %v2795 = vsel %vm749, %v2792, 0.0
  %2796 = vadd.xlane.f32.xlu0 %v2795
  %v2797 = vpop.xlane.xlu0 %2796
  %v2798 = vsel %vm749, %v2794, 0.0
  %2799 = vadd.xlane.f32.xlu0 %v2798
  %v2800 = vpop.xlane.xlu0 %2799
  %v2801 = vrcp.pop %v2797
  %v2802 = vrcp.pop %v2800
  %v2803 = vmul.f32 %v2792, %v2801
  %v2804 = vmul.f32 %v2794, %v2802
  %v2805 = vadd.f32 %v2127, %v2803
  %v2806 = vadd.f32 %v2128, %v2804
  %v2808 = vsel %vm774, %v2803, 0
  %v2810 = vsel %vm778, %v2605, 0
  %2812 = vmatprep.subr.mxu0 0.0
  %2813 = vmatpush1.msra.mxu0 %v2810
  %2814 = vmatprep.subr.mxu0 0.0
  %2815 = vmatpush1.msra.mxu0 0.0
  %2816 = vmatprep.subr.mxu0 0.0
  %2817 = vmatpush1.msra.mxu0 0.0
  %2818 = vmatprep.subr.mxu0 0.0
  %2819 = vmatpush1.msra.mxu0 0.0
  %2820 = vmatprep.subr.mxu0 0.0
  %2821 = vmatpush1.msra.mxu0 0.0
  %2822 = vmatprep.subr.mxu0 0.0
  %2823 = vmatpush1.msra.mxu0 0.0
  %2824 = vmatprep.subr.mxu0 0.0
  %2825 = vmatpush1.msra.mxu0 0.0
  %2826 = vmatprep.subr.mxu0 0.0
  %2827 = vmatpush1.msra.mxu0 0.0
  %2828 = vmatprep.subr.mxu0 0.0
  %2829 = vmatpush1.msra.mxu0 0.0
  %2830 = vmatprep.subr.mxu0 0.0
  %2831 = vmatpush1.msra.mxu0 0.0
  %2832 = vmatprep.subr.mxu0 0.0
  %2833 = vmatpush1.msra.mxu0 0.0
  %2834 = vmatprep.subr.mxu0 0.0
  %2835 = vmatpush1.msra.mxu0 0.0
  %2836 = vmatprep.subr.mxu0 0.0
  %2837 = vmatpush1.msra.mxu0 0.0
  %2838 = vmatprep.subr.mxu0 0.0
  %2839 = vmatpush1.msra.mxu0 0.0
  %2840 = vmatprep.subr.mxu0 0.0
  %2841 = vmatpush1.msra.mxu0 0.0
  %2842 = vmatprep.subr.mxu0 0.0
  %2843 = vmatpush1.msra.mxu0 0.0
  %2844 = vmatprep.subr.mxu0 0.0
  %2845 = vmatpush1.msra.mxu0 0.0
  %2846 = vmatprep.subr.mxu0 0.0
  %2847 = vmatpush1.msra.mxu0 0.0
  %2848 = vmatprep.subr.mxu0 0.0
  %2849 = vmatpush1.msra.mxu0 0.0
  %2850 = vmatprep.subr.mxu0 0.0
  %2851 = vmatpush1.msra.mxu0 0.0
  %2852 = vmatprep.subr.mxu0 0.0
  %2853 = vmatpush1.msra.mxu0 0.0
  %2854 = vmatprep.subr.mxu0 0.0
  %2855 = vmatpush1.msra.mxu0 0.0
  %2856 = vmatprep.subr.mxu0 0.0
  %2857 = vmatpush1.msra.mxu0 0.0
  %2858 = vmatprep.subr.mxu0 0.0
  %2859 = vmatpush1.msra.mxu0 0.0
  %2860 = vmatprep.subr.mxu0 0.0
  %2861 = vmatpush1.msra.mxu0 0.0
  %2862 = vmatprep.subr.mxu0 0.0
  %2863 = vmatpush1.msra.mxu0 0.0
  %2864 = vmatprep.subr.mxu0 0.0
  %2865 = vmatpush1.msra.mxu0 0.0
  %2866 = vmatprep.subr.mxu0 0.0
  %2867 = vmatpush1.msra.mxu0 0.0
  %2868 = vmatprep.subr.mxu0 0.0
  %2869 = vmatpush1.msra.mxu0 0.0
  %2870 = vmatprep.subr.mxu0 0.0
  %2871 = vmatpush1.msra.mxu0 0.0
  %2872 = vmatprep.subr.mxu0 0.0
  %2873 = vmatpush1.msra.mxu0 0.0
  %2874 = vmatprep.subr.mxu0 0.0
  %2875 = vmatpush1.msra.mxu0 0.0
  %2876 = vmatprep.mubr.f32.mxu0 0.0
  %2877 = vmatmul.mubr.f32.gmra.mrb[0].mxu0 %v2808
  %v2878 = vpop.f32.mrb[0].mxu0
  %v2879 = vadd.f32 0.0, %v2878
  %v2880 = vpop.f32.mrb[0].mxu0
  %2881 = vdwg.mxu0
  %v2883 = vsel %vm774, %v2804, 0
  %v2885 = vsel %vm778, %v2634, 0
  %2887 = vmatprep.subr.mxu0 0.0
  %2888 = vmatpush1.msra.mxu0 %v2885
  %2889 = vmatprep.subr.mxu0 0.0
  %2890 = vmatpush1.msra.mxu0 0.0
  %2891 = vmatprep.subr.mxu0 0.0
  %2892 = vmatpush1.msra.mxu0 0.0
  %2893 = vmatprep.subr.mxu0 0.0
  %2894 = vmatpush1.msra.mxu0 0.0
  %2895 = vmatprep.subr.mxu0 0.0
  %2896 = vmatpush1.msra.mxu0 0.0
  %2897 = vmatprep.subr.mxu0 0.0
  %2898 = vmatpush1.msra.mxu0 0.0
  %2899 = vmatprep.subr.mxu0 0.0
  %2900 = vmatpush1.msra.mxu0 0.0
  %2901 = vmatprep.subr.mxu0 0.0
  %2902 = vmatpush1.msra.mxu0 0.0
  %2903 = vmatprep.subr.mxu0 0.0
  %2904 = vmatpush1.msra.mxu0 0.0
  %2905 = vmatprep.subr.mxu0 0.0
  %2906 = vmatpush1.msra.mxu0 0.0
  %2907 = vmatprep.subr.mxu0 0.0
  %2908 = vmatpush1.msra.mxu0 0.0
  %2909 = vmatprep.subr.mxu0 0.0
  %2910 = vmatpush1.msra.mxu0 0.0
  %2911 = vmatprep.subr.mxu0 0.0
  %2912 = vmatpush1.msra.mxu0 0.0
  %2913 = vmatprep.subr.mxu0 0.0
  %2914 = vmatpush1.msra.mxu0 0.0
  %2915 = vmatprep.subr.mxu0 0.0
  %2916 = vmatpush1.msra.mxu0 0.0
  %2917 = vmatprep.subr.mxu0 0.0
  %2918 = vmatpush1.msra.mxu0 0.0
  %2919 = vmatprep.subr.mxu0 0.0
  %2920 = vmatpush1.msra.mxu0 0.0
  %2921 = vmatprep.subr.mxu0 0.0
  %2922 = vmatpush1.msra.mxu0 0.0
  %2923 = vmatprep.subr.mxu0 0.0
  %2924 = vmatpush1.msra.mxu0 0.0
  %2925 = vmatprep.subr.mxu0 0.0
  %2926 = vmatpush1.msra.mxu0 0.0
  %2927 = vmatprep.subr.mxu0 0.0
  %2928 = vmatpush1.msra.mxu0 0.0
  %2929 = vmatprep.subr.mxu0 0.0
  %2930 = vmatpush1.msra.mxu0 0.0
  %2931 = vmatprep.subr.mxu0 0.0
  %2932 = vmatpush1.msra.mxu0 0.0
  %2933 = vmatprep.subr.mxu0 0.0
  %2934 = vmatpush1.msra.mxu0 0.0
  %2935 = vmatprep.subr.mxu0 0.0
  %2936 = vmatpush1.msra.mxu0 0.0
  %2937 = vmatprep.subr.mxu0 0.0
  %2938 = vmatpush1.msra.mxu0 0.0
  %2939 = vmatprep.subr.mxu0 0.0
  %2940 = vmatpush1.msra.mxu0 0.0
  %2941 = vmatprep.subr.mxu0 0.0
  %2942 = vmatpush1.msra.mxu0 0.0
  %2943 = vmatprep.subr.mxu0 0.0
  %2944 = vmatpush1.msra.mxu0 0.0
  %2945 = vmatprep.subr.mxu0 0.0
  %2946 = vmatpush1.msra.mxu0 0.0
  %2947 = vmatprep.subr.mxu0 0.0
  %2948 = vmatpush1.msra.mxu0 0.0
  %2949 = vmatprep.subr.mxu0 0.0
  %2950 = vmatpush1.msra.mxu0 0.0
  %2951 = vmatprep.mubr.f32.mxu0 0.0
  %2952 = vmatmul.mubr.f32.gmra.mrb[0].mxu0 %v2883
  %v2953 = vpop.f32.mrb[0].mxu0
  %v2954 = vadd.f32 0.0, %v2953
  %v2955 = vpop.f32.mrb[0].mxu0
  %2956 = vdwg.mxu0
  %s2957 = scalar_lea.vmem %s13, 24
  %v2958 = vld [vmem:[%s2957] sm:$0xff]
  %v2961 = vrot.slane %v2954, 7
  %v2962 = vsel %vm245, %v2961, %v2879
  %v2963 = vsel %vm600, %v2962, 0
  %2965 = vmatprep.subr.mxu0 0.0
  %2966 = vmatpush1.msra.mxu0 %v2958
  %2967 = vmatprep.subr.mxu0 0.0
  %2968 = vmatpush1.msra.mxu0 0.0
  %2969 = vmatprep.subr.mxu0 0.0
  %2970 = vmatpush1.msra.mxu0 0.0
  %2971 = vmatprep.subr.mxu0 0.0
  %2972 = vmatpush1.msra.mxu0 0.0
  %2973 = vmatprep.subr.mxu0 0.0
  %2974 = vmatpush1.msra.mxu0 0.0
  %2975 = vmatprep.subr.mxu0 0.0
  %2976 = vmatpush1.msra.mxu0 0.0
  %2977 = vmatprep.subr.mxu0 0.0
  %2978 = vmatpush1.msra.mxu0 0.0
  %2979 = vmatprep.subr.mxu0 0.0
  %2980 = vmatpush1.msra.mxu0 0.0
  %2981 = vmatprep.subr.mxu0 0.0
  %2982 = vmatpush1.msra.mxu0 0.0
  %2983 = vmatprep.subr.mxu0 0.0
  %2984 = vmatpush1.msra.mxu0 0.0
  %2985 = vmatprep.subr.mxu0 0.0
  %2986 = vmatpush1.msra.mxu0 0.0
  %2987 = vmatprep.subr.mxu0 0.0
  %2988 = vmatpush1.msra.mxu0 0.0
  %2989 = vmatprep.subr.mxu0 0.0
  %2990 = vmatpush1.msra.mxu0 0.0
  %2991 = vmatprep.subr.mxu0 0.0
  %2992 = vmatpush1.msra.mxu0 0.0
  %2993 = vmatprep.subr.mxu0 0.0
  %2994 = vmatpush1.msra.mxu0 0.0
  %2995 = vmatprep.subr.mxu0 0.0
  %2996 = vmatpush1.msra.mxu0 0.0
  %2997 = vmatprep.subr.mxu0 0.0
  %2998 = vmatpush1.msra.mxu0 0.0
  %2999 = vmatprep.subr.mxu0 0.0
  %3000 = vmatpush1.msra.mxu0 0.0
  %3001 = vmatprep.subr.mxu0 0.0
  %3002 = vmatpush1.msra.mxu0 0.0
  %3003 = vmatprep.subr.mxu0 0.0
  %3004 = vmatpush1.msra.mxu0 0.0
  %3005 = vmatprep.subr.mxu0 0.0
  %3006 = vmatpush1.msra.mxu0 0.0
  %3007 = vmatprep.subr.mxu0 0.0
  %3008 = vmatpush1.msra.mxu0 0.0
  %3009 = vmatprep.subr.mxu0 0.0
  %3010 = vmatpush1.msra.mxu0 0.0
  %3011 = vmatprep.subr.mxu0 0.0
  %3012 = vmatpush1.msra.mxu0 0.0
  %3013 = vmatprep.subr.mxu0 0.0
  %3014 = vmatpush1.msra.mxu0 0.0
  %3015 = vmatprep.subr.mxu0 0.0
  %3016 = vmatpush1.msra.mxu0 0.0
  %3017 = vmatprep.subr.mxu0 0.0
  %3018 = vmatpush1.msra.mxu0 0.0
  %3019 = vmatprep.subr.mxu0 0.0
  %3020 = vmatpush1.msra.mxu0 0.0
  %3021 = vmatprep.subr.mxu0 0.0
  %3022 = vmatpush1.msra.mxu0 0.0
  %3023 = vmatprep.subr.mxu0 0.0
  %3024 = vmatpush1.msra.mxu0 0.0
  %3025 = vmatprep.subr.mxu0 0.0
  %3026 = vmatpush1.msra.mxu0 0.0
  %3027 = vmatprep.subr.mxu0 0.0
  %3028 = vmatpush1.msra.mxu0 0.0
  %3029 = vmatprep.mubr.f32.mxu0 0.0
  %3030 = vmatmul.mubr.f32.gmra.mrb[0].mxu0 %v2963
  %v3031 = vpop.f32.mrb[0].mxu0
  %v3032 = vadd.f32 0.0, %v3031
  %v3033 = vpop.f32.mrb[0].mxu0
  %3034 = vdwg.mxu0
  %v3035 = vadd.f32 %v2357, %v3032
  %v3036 = vld [vmem:[%s14] sm:$0x1]
  %v3038 = vlaneseq
  %v3039 = vshrl.u32 %v3038, 7
  %v3040 = vsub.s32 0, %v3039
  %v3041 = vrot.slane %v3036, %v3040
  %v3043 = vadd.f32 %v3035, %v3041
  %v3046 = vunpack.c.l.s4 1966171168
  %v3047 = vunpack.c.0.s8 %v3046
  %v3048 = vlaneseq
  %v3049 = vshrl.u32 %v3048, 7
  %v3050 = vsub.s32 %v3047, %v3049
  %v3051 = vrot.slane %v3043, %v3050
  %v3052 = vcombine.high %v3051, %v3051
  %v3054 = vunpack.c.l.s4 1966171168
  %v3055 = vunpack.c.0.s8 %v3054
  %v3056 = vlaneseq
  %v3057 = vshrl.u32 %v3056, 7
  %v3058 = vsub.s32 %v3055, %v3057
  %v3059 = vrot.slane %v3051, %v3058
  %v3061 = vunpack.c.l.s4 1966171168
  %v3062 = vunpack.c.0.s8 %v3061
  %v3063 = vlaneseq
  %v3064 = vshrl.u32 %v3063, 7
  %v3065 = vsub.s32 %v3062, %v3064
  %v3066 = vrot.slane %v3052, %v3065
  %v3069 = vmul.f32 %v2805, 0.25
  %v3070 = vmul.f32 %v2806, 0.25
  %3073 = vrot.lane.b32.xlu0 %v3069, 32
  %v3074 = vpop.permute.xlu0 %3073
  %3075 = vrot.lane.b32.xlu0 %v3070, 32
  %v3076 = vpop.permute.xlu0 %3075
  %v3079 = vsel %vm330, %v3059, %v3074
  %v3080 = vsel %vm330, %v3066, %v3076
  %vm3081 = vcmask 293888
  %v3082 = vsel %vm3081, %v3079, 0.0
  %v3083 = vsel %vm3081, %v3080, 0.0
  %3084 = vst [vmem:[%s15] sm:$0x1] %v3082
  %3085 = vst [vmem:[%s15 + $0x1] sm:$0x1] %v3083
  // Predicated region
  $region62: #{multihead_attention_feature_pooling.1} parent=0 // pred_check
    _
  $region63: #{multihead_attention_feature_pooling.1} parent=0 // pred_check_branch
    %3087 = sbr.rel (0) target = $region65
  $region64: #{multihead_attention_feature_pooling.1} parent=0 // pred_region
    _
  $region65: #{multihead_attention_feature_pooling.1} parent=0 // pred_fallthru
    _
  // Predicated region
  $region66: #{multihead_attention_feature_pooling.1} parent=0 // pred_check
    _
  $region67: #{multihead_attention_feature_pooling.1} parent=0 // pred_check_branch
    %3089 = sbr.rel (0) target = $region69
  $region68: #{multihead_attention_feature_pooling.1} parent=0 // pred_region
    _
  $region69: #{multihead_attention_feature_pooling.1} parent=0 // pred_fallthru
    _

</llo_original>
